<compile_context>
chip_gen: v6e
topology: v6e:2x2x1
jax: 0.10.0
libtpu: 0.0.40
codegen_flags: <defaults>
</compile_context>

<pallas_src>
import functools

import jax
import jax.numpy as jnp
from jax.experimental import pallas as pl
from jax.experimental.pallas import tpu as pltpu

_VMEM_LIMIT = 48 * 1024 * 1024  # safe on v5e/v6e (128 MiB phys) and v7x (64 MiB phys)


# ------------------------------ small helpers ------------------------------

def _ln(x, g, b, eps=1e-5):
    """LayerNorm over the last dim (f32), with (1, D) scale/shift broadcast over rows."""
    mean = jnp.mean(x, axis=-1, keepdims=True)
    xc = x - mean
    var = jnp.mean(xc * xc, axis=-1, keepdims=True)
    return xc * jax.lax.rsqrt(var + eps) * g + b


# TODO(synk): lax.erf lowering inside Mosaic is not guaranteed, so exact GELU uses the
# Abramowitz-Stegun 7.1.26 erf polynomial; with the EUP approx reciprocal its error is ~1e-4
# (vs 1.5e-7 with an exact divide) -- negligible for inference.
_ERF_A = (0.254829592, -0.284496736, 1.421413741, -1.453152027, 1.061405429)
_ERF_P = 0.3275911


def _erf_approx(x):
    a1, a2, a3, a4, a5 = _ERF_A
    ax = jnp.abs(x)
    t = pl.reciprocal(1.0 + _ERF_P * ax, approx=True)   # EUP slot, VALU stays free
    poly = ((((a5 * t + a4) * t + a3) * t + a2) * t + a1) * t
    y = 1.0 - poly * jnp.exp(-ax * ax)
    return jnp.where(x < 0, -y, y)


def _gelu(x):
    return 0.5 * x * (1.0 + _erf_approx(x * 0.7071067811865476))


# ------------------------------ Pallas kernels ------------------------------

def _attn_block_kernel(x_ref, g_ref, b_ref, wqkv_ref, rpk_ref, rpv_ref,
                       pw_ref, pb_ref, o_ref, attn_scr, *, H, hd, scale):
    """Fused attention sub-block for one batch item.

    x_ref   : (1, N, D)  f32   layer input (also the residual)
    wqkv_ref: (D, 3*H*hd) bf16 fused [q | k | v] projection, head-major columns
    rpk_ref : (Nq, Nk, hd) bf16  q-side RPE table (pre-gathered outside the kernel)
    rpv_ref : (Nq, Nk, hd) bf16  v-side RPE table
    pw_ref  : (H*hd, D)  bf16  output projection
    attn_scr: (N, H*hd)  f32   VMEM scratch holding all heads' outputs
    """
    HD = H * hd
    x = x_ref[0]                                                   # (N, D) f32
    y = _ln(x, g_ref[...], b_ref[...])
    qkv = jnp.dot(y.astype(jnp.bfloat16), wqkv_ref[...],
                  preferred_element_type=jnp.float32)              # (N, 3*HD) f32

    # fold scale into q ONCE: covers both q@k^T and the q-side RPE bias (as in PyTorch).
    q_all = qkv[:, :HD] * scale
    k_all = qkv[:, HD:2 * HD]
    v_all = qkv[:, 2 * HD:3 * HD]
    rpk = rpk_ref[...]                                             # (N, N, hd) bf16
    rpv = rpv_ref[...]

    for h in range(H):   # static unroll; each head ends in a scratch store (bounds live values)
        q = q_all[:, h * hd:(h + 1) * hd]                          # (N, hd) f32, pre-scaled
        k = k_all[:, h * hd:(h + 1) * hd]
        v = v_all[:, h * hd:(h + 1) * hd]

        # scores: q @ k^T on the MXU (bf16 operands, f32 accumulate)
        s = jax.lax.dot_general(q.astype(jnp.bfloat16), k.astype(jnp.bfloat16),
                                (((1,), (1,)), ((), ())),
                                preferred_element_type=jnp.float32)        # (Nq, Nk)
        # q-side RPE bias: bias[q,k] = sum_d q[q,d] * rpk[q,k,d]  (lane reduce, no transpose)
        s = s + jnp.sum(rpk * q[:, None, :], axis=-1)                       # (Nq, Nk)

        # softmax over keys; reciprocal on the EUP slot.
        s = s - jnp.max(s, axis=-1, keepdims=True)
        e = jnp.exp(s)
        p = e * pl.reciprocal(jnp.sum(e, axis=-1, keepdims=True), approx=True)

        # attn @ v (MXU) + v-side RPE term (sublane reduce, no transpose)
        out = jnp.dot(p.astype(jnp.bfloat16), v.astype(jnp.bfloat16),
                      preferred_element_type=jnp.float32)                    # (Nq, hd)
        out = out + jnp.sum(rpv * p[:, :, None], axis=1)                     # (Nq, hd)
        attn_scr[:, h * hd:(h + 1) * hd] = out

    # output projection + bias + residual (epilogue fused, stays in this kernel)
    a = attn_scr[...].astype(jnp.bfloat16)                                   # (N, HD)
    yo = jnp.dot(a, pw_ref[...], preferred_element_type=jnp.float32)         # (N, D)
    o_ref[0] = (yo + pb_ref[...] + x).astype(o_ref.dtype)


def _ffn_kernel(x_ref, g_ref, b_ref, w1_ref, b1_ref, w2_ref, b2_ref, o_ref,
                y_scr, acc_scr):
    """LN -> fc1 -> GELU -> fc2 -> + residual, hidden dim tiled on grid axis 1 (reduction)."""
    j = pl.program_id(1)

    @pl.when(j == 0)
    def _():
        y_scr[...] = _ln(x_ref[...], g_ref[...], b_ref[...]).astype(y_scr.dtype)
        acc_scr[...] = jnp.zeros_like(acc_scr)

    h = jnp.dot(y_scr[...], w1_ref[...],
                preferred_element_type=jnp.float32) + b1_ref[...]          # (tm, th)
    h = _gelu(h)
    acc_scr[...] += jnp.dot(h.astype(jnp.bfloat16), w2_ref[...],
                            preferred_element_type=jnp.float32)            # (tm, D)

    @pl.when(j == pl.num_programs(1) - 1)
    def _():
        o_ref[...] = (acc_scr[...] + b2_ref[...] + x_ref[...]).astype(o_ref.dtype)


# ------------------------------ kernel wrappers ------------------------------

def attn_block(x, p, *, num_heads, head_dim, scale):
    B, N, D = x.shape
    H, hd = num_heads, head_dim
    HD = H * hd
    kern = functools.partial(_attn_block_kernel, H=H, hd=hd, scale=scale)
    return pl.pallas_call(
        kern,
        out_shape=jax.ShapeDtypeStruct((B, N, D), jnp.float32),
        grid=(B,),
        in_specs=[pl.BlockSpec((1, N, D), lambda b: (b, 0, 0)),
                  pl.BlockSpec((1, D), lambda b: (0, 0)),
                  pl.BlockSpec((1, D), lambda b: (0, 0)),
                  pl.BlockSpec((D, 3 * HD), lambda b: (0, 0)),
                  pl.BlockSpec((N, N, hd), lambda b: (0, 0, 0)),
                  pl.BlockSpec((N, N, hd), lambda b: (0, 0, 0)),
                  pl.BlockSpec((HD, D), lambda b: (0, 0)),
                  pl.BlockSpec((1, D), lambda b: (0, 0))],
        out_specs=pl.BlockSpec((1, N, D), lambda b: (b, 0, 0)),
        scratch_shapes=[pltpu.VMEM((N, HD), jnp.float32)],
        compiler_params=pltpu.CompilerParams(
            dimension_semantics=("parallel",), vmem_limit_bytes=_VMEM_LIMIT),
    )(x, p['ln_attn_g'], p['ln_attn_b'], p['wqkv'], p['rpk'], p['rpv'],
      p['proj_w'], p['proj_b'])


def ffn_block(x, p, *, row_cap=256, hid_cap=512):
    M, D = x.shape
    Hid = p['fc1_w'].shape[1]
    tm = M if M <= row_cap else row_cap
    gm = pl.cdiv(M, tm)
    th = hid_cap if (Hid > hid_cap and Hid % hid_cap == 0) else Hid
    gh = Hid // th
    return pl.pallas_call(
        _ffn_kernel,
        out_shape=jax.ShapeDtypeStruct((M, D), jnp.float32),
        grid=(gm, gh),                                   # reduction (hidden) axis last
        in_specs=[pl.BlockSpec((tm, D), lambda i, j: (i, 0)),
                  pl.BlockSpec((1, D), lambda i, j: (0, 0)),
                  pl.BlockSpec((1, D), lambda i, j: (0, 0)),
                  pl.BlockSpec((D, th), lambda i, j: (0, j)),
                  pl.BlockSpec((1, th), lambda i, j: (0, j)),
                  pl.BlockSpec((th, D), lambda i, j: (j, 0)),
                  pl.BlockSpec((1, D), lambda i, j: (0, 0))],
        out_specs=pl.BlockSpec((tm, D), lambda i, j: (i, 0)),
        scratch_shapes=[pltpu.VMEM((tm, D), jnp.bfloat16),   # normalized input (MXU operand)
                        pltpu.VMEM((tm, D), jnp.float32)],   # fc2 accumulator
        compiler_params=pltpu.CompilerParams(
            dimension_semantics=("parallel", "arbitrary"),
            vmem_limit_bytes=_VMEM_LIMIT),
    )(x, p['ln_ffn_g'], p['ln_ffn_b'], p['fc1_w'], p['fc1_b'], p['fc2_w'], p['fc2_b'])


# --------------------------- model glue (plain JAX) ---------------------------

def rel_pos_2d(N, table_v, table_h, length):
    """RelativePosition2D.forward(N, N) -> (N, N, head_dim).  Hoisted: depends only on N/params."""
    L = N - 1
    sq = int(L ** 0.5)
    r = jnp.arange(L)
    dv = r[None, :] // sq - r[:, None] // sq
    dh = r[None, :] % sq - r[:, None] % sq
    fv = jnp.clip(dv, -length, length) + length + 1
    fh = jnp.clip(dh, -length, length) + length + 1
    fv = jnp.pad(fv, ((1, 0), (1, 0)), constant_values=0)
    fh = jnp.pad(fh, ((1, 0), (1, 0)), constant_values=0)
    return table_v[fv] + table_h[fh]


def prepare_layer(params, N, rpe_length):
    """One-time prep: bf16 weights + pre-gathered bf16 RPE tables (no per-call casts)."""
    D = params['ln_attn_g'].shape[0]
    Hid = params['fc1_w'].shape[1]
    rpk = rel_pos_2d(N, params['rpe_k_v'], params['rpe_k_h'], rpe_length)
    rpv = rel_pos_2d(N, params['rpe_v_v'], params['rpe_v_h'], rpe_length)
    f32 = jnp.float32
    return {
        'ln_attn_g': params['ln_attn_g'].reshape(1, D).astype(f32),
        'ln_attn_b': params['ln_attn_b'].reshape(1, D).astype(f32),
        'ln_ffn_g': params['ln_ffn_g'].reshape(1, D).astype(f32),
        'ln_ffn_b': params['ln_ffn_b'].reshape(1, D).astype(f32),
        'wqkv': params['wqkv'].astype(jnp.bfloat16),
        'proj_w': params['proj_w'].astype(jnp.bfloat16),
        'proj_b': params['proj_b'].reshape(1, D).astype(f32),
        'fc1_w': params['fc1_w'].astype(jnp.bfloat16),
        'fc1_b': params['fc1_b'].reshape(1, Hid).astype(f32),
        'fc2_w': params['fc2_w'].astype(jnp.bfloat16),
        'fc2_b': params['fc2_b'].reshape(1, D).astype(f32),
        'rpk': rpk.astype(jnp.bfloat16),
        'rpv': rpv.astype(jnp.bfloat16),
    }


def encoder_layer(x, p, *, num_heads, head_dim):
    """TransformerEncoderLayer.forward (pre_norm=True, rpe=True, eval mode): 2 fused kernels."""
    B, N, D = x.shape
    scale = float(head_dim) ** -0.5
    x = x.astype(jnp.float32)
    x = attn_block(x, p, num_heads=num_heads, head_dim=head_dim, scale=scale)   # (B, N, D)
    y = ffn_block(x.reshape(B * N, D), p)                                       # (B*N, D)
    return y.reshape(B, N, D)


# -------------------------- pure-JAX reference (f32) --------------------------

def ref_forward(x, p, *, num_heads, head_dim, rpe_length):
    B, N, D = x.shape
    H, hd = num_heads, head_dim
    HD = H * hd
    scale = float(head_dim) ** -0.5

    def ln(v, g, b, eps=1e-5):
        m = jnp.mean(v, -1, keepdims=True)
        c = v - m
        return c * jax.lax.rsqrt(jnp.mean(c * c, -1, keepdims=True) + eps) * g + b

    resid = x
    xn = ln(x, p['ln_attn_g'], p['ln_attn_b'])
    qkv = xn @ p['wqkv']
    q = qkv[..., :HD].reshape(B, N, H, hd).transpose(0, 2, 1, 3)
    k = qkv[..., HD:2 * HD].reshape(B, N, H, hd).transpose(0, 2, 1, 3)
    v = qkv[..., 2 * HD:].reshape(B, N, H, hd).transpose(0, 2, 1, 3)
    rpk = rel_pos_2d(N, p['rpe_k_v'], p['rpe_k_h'], rpe_length)
    rpv = rel_pos_2d(N, p['rpe_v_v'], p['rpe_v_h'], rpe_length)
    attn = jnp.einsum('bhqd,bhkd->bhqk', q, k) * scale
    attn = attn + jnp.einsum('bhqd,qkd->bhqk', q, rpk) * scale
    attn = jax.nn.softmax(attn, axis=-1)
    out = jnp.einsum('bhqk,bhkd->bhqd', attn, v)
    out = out + jnp.einsum('bhqk,qkd->bhqd', attn, rpv)
    out = out.transpose(0, 2, 1, 3).reshape(B, N, HD)
    x1 = resid + out @ p['proj_w'] + p['proj_b']
    xn = ln(x1, p['ln_ffn_g'], p['ln_ffn_b'])
    h = jax.nn.gelu(xn @ p['fc1_w'] + p['fc1_b'], approximate=False)
    return x1 + h @ p['fc2_w'] + p['fc2_b']


# --------------------------------- parameters ---------------------------------

def init_layer_params(key, D, H, hd, mlp_ratio, rpe_length):
    hidden = int(D * mlp_ratio)
    T = 2 * rpe_length + 2
    keys = iter(jax.random.split(key, 16))

    def nrm(shape, std=0.02):
        return std * jax.random.normal(next(keys), shape, jnp.float32)

    return {
        'ln_attn_g': jnp.ones((D,), jnp.float32), 'ln_attn_b': jnp.zeros((D,), jnp.float32),
        'ln_ffn_g': jnp.ones((D,), jnp.float32), 'ln_ffn_b': jnp.zeros((D,), jnp.float32),
        # fused [Wq | Wk | Wv]; within each, head h occupies columns h*hd:(h+1)*hd
        'wqkv': nrm((D, 3 * H * hd)),
        'proj_w': nrm((H * hd, D)), 'proj_b': jnp.zeros((D,), jnp.float32),
        'fc1_w': nrm((D, hidden)), 'fc1_b': jnp.zeros((hidden,), jnp.float32),
        'fc2_w': nrm((hidden, D)), 'fc2_b': jnp.zeros((D,), jnp.float32),
        'rpe_k_v': nrm((T, hd)), 'rpe_k_h': nrm((T, hd)),
        'rpe_v_v': nrm((T, hd)), 'rpe_v_h': nrm((T, hd)),
    }


# ------------------------------------ main ------------------------------------

if __name__ == "__main__":
    # (batch, patch_num, embed_dim) with patch_num = 4x4 grid + 1 cls token, module defaults.
    B, N, D = 2, 17, 64
    H, hd = 2, 32
    mlp_ratio = 4.0
    rpe_length = 14

    key = jax.random.PRNGKey(0)
    kp, kx = jax.random.split(key)
    params = init_layer_params(kp, D, H, hd, mlp_ratio, rpe_length)
    x = jax.random.normal(kx, (B, N, D), jnp.float32)

    prep = prepare_layer(params, N, rpe_length)   # one-time: bf16 weights + RPE tables
    fwd = jax.jit(functools.partial(encoder_layer, num_heads=H, head_dim=hd))
    y = fwd(x, prep)
    jax.block_until_ready(y)

    assert y.shape == (B, N, D)
    assert bool(jnp.all(jnp.isfinite(y)))

    # loose tolerance: kernel uses bf16 MXU operands + EUP approx reciprocals (documented).
    y_ref = ref_forward(x, params, num_heads=H, head_dim=hd, rpe_length=rpe_length)
    err = float(jnp.max(jnp.abs(y - y_ref)))
    assert err < 5e-2, f"max abs error vs reference: {err}"
    print("KERNEL_OK")
</pallas_src>

<mosaic_0001>
module attributes {stable_mosaic.version = 11 : i64} {
  func.func @_ffn_kernel(%arg0: i32, %arg1: i32, %arg2: memref<34x64xf32, #tpu.memory_space<vmem>>, %arg3: memref<1x64xf32, #tpu.memory_space<vmem>>, %arg4: memref<1x64xf32, #tpu.memory_space<vmem>>, %arg5: memref<64x256xbf16, #tpu.memory_space<vmem>>, %arg6: memref<1x256xf32, #tpu.memory_space<vmem>>, %arg7: memref<256x64xbf16, #tpu.memory_space<vmem>>, %arg8: memref<1x64xf32, #tpu.memory_space<vmem>>, %arg9: memref<34x64xf32, #tpu.memory_space<vmem>>, %arg10: memref<34x64xbf16, #tpu.memory_space<vmem>>, %arg11: memref<34x64xf32, #tpu.memory_space<vmem>>) attributes {dimension_semantics = [#tpu.dimension_semantics<parallel>, #tpu.dimension_semantics<arbitrary>], iteration_bounds = array<i64: 1, 1>, scalar_prefetch = 0 : i64, scratch_operands = 2 : i64, tpu.core_type = #tpu.core_type<tc>, window_params = [{transform_indices = @transform_0, window_bounds = array<i64: 34, 64>}, {pipeline_mode = #tpu.pipeline_mode<synchronous>, transform_indices = @transform_1, window_bounds = array<i64: 1, 64>}, {pipeline_mode = #tpu.pipeline_mode<synchronous>, transform_indices = @transform_2, window_bounds = array<i64: 1, 64>}, {transform_indices = @transform_3, window_bounds = array<i64: 64, 256>}, {transform_indices = @transform_4, window_bounds = array<i64: 1, 256>}, {transform_indices = @transform_5, window_bounds = array<i64: 256, 64>}, {pipeline_mode = #tpu.pipeline_mode<synchronous>, transform_indices = @transform_6, window_bounds = array<i64: 1, 64>}, {transform_indices = @transform_7, window_bounds = array<i64: 34, 64>}]} {
    %c0_i32 = arith.constant 0 : i32
    %0 = arith.cmpi eq, %arg1, %c0_i32 : i32
    %1 = arith.extui %0 : i1 to i32
    %c0_i32_0 = arith.constant 0 : i32
    %2 = arith.cmpi ne, %1, %c0_i32_0 : i32
    scf.if %2 {
      %c0_29 = arith.constant 0 : index
      %c0_30 = arith.constant 0 : index
      %57 = vector.load %arg2[%c0_29, %c0_30] : memref<34x64xf32, #tpu.memory_space<vmem>>, vector<34x64xf32>
      %c0_31 = arith.constant 0 : index
      %c0_32 = arith.constant 0 : index
      %58 = vector.load %arg3[%c0_31, %c0_32] : memref<1x64xf32, #tpu.memory_space<vmem>>, vector<1x64xf32>
      %c0_33 = arith.constant 0 : index
      %c0_34 = arith.constant 0 : index
      %59 = vector.load %arg4[%c0_33, %c0_34] : memref<1x64xf32, #tpu.memory_space<vmem>>, vector<1x64xf32>
      %cst_35 = arith.constant dense<0.000000e+00> : vector<34xf32>
      %60 = vector.multi_reduction <add>, %57, %cst_35 [1] : vector<34x64xf32> to vector<34xf32>
      %61 = vector.shape_cast %60 : vector<34xf32> to vector<34x1xf32>
      %cst_36 = arith.constant 6.400000e+01 : f32
      %62 = vector.broadcast %cst_36 : f32 to vector<34x1xf32>
      %63 = arith.divf %61, %62 : vector<34x1xf32>
      %64 = vector.broadcast %63 : vector<34x1xf32> to vector<34x64xf32>
      %65 = arith.subf %57, %64 : vector<34x64xf32>
      %66 = arith.mulf %65, %65 : vector<34x64xf32>
      %cst_37 = arith.constant dense<0.000000e+00> : vector<34xf32>
      %67 = vector.multi_reduction <add>, %66, %cst_37 [1] : vector<34x64xf32> to vector<34xf32>
      %68 = vector.shape_cast %67 : vector<34xf32> to vector<34x1xf32>
      %cst_38 = arith.constant 6.400000e+01 : f32
      %69 = vector.broadcast %cst_38 : f32 to vector<34x1xf32>
      %70 = arith.divf %68, %69 : vector<34x1xf32>
      %cst_39 = arith.constant 9.99999974E-6 : f32
      %71 = vector.broadcast %cst_39 : f32 to vector<34x1xf32>
      %72 = arith.addf %70, %71 : vector<34x1xf32>
      %73 = math.rsqrt %72 : vector<34x1xf32>
      %74 = vector.broadcast %73 : vector<34x1xf32> to vector<34x64xf32>
      %75 = arith.mulf %65, %74 : vector<34x64xf32>
      %76 = vector.broadcast %58 : vector<1x64xf32> to vector<34x64xf32>
      %77 = arith.mulf %75, %76 : vector<34x64xf32>
      %78 = vector.broadcast %59 : vector<1x64xf32> to vector<34x64xf32>
      %79 = arith.addf %77, %78 : vector<34x64xf32>
      %80 = arith.truncf %79 : vector<34x64xf32> to vector<34x64xbf16>
      %c0_40 = arith.constant 0 : index
      %c0_41 = arith.constant 0 : index
      %81 = vector.load %arg10[%c0_40, %c0_41] : memref<34x64xbf16, #tpu.memory_space<vmem>>, vector<34x64xbf16>
      tpu.vector_store %arg10[%c0_40, %c0_41], %80 {strides = array<i32>} : memref<34x64xbf16, #tpu.memory_space<vmem>>, vector<34x64xbf16>,
      %cst_42 = arith.constant 0.000000e+00 : f32
      %82 = vector.broadcast %cst_42 : f32 to vector<34x64xf32>
      %c0_43 = arith.constant 0 : index
      %c0_44 = arith.constant 0 : index
      %83 = vector.load %arg11[%c0_43, %c0_44] : memref<34x64xf32, #tpu.memory_space<vmem>>, vector<34x64xf32>
      tpu.vector_store %arg11[%c0_43, %c0_44], %82 {strides = array<i32>} : memref<34x64xf32, #tpu.memory_space<vmem>>, vector<34x64xf32>,
    } else {
    }
    %c0 = arith.constant 0 : index
    %c0_1 = arith.constant 0 : index
    %3 = vector.load %arg10[%c0, %c0_1] : memref<34x64xbf16, #tpu.memory_space<vmem>>, vector<34x64xbf16>
    %c0_2 = arith.constant 0 : index
    %c0_3 = arith.constant 0 : index
    %4 = vector.load %arg5[%c0_2, %c0_3] : memref<64x256xbf16, #tpu.memory_space<vmem>>, vector<64x256xbf16>
    %cst = arith.constant dense<0.000000e+00> : vector<34x256xf32>
    %5 = tpu.matmul %3, %4, %cst {dimension_numbers = #tpu.dot_dimension_numbers<[1], [0], [0], [1], [0, 0, 1, 1], [], []>} : vector<34x64xbf16>, vector<64x256xbf16>, vector<34x256xf32> -> vector<34x256xf32>
    %c0_4 = arith.constant 0 : index
    %c0_5 = arith.constant 0 : index
    %6 = vector.load %arg6[%c0_4, %c0_5] : memref<1x256xf32, #tpu.memory_space<vmem>>, vector<1x256xf32>
    %7 = vector.broadcast %6 : vector<1x256xf32> to vector<34x256xf32>
    %8 = arith.addf %5, %7 : vector<34x256xf32>
    %cst_6 = arith.constant 5.000000e-01 : f32
    %9 = vector.broadcast %cst_6 : f32 to vector<34x256xf32>
    %10 = arith.mulf %9, %8 : vector<34x256xf32>
    %cst_7 = arith.constant 0.707106769 : f32
    %11 = vector.broadcast %cst_7 : f32 to vector<34x256xf32>
    %12 = arith.mulf %8, %11 : vector<34x256xf32>
    %13 = math.absf %12 : vector<34x256xf32>
    %cst_8 = arith.constant 0.327591091 : f32
    %14 = vector.broadcast %cst_8 : f32 to vector<34x256xf32>
    %15 = arith.mulf %14, %13 : vector<34x256xf32>
    %cst_9 = arith.constant 1.000000e+00 : f32
    %16 = vector.broadcast %cst_9 : f32 to vector<34x256xf32>
    %17 = arith.addf %16, %15 : vector<34x256xf32>
    %18 = tpu.reciprocal %17 {approx = true} : vector<34x256xf32> -> vector<34x256xf32>
    %cst_10 = arith.constant 1.06140542 : f32
    %19 = vector.broadcast %cst_10 : f32 to vector<34x256xf32>
    %20 = arith.mulf %19, %18 : vector<34x256xf32>
    %cst_11 = arith.constant -1.45315206 : f32
    %21 = vector.broadcast %cst_11 : f32 to vector<34x256xf32>
    %22 = arith.addf %20, %21 : vector<34x256xf32>
    %23 = arith.mulf %22, %18 : vector<34x256xf32>
    %cst_12 = arith.constant 1.42141378 : f32
    %24 = vector.broadcast %cst_12 : f32 to vector<34x256xf32>
    %25 = arith.addf %23, %24 : vector<34x256xf32>
    %26 = arith.mulf %25, %18 : vector<34x256xf32>
    %cst_13 = arith.constant -0.284496725 : f32
    %27 = vector.broadcast %cst_13 : f32 to vector<34x256xf32>
    %28 = arith.addf %26, %27 : vector<34x256xf32>
    %29 = arith.mulf %28, %18 : vector<34x256xf32>
    %cst_14 = arith.constant 0.254829586 : f32
    %30 = vector.broadcast %cst_14 : f32 to vector<34x256xf32>
    %31 = arith.addf %29, %30 : vector<34x256xf32>
    %32 = arith.mulf %31, %18 : vector<34x256xf32>
    %cst_15 = arith.constant 0.000000e+00 : f32
    %33 = vector.broadcast %cst_15 : f32 to vector<34x256xf32>
    %34 = arith.subf %33, %13 : vector<34x256xf32>
    %35 = arith.mulf %34, %13 : vector<34x256xf32>
    %36 = math.exp %35 : vector<34x256xf32>
    %37 = arith.mulf %32, %36 : vector<34x256xf32>
    %cst_16 = arith.constant 1.000000e+00 : f32
    %38 = vector.broadcast %cst_16 : f32 to vector<34x256xf32>
    %39 = arith.subf %38, %37 : vector<34x256xf32>
    %cst_17 = arith.constant 0.000000e+00 : f32
    %40 = vector.broadcast %cst_17 : f32 to vector<34x256xf32>
    %41 = arith.cmpf olt, %12, %40 : vector<34x256xf32>
    %cst_18 = arith.constant 0.000000e+00 : f32
    %42 = vector.broadcast %cst_18 : f32 to vector<34x256xf32>
    %43 = arith.subf %42, %39 : vector<34x256xf32>
    %44 = arith.select %41, %43, %39 : vector<34x256xi1>, vector<34x256xf32>
    %cst_19 = arith.constant 1.000000e+00 : f32
    %45 = vector.broadcast %cst_19 : f32 to vector<34x256xf32>
    %46 = arith.addf %45, %44 : vector<34x256xf32>
    %47 = arith.mulf %10, %46 : vector<34x256xf32>
    %c0_20 = arith.constant 0 : index
    %c0_21 = arith.constant 0 : index
    %48 = vector.load %arg11[%c0_20, %c0_21] : memref<34x64xf32, #tpu.memory_space<vmem>>, vector<34x64xf32>
    %49 = arith.truncf %47 : vector<34x256xf32> to vector<34x256xbf16>
    %c0_22 = arith.constant 0 : index
    %c0_23 = arith.constant 0 : index
    %50 = vector.load %arg7[%c0_22, %c0_23] : memref<256x64xbf16, #tpu.memory_space<vmem>>, vector<256x64xbf16>
    %cst_24 = arith.constant dense<0.000000e+00> : vector<34x64xf32>
    %51 = tpu.matmul %49, %50, %cst_24 {dimension_numbers = #tpu.dot_dimension_numbers<[1], [0], [0], [1], [0, 0, 1, 1], [], []>} : vector<34x256xbf16>, vector<256x64xbf16>, vector<34x64xf32> -> vector<34x64xf32>
    %52 = arith.addf %48, %51 : vector<34x64xf32>
    %c0_25 = arith.constant 0 : index
    %c0_26 = arith.constant 0 : index
    %53 = vector.load %arg11[%c0_25, %c0_26] : memref<34x64xf32, #tpu.memory_space<vmem>>, vector<34x64xf32>
    tpu.vector_store %arg11[%c0_25, %c0_26], %52 {strides = array<i32>} : memref<34x64xf32, #tpu.memory_space<vmem>>, vector<34x64xf32>,
    %c0_i32_27 = arith.constant 0 : i32
    %54 = arith.cmpi eq, %arg1, %c0_i32_27 : i32
    %55 = arith.extui %54 : i1 to i32
    %c0_i32_28 = arith.constant 0 : i32
    %56 = arith.cmpi ne, %55, %c0_i32_28 : i32
    scf.if %56 {
      %c0_29 = arith.constant 0 : index
      %c0_30 = arith.constant 0 : index
      %57 = vector.load %arg11[%c0_29, %c0_30] : memref<34x64xf32, #tpu.memory_space<vmem>>, vector<34x64xf32>
      %c0_31 = arith.constant 0 : index
      %c0_32 = arith.constant 0 : index
      %58 = vector.load %arg8[%c0_31, %c0_32] : memref<1x64xf32, #tpu.memory_space<vmem>>, vector<1x64xf32>
      %59 = vector.broadcast %58 : vector<1x64xf32> to vector<34x64xf32>
      %60 = arith.addf %57, %59 : vector<34x64xf32>
      %c0_33 = arith.constant 0 : index
      %c0_34 = arith.constant 0 : index
      %61 = vector.load %arg2[%c0_33, %c0_34] : memref<34x64xf32, #tpu.memory_space<vmem>>, vector<34x64xf32>
      %62 = arith.addf %60, %61 : vector<34x64xf32>
      %c0_35 = arith.constant 0 : index
      %c0_36 = arith.constant 0 : index
      %63 = vector.load %arg9[%c0_35, %c0_36] : memref<34x64xf32, #tpu.memory_space<vmem>>, vector<34x64xf32>
      tpu.vector_store %arg9[%c0_35, %c0_36], %62 {strides = array<i32>} : memref<34x64xf32, #tpu.memory_space<vmem>>, vector<34x64xf32>,
    } else {
    }
    return
  }
  func.func @transform_0(%arg0: i32, %arg1: i32) -> (i32, i32) {
    %c0_i32 = arith.constant 0 : i32
    %c0_i32_0 = arith.constant 0 : i32
    return %arg0, %c0_i32 : i32, i32
  }
  func.func @transform_1(%arg0: i32, %arg1: i32) -> (i32, i32) {
    %c0_i32 = arith.constant 0 : i32
    %c0_i32_0 = arith.constant 0 : i32
    %c0_i32_1 = arith.constant 0 : i32
    return %c0_i32, %c0_i32_0 : i32, i32
  }
  func.func @transform_2(%arg0: i32, %arg1: i32) -> (i32, i32) {
    %c0_i32 = arith.constant 0 : i32
    %c0_i32_0 = arith.constant 0 : i32
    %c0_i32_1 = arith.constant 0 : i32
    return %c0_i32, %c0_i32_0 : i32, i32
  }
  func.func @transform_3(%arg0: i32, %arg1: i32) -> (i32, i32) {
    %c0_i32 = arith.constant 0 : i32
    %c0_i32_0 = arith.constant 0 : i32
    return %c0_i32, %arg1 : i32, i32
  }
  func.func @transform_4(%arg0: i32, %arg1: i32) -> (i32, i32) {
    %c0_i32 = arith.constant 0 : i32
    %c0_i32_0 = arith.constant 0 : i32
    return %c0_i32, %arg1 : i32, i32
  }
  func.func @transform_5(%arg0: i32, %arg1: i32) -> (i32, i32) {
    %c0_i32 = arith.constant 0 : i32
    %c0_i32_0 = arith.constant 0 : i32
    return %arg1, %c0_i32 : i32, i32
  }
  func.func @transform_6(%arg0: i32, %arg1: i32) -> (i32, i32) {
    %c0_i32 = arith.constant 0 : i32
    %c0_i32_0 = arith.constant 0 : i32
    %c0_i32_1 = arith.constant 0 : i32
    return %c0_i32, %c0_i32_0 : i32, i32
  }
  func.func @transform_7(%arg0: i32, %arg1: i32) -> (i32, i32) {
    %c0_i32 = arith.constant 0 : i32
    %c0_i32_0 = arith.constant 0 : i32
    return %arg0, %c0_i32 : i32, i32
  }
}

module attributes {stable_mosaic.version = 11 : i64} {
  func.func @_attn_block_kernel(%arg0: i32, %arg1: memref<1x17x64xf32, #tpu.memory_space<vmem>>, %arg2: memref<1x64xf32, #tpu.memory_space<vmem>>, %arg3: memref<1x64xf32, #tpu.memory_space<vmem>>, %arg4: memref<64x192xbf16, #tpu.memory_space<vmem>>, %arg5: memref<17x17x32xbf16, #tpu.memory_space<vmem>>, %arg6: memref<17x17x32xbf16, #tpu.memory_space<vmem>>, %arg7: memref<64x64xbf16, #tpu.memory_space<vmem>>, %arg8: memref<1x64xf32, #tpu.memory_space<vmem>>, %arg9: memref<1x17x64xf32, #tpu.memory_space<vmem>>, %arg10: memref<17x64xf32, #tpu.memory_space<vmem>>) attributes {dimension_semantics = [#tpu.dimension_semantics<parallel>], iteration_bounds = array<i64: 2>, scalar_prefetch = 0 : i64, scratch_operands = 1 : i64, tpu.core_type = #tpu.core_type<tc>, window_params = [{transform_indices = @transform_0, window_bounds = array<i64: 1, 17, 64>}, {pipeline_mode = #tpu.pipeline_mode<synchronous>, transform_indices = @transform_1, window_bounds = array<i64: 1, 64>}, {pipeline_mode = #tpu.pipeline_mode<synchronous>, transform_indices = @transform_2, window_bounds = array<i64: 1, 64>}, {pipeline_mode = #tpu.pipeline_mode<synchronous>, transform_indices = @transform_3, window_bounds = array<i64: 64, 192>}, {pipeline_mode = #tpu.pipeline_mode<synchronous>, transform_indices = @transform_4, window_bounds = array<i64: 17, 17, 32>}, {pipeline_mode = #tpu.pipeline_mode<synchronous>, transform_indices = @transform_5, window_bounds = array<i64: 17, 17, 32>}, {pipeline_mode = #tpu.pipeline_mode<synchronous>, transform_indices = @transform_6, window_bounds = array<i64: 64, 64>}, {pipeline_mode = #tpu.pipeline_mode<synchronous>, transform_indices = @transform_7, window_bounds = array<i64: 1, 64>}, {transform_indices = @transform_8, window_bounds = array<i64: 1, 17, 64>}]} {
    %c0 = arith.constant 0 : index
    %c0_0 = arith.constant 0 : index
    %c0_1 = arith.constant 0 : index
    %0 = vector.load %arg1[%c0, %c0_0, %c0_1] : memref<1x17x64xf32, #tpu.memory_space<vmem>>, vector<1x17x64xf32>
    %1 = vector.shape_cast %0 : vector<1x17x64xf32> to vector<17x64xf32>
    %c0_2 = arith.constant 0 : index
    %c0_3 = arith.constant 0 : index
    %2 = vector.load %arg2[%c0_2, %c0_3] : memref<1x64xf32, #tpu.memory_space<vmem>>, vector<1x64xf32>
    %c0_4 = arith.constant 0 : index
    %c0_5 = arith.constant 0 : index
    %3 = vector.load %arg3[%c0_4, %c0_5] : memref<1x64xf32, #tpu.memory_space<vmem>>, vector<1x64xf32>
    %cst = arith.constant dense<0.000000e+00> : vector<17xf32>
    %4 = vector.multi_reduction <add>, %1, %cst [1] : vector<17x64xf32> to vector<17xf32>
    %5 = vector.shape_cast %4 : vector<17xf32> to vector<17x1xf32>
    %cst_6 = arith.constant 6.400000e+01 : f32
    %6 = vector.broadcast %cst_6 : f32 to vector<17x1xf32>
    %7 = arith.divf %5, %6 : vector<17x1xf32>
    %8 = vector.broadcast %7 : vector<17x1xf32> to vector<17x64xf32>
    %9 = arith.subf %1, %8 : vector<17x64xf32>
    %10 = arith.mulf %9, %9 : vector<17x64xf32>
    %cst_7 = arith.constant dense<0.000000e+00> : vector<17xf32>
    %11 = vector.multi_reduction <add>, %10, %cst_7 [1] : vector<17x64xf32> to vector<17xf32>
    %12 = vector.shape_cast %11 : vector<17xf32> to vector<17x1xf32>
    %cst_8 = arith.constant 6.400000e+01 : f32
    %13 = vector.broadcast %cst_8 : f32 to vector<17x1xf32>
    %14 = arith.divf %12, %13 : vector<17x1xf32>
    %cst_9 = arith.constant 9.99999974E-6 : f32
    %15 = vector.broadcast %cst_9 : f32 to vector<17x1xf32>
    %16 = arith.addf %14, %15 : vector<17x1xf32>
    %17 = math.rsqrt %16 : vector<17x1xf32>
    %18 = vector.broadcast %17 : vector<17x1xf32> to vector<17x64xf32>
    %19 = arith.mulf %9, %18 : vector<17x64xf32>
    %20 = vector.broadcast %2 : vector<1x64xf32> to vector<17x64xf32>
    %21 = arith.mulf %19, %20 : vector<17x64xf32>
    %22 = vector.broadcast %3 : vector<1x64xf32> to vector<17x64xf32>
    %23 = arith.addf %21, %22 : vector<17x64xf32>
    %24 = arith.truncf %23 : vector<17x64xf32> to vector<17x64xbf16>
    %c0_10 = arith.constant 0 : index
    %c0_11 = arith.constant 0 : index
    %25 = vector.load %arg4[%c0_10, %c0_11] : memref<64x192xbf16, #tpu.memory_space<vmem>>, vector<64x192xbf16>
    %cst_12 = arith.constant dense<0.000000e+00> : vector<17x192xf32>
    %26 = tpu.matmul %24, %25, %cst_12 {dimension_numbers = #tpu.dot_dimension_numbers<[1], [0], [0], [1], [0, 0, 1, 1], [], []>} : vector<17x64xbf16>, vector<64x192xbf16>, vector<17x192xf32> -> vector<17x192xf32>
    %27 = vector.extract_strided_slice %26 {offsets = [0, 0], sizes = [17, 64], strides = [1, 1]} : vector<17x192xf32> to vector<17x64xf32>
    %cst_13 = arith.constant 0.176776692 : f32
    %28 = vector.broadcast %cst_13 : f32 to vector<17x64xf32>
    %29 = arith.mulf %27, %28 : vector<17x64xf32>
    %30 = vector.extract_strided_slice %26 {offsets = [0, 64], sizes = [17, 64], strides = [1, 1]} : vector<17x192xf32> to vector<17x64xf32>
    %31 = vector.extract_strided_slice %26 {offsets = [0, 128], sizes = [17, 64], strides = [1, 1]} : vector<17x192xf32> to vector<17x64xf32>
    %c0_14 = arith.constant 0 : index
    %c0_15 = arith.constant 0 : index
    %c0_16 = arith.constant 0 : index
    %32 = vector.load %arg5[%c0_14, %c0_15, %c0_16] : memref<17x17x32xbf16, #tpu.memory_space<vmem>>, vector<17x17x32xbf16>
    %c0_17 = arith.constant 0 : index
    %c0_18 = arith.constant 0 : index
    %c0_19 = arith.constant 0 : index
    %33 = vector.load %arg6[%c0_17, %c0_18, %c0_19] : memref<17x17x32xbf16, #tpu.memory_space<vmem>>, vector<17x17x32xbf16>
    %34 = vector.extract_strided_slice %29 {offsets = [0, 0], sizes = [17, 32], strides = [1, 1]} : vector<17x64xf32> to vector<17x32xf32>
    %35 = vector.extract_strided_slice %30 {offsets = [0, 0], sizes = [17, 32], strides = [1, 1]} : vector<17x64xf32> to vector<17x32xf32>
    %36 = vector.extract_strided_slice %31 {offsets = [0, 0], sizes = [17, 32], strides = [1, 1]} : vector<17x64xf32> to vector<17x32xf32>
    %37 = arith.truncf %34 : vector<17x32xf32> to vector<17x32xbf16>
    %38 = arith.truncf %35 : vector<17x32xf32> to vector<17x32xbf16>
    %cst_20 = arith.constant dense<0.000000e+00> : vector<17x17xf32>
    %39 = tpu.matmul %37, %38, %cst_20 {dimension_numbers = #tpu.dot_dimension_numbers<[1], [1], [0], [0], [0, 0, 1, 0], [], []>} : vector<17x32xbf16>, vector<17x32xbf16>, vector<17x17xf32> -> vector<17x17xf32>
    %40 = vector.shape_cast %34 : vector<17x32xf32> to vector<17x1x32xf32>
    %41 = arith.extf %32 : vector<17x17x32xbf16> to vector<17x17x32xf32>
    %42 = vector.broadcast %40 : vector<17x1x32xf32> to vector<17x17x32xf32>
    %43 = arith.mulf %41, %42 : vector<17x17x32xf32>
    %cst_21 = arith.constant dense<0.000000e+00> : vector<17x17xf32>
    %44 = vector.multi_reduction <add>, %43, %cst_21 [2] : vector<17x17x32xf32> to vector<17x17xf32>
    %45 = arith.addf %39, %44 : vector<17x17xf32>
    %cst_22 = arith.constant dense<0xFF800000> : vector<17xf32>
    %46 = vector.multi_reduction <maximumf>, %45, %cst_22 [1] : vector<17x17xf32> to vector<17xf32>
    %47 = vector.shape_cast %46 : vector<17xf32> to vector<17x1xf32>
    %48 = vector.broadcast %47 : vector<17x1xf32> to vector<17x17xf32>
    %49 = arith.subf %45, %48 : vector<17x17xf32>
    %50 = math.exp %49 : vector<17x17xf32>
    %cst_23 = arith.constant dense<0.000000e+00> : vector<17xf32>
    %51 = vector.multi_reduction <add>, %50, %cst_23 [1] : vector<17x17xf32> to vector<17xf32>
    %52 = vector.shape_cast %51 : vector<17xf32> to vector<17x1xf32>
    %53 = tpu.reciprocal %52 {approx = true} : vector<17x1xf32> -> vector<17x1xf32>
    %54 = vector.broadcast %53 : vector<17x1xf32> to vector<17x17xf32>
    %55 = arith.mulf %50, %54 : vector<17x17xf32>
    %56 = arith.truncf %55 : vector<17x17xf32> to vector<17x17xbf16>
    %57 = arith.truncf %36 : vector<17x32xf32> to vector<17x32xbf16>
    %cst_24 = arith.constant dense<0.000000e+00> : vector<17x32xf32>
    %58 = tpu.matmul %56, %57, %cst_24 {dimension_numbers = #tpu.dot_dimension_numbers<[1], [0], [0], [1], [0, 0, 1, 1], [], []>} : vector<17x17xbf16>, vector<17x32xbf16>, vector<17x32xf32> -> vector<17x32xf32>
    %59 = vector.shape_cast %55 : vector<17x17xf32> to vector<17x17x1xf32>
    %60 = arith.extf %33 : vector<17x17x32xbf16> to vector<17x17x32xf32>
    %61 = vector.broadcast %59 : vector<17x17x1xf32> to vector<17x17x32xf32>
    %62 = arith.mulf %60, %61 : vector<17x17x32xf32>
    %cst_25 = arith.constant dense<0.000000e+00> : vector<17x32xf32>
    %63 = vector.multi_reduction <add>, %62, %cst_25 [1] : vector<17x17x32xf32> to vector<17x32xf32>
    %64 = arith.addf %58, %63 : vector<17x32xf32>
    %c0_26 = arith.constant 0 : index
    %c0_27 = arith.constant 0 : index
    %65 = vector.load %arg10[%c0_26, %c0_27] : memref<17x64xf32, #tpu.memory_space<vmem>>, vector<17x32xf32>
    tpu.vector_store %arg10[%c0_26, %c0_27], %64 {strides = array<i32>} : memref<17x64xf32, #tpu.memory_space<vmem>>, vector<17x32xf32>,
    %66 = vector.extract_strided_slice %29 {offsets = [0, 32], sizes = [17, 32], strides = [1, 1]} : vector<17x64xf32> to vector<17x32xf32>
    %67 = vector.extract_strided_slice %30 {offsets = [0, 32], sizes = [17, 32], strides = [1, 1]} : vector<17x64xf32> to vector<17x32xf32>
    %68 = vector.extract_strided_slice %31 {offsets = [0, 32], sizes = [17, 32], strides = [1, 1]} : vector<17x64xf32> to vector<17x32xf32>
    %69 = arith.truncf %66 : vector<17x32xf32> to vector<17x32xbf16>
    %70 = arith.truncf %67 : vector<17x32xf32> to vector<17x32xbf16>
    %cst_28 = arith.constant dense<0.000000e+00> : vector<17x17xf32>
    %71 = tpu.matmul %69, %70, %cst_28 {dimension_numbers = #tpu.dot_dimension_numbers<[1], [1], [0], [0], [0, 0, 1, 0], [], []>} : vector<17x32xbf16>, vector<17x32xbf16>, vector<17x17xf32> -> vector<17x17xf32>
    %72 = vector.shape_cast %66 : vector<17x32xf32> to vector<17x1x32xf32>
    %73 = arith.extf %32 : vector<17x17x32xbf16> to vector<17x17x32xf32>
    %74 = vector.broadcast %72 : vector<17x1x32xf32> to vector<17x17x32xf32>
    %75 = arith.mulf %73, %74 : vector<17x17x32xf32>
    %cst_29 = arith.constant dense<0.000000e+00> : vector<17x17xf32>
    %76 = vector.multi_reduction <add>, %75, %cst_29 [2] : vector<17x17x32xf32> to vector<17x17xf32>
    %77 = arith.addf %71, %76 : vector<17x17xf32>
    %cst_30 = arith.constant dense<0xFF800000> : vector<17xf32>
    %78 = vector.multi_reduction <maximumf>, %77, %cst_30 [1] : vector<17x17xf32> to vector<17xf32>
    %79 = vector.shape_cast %78 : vector<17xf32> to vector<17x1xf32>
    %80 = vector.broadcast %79 : vector<17x1xf32> to vector<17x17xf32>
    %81 = arith.subf %77, %80 : vector<17x17xf32>
    %82 = math.exp %81 : vector<17x17xf32>
    %cst_31 = arith.constant dense<0.000000e+00> : vector<17xf32>
    %83 = vector.multi_reduction <add>, %82, %cst_31 [1] : vector<17x17xf32> to vector<17xf32>
    %84 = vector.shape_cast %83 : vector<17xf32> to vector<17x1xf32>
    %85 = tpu.reciprocal %84 {approx = true} : vector<17x1xf32> -> vector<17x1xf32>
    %86 = vector.broadcast %85 : vector<17x1xf32> to vector<17x17xf32>
    %87 = arith.mulf %82, %86 : vector<17x17xf32>
    %88 = arith.truncf %87 : vector<17x17xf32> to vector<17x17xbf16>
    %89 = arith.truncf %68 : vector<17x32xf32> to vector<17x32xbf16>
    %cst_32 = arith.constant dense<0.000000e+00> : vector<17x32xf32>
    %90 = tpu.matmul %88, %89, %cst_32 {dimension_numbers = #tpu.dot_dimension_numbers<[1], [0], [0], [1], [0, 0, 1, 1], [], []>} : vector<17x17xbf16>, vector<17x32xbf16>, vector<17x32xf32> -> vector<17x32xf32>
    %91 = vector.shape_cast %87 : vector<17x17xf32> to vector<17x17x1xf32>
    %92 = arith.extf %33 : vector<17x17x32xbf16> to vector<17x17x32xf32>
    %93 = vector.broadcast %91 : vector<17x17x1xf32> to vector<17x17x32xf32>
    %94 = arith.mulf %92, %93 : vector<17x17x32xf32>
    %cst_33 = arith.constant dense<0.000000e+00> : vector<17x32xf32>
    %95 = vector.multi_reduction <add>, %94, %cst_33 [1] : vector<17x17x32xf32> to vector<17x32xf32>
    %96 = arith.addf %90, %95 : vector<17x32xf32>
    %c0_34 = arith.constant 0 : index
    %c32 = arith.constant 32 : index
    %97 = vector.load %arg10[%c0_34, %c32] : memref<17x64xf32, #tpu.memory_space<vmem>>, vector<17x32xf32>
    tpu.vector_store %arg10[%c0_34, %c32], %96 {strides = array<i32>} : memref<17x64xf32, #tpu.memory_space<vmem>>, vector<17x32xf32>,
    %c0_35 = arith.constant 0 : index
    %c0_36 = arith.constant 0 : index
    %98 = vector.load %arg10[%c0_35, %c0_36] : memref<17x64xf32, #tpu.memory_space<vmem>>, vector<17x64xf32>
    %99 = arith.truncf %98 : vector<17x64xf32> to vector<17x64xbf16>
    %c0_37 = arith.constant 0 : index
    %c0_38 = arith.constant 0 : index
    %100 = vector.load %arg7[%c0_37, %c0_38] : memref<64x64xbf16, #tpu.memory_space<vmem>>, vector<64x64xbf16>
    %cst_39 = arith.constant dense<0.000000e+00> : vector<17x64xf32>
    %101 = tpu.matmul %99, %100, %cst_39 {dimension_numbers = #tpu.dot_dimension_numbers<[1], [0], [0], [1], [0, 0, 1, 1], [], []>} : vector<17x64xbf16>, vector<64x64xbf16>, vector<17x64xf32> -> vector<17x64xf32>
    %c0_40 = arith.constant 0 : index
    %c0_41 = arith.constant 0 : index
    %102 = vector.load %arg8[%c0_40, %c0_41] : memref<1x64xf32, #tpu.memory_space<vmem>>, vector<1x64xf32>
    %103 = vector.broadcast %102 : vector<1x64xf32> to vector<17x64xf32>
    %104 = arith.addf %101, %103 : vector<17x64xf32>
    %105 = arith.addf %104, %1 : vector<17x64xf32>
    %c0_42 = arith.constant 0 : index
    %c0_43 = arith.constant 0 : index
    %c0_44 = arith.constant 0 : index
    %106 = vector.load %arg9[%c0_42, %c0_43, %c0_44] : memref<1x17x64xf32, #tpu.memory_space<vmem>>, vector<1x17x64xf32>
    %107 = vector.shape_cast %106 : vector<1x17x64xf32> to vector<17x64xf32>
    %108 = vector.shape_cast %105 : vector<17x64xf32> to vector<1x17x64xf32>
    tpu.vector_store %arg9[%c0_42, %c0_43, %c0_44], %108 {strides = array<i32>} : memref<1x17x64xf32, #tpu.memory_space<vmem>>, vector<1x17x64xf32>,
    return
  }
  func.func @transform_0(%arg0: i32) -> (i32, i32, i32) {
    %c0_i32 = arith.constant 0 : i32
    %c0_i32_0 = arith.constant 0 : i32
    %c0_i32_1 = arith.constant 0 : i32
    return %arg0, %c0_i32, %c0_i32_0 : i32, i32, i32
  }
  func.func @transform_1(%arg0: i32) -> (i32, i32) {
    %c0_i32 = arith.constant 0 : i32
    %c0_i32_0 = arith.constant 0 : i32
    %c0_i32_1 = arith.constant 0 : i32
    return %c0_i32, %c0_i32_0 : i32, i32
  }
  func.func @transform_2(%arg0: i32) -> (i32, i32) {
    %c0_i32 = arith.constant 0 : i32
    %c0_i32_0 = arith.constant 0 : i32
    %c0_i32_1 = arith.constant 0 : i32
    return %c0_i32, %c0_i32_0 : i32, i32
  }
  func.func @transform_3(%arg0: i32) -> (i32, i32) {
    %c0_i32 = arith.constant 0 : i32
    %c0_i32_0 = arith.constant 0 : i32
    %c0_i32_1 = arith.constant 0 : i32
    return %c0_i32, %c0_i32_0 : i32, i32
  }
  func.func @transform_4(%arg0: i32) -> (i32, i32, i32) {
    %c0_i32 = arith.constant 0 : i32
    %c0_i32_0 = arith.constant 0 : i32
    %c0_i32_1 = arith.constant 0 : i32
    %c0_i32_2 = arith.constant 0 : i32
    return %c0_i32, %c0_i32_0, %c0_i32_1 : i32, i32, i32
  }
  func.func @transform_5(%arg0: i32) -> (i32, i32, i32) {
    %c0_i32 = arith.constant 0 : i32
    %c0_i32_0 = arith.constant 0 : i32
    %c0_i32_1 = arith.constant 0 : i32
    %c0_i32_2 = arith.constant 0 : i32
    return %c0_i32, %c0_i32_0, %c0_i32_1 : i32, i32, i32
  }
  func.func @transform_6(%arg0: i32) -> (i32, i32) {
    %c0_i32 = arith.constant 0 : i32
    %c0_i32_0 = arith.constant 0 : i32
    %c0_i32_1 = arith.constant 0 : i32
    return %c0_i32, %c0_i32_0 : i32, i32
  }
  func.func @transform_7(%arg0: i32) -> (i32, i32) {
    %c0_i32 = arith.constant 0 : i32
    %c0_i32_0 = arith.constant 0 : i32
    %c0_i32_1 = arith.constant 0 : i32
    return %c0_i32, %c0_i32_0 : i32, i32
  }
  func.func @transform_8(%arg0: i32) -> (i32, i32, i32) {
    %c0_i32 = arith.constant 0 : i32
    %c0_i32_0 = arith.constant 0 : i32
    %c0_i32_1 = arith.constant 0 : i32
    return %arg0, %c0_i32, %c0_i32_0 : i32, i32, i32
  }
}

</mosaic_0001>

<llo_original>
// kernel: encoder_layer.3
$region0: #{encoder_layer.3}
  #allocation0 [shape = 'u32[]', space=smem, size = 0x4, offset = 0x4, fixed_abs, tag = 'smem constant byte address 0x4 - core index']
  #allocation1 [shape = 'u32[144,128]{1,0:T(1,128)}', space=vmem, size = 0x12000, scoped, tag = 'internal scratch']
  #allocation2 [shape = 'bf16[34,64]{1,0:T(8,128)(2,1)}', space=vmem, size = 0x2800, scoped, tag = 'scratch operand']
  #allocation3 [shape = 'f32[34,64]{1,0:T(8,128)}', space=vmem, size = 0x5000, scoped, tag = 'scratch operand']
  %s0 = inlined_call_operand.vmem [shape: f32[34,64], index: 0, kind: input, shape index: {}]
  %s1 = inlined_call_operand.vmem [shape: f32[1,64], index: 1, kind: input, shape index: {}]
  %s2 = inlined_call_operand.vmem [shape: f32[1,64], index: 2, kind: input, shape index: {}]
  %s3 = inlined_call_operand.vmem [shape: bf16[64,256], index: 3, kind: input, shape index: {}]
  %s4 = inlined_call_operand.vmem [shape: f32[1,256], index: 4, kind: input, shape index: {}]
  %s5 = inlined_call_operand.vmem [shape: bf16[256,64], index: 5, kind: input, shape index: {}]
  %s6 = inlined_call_operand.vmem [shape: f32[1,64], index: 6, kind: input, shape index: {}]
  %s7 = inlined_call_operand.vmem [shape: f32[34,64], index: 7, kind: output, shape index: {}]
  %s8 = sld [smem:[#allocation0]]
  $region46: #{encoder_layer.3} parent=0
    _
  %s10 = ssub.s32 1, %s8
  %s11 = scalar_select 0, %s10, %s8
  // Predicated region
  $region2: #{encoder_layer.3} parent=0 // pred_check
    _
  $region3: #{encoder_layer.3} parent=0 // pred_check_branch
    %13 = sbr.rel (0) target = $region5
  $region4: #{encoder_layer.3} parent=0 // pred_region
    _
  $region5: #{encoder_layer.3} parent=0 // pred_fallthru
    _
  // Predicated region
  $region6: #{encoder_layer.3} parent=0 // pred_check
    _
  $region7: #{encoder_layer.3} parent=0 // pred_check_branch
    %15 = sbr.rel (0) target = $region9
  $region8: #{encoder_layer.3} parent=0 // pred_region
    _
  $region9: #{encoder_layer.3} parent=0 // pred_fallthru
    _
  // Predicated region
  $region10: #{encoder_layer.3} parent=0 // pred_check
    _
  $region11: #{encoder_layer.3} parent=0 // pred_check_branch
    %17 = sbr.rel (0) target = $region13
  $region12: #{encoder_layer.3} parent=0 // pred_region
    _
  $region13: #{encoder_layer.3} parent=0 // pred_fallthru
    _
  // Predicated region
  $region14: #{encoder_layer.3} parent=0 // pred_check
    _
  $region15: #{encoder_layer.3} parent=0 // pred_check_branch
    %19 = sbr.rel (0) target = $region17
  $region16: #{encoder_layer.3} parent=0 // pred_region
    _
  $region17: #{encoder_layer.3} parent=0 // pred_fallthru
    _
  // Predicated region
  $region18: #{encoder_layer.3} parent=0 // pred_check
    _
  $region19: #{encoder_layer.3} parent=0 // pred_check_branch
    %21 = sbr.rel (0) target = $region21
  $region20: #{encoder_layer.3} parent=0 // pred_region
    _
  $region21: #{encoder_layer.3} parent=0 // pred_fallthru
    _
  // Predicated region
  $region22: #{encoder_layer.3} parent=0 // pred_check
    _
  $region23: #{encoder_layer.3} parent=0 // pred_check_branch
    %23 = sbr.rel (0) target = $region25
  $region24: #{encoder_layer.3} parent=0 // pred_region
    _
  $region25: #{encoder_layer.3} parent=0 // pred_fallthru
    _
  // Predicated region
  $region26: #{encoder_layer.3} parent=0 // pred_check
    _
  $region27: #{encoder_layer.3} parent=0 // pred_check_branch
    %25 = sbr.rel (0) target = $region29
  $region28: #{encoder_layer.3} parent=0 // pred_region
    _
  $region29: #{encoder_layer.3} parent=0 // pred_fallthru
    _
  %p27 = scmp.eq.s32.totalorder 0, 0
  // Predicated region
  $region30: #{encoder_layer.3} parent=0 // pred_check
    %p28 = pneg %p27
  $region31: #{encoder_layer.3} parent=0 // pred_check_branch
    %30 = sbr.rel (%p28) target = $region33
  $region32: #{encoder_layer.3} parent=0 // pred_region
    %v31 = vld [vmem:[%s0] sm:$0xff]
    %v32 = vld [vmem:[%s0 + $0x8] sm:$0xff]
    %v33 = vld [vmem:[%s0 + $0x10] sm:$0xff]
    %v34 = vld [vmem:[%s0 + $0x18] sm:$0xff]
    %v35 = vld [vmem:[%s0 + $0x20] sm:$0x3]
    %v36 = vld [vmem:[%s1] sm:$0x1]
    %v37 = vld [vmem:[%s2] sm:$0x1]
    %vm38 = vcmask 523264
    %v39 = vsel %vm38, %v31, 0.0
    %40 = vadd.xlane.f32.xlu0 %v39
    %v41 = vpop.xlane.xlu0 %40
    %v42 = vsel %vm38, %v32, 0.0
    %43 = vadd.xlane.f32.xlu0 %v42
    %v44 = vpop.xlane.xlu0 %43
    %v45 = vsel %vm38, %v33, 0.0
    %46 = vadd.xlane.f32.xlu0 %v45
    %v47 = vpop.xlane.xlu0 %46
    %v48 = vsel %vm38, %v34, 0.0
    %49 = vadd.xlane.f32.xlu0 %v48
    %v50 = vpop.xlane.xlu0 %49
    %vm51 = vcmask 517120
    %v52 = vsel %vm51, %v35, 0.0
    %53 = vadd.xlane.f32.xlu0 %v52
    %v54 = vpop.xlane.xlu0 %53
    %v55 = vrcp.pop 64.0
    %v56 = vmul.f32 %v41, %v55
    %v57 = vmul.f32 %v44, %v55
    %v58 = vmul.f32 %v47, %v55
    %v59 = vmul.f32 %v50, %v55
    %v60 = vmul.f32 %v54, %v55
    %v61 = vsub.f32 %v31, %v56
    %v62 = vsub.f32 %v32, %v57
    %v63 = vsub.f32 %v33, %v58
    %v64 = vsub.f32 %v34, %v59
    %v65 = vsub.f32 %v35, %v60
    %v66 = vmul.f32 %v61, %v61
    %v67 = vmul.f32 %v62, %v62
    %v68 = vmul.f32 %v63, %v63
    %v69 = vmul.f32 %v64, %v64
    %v70 = vmul.f32 %v65, %v65
    %v71 = vsel %vm38, %v66, 0.0
    %72 = vadd.xlane.f32.xlu0 %v71
    %v73 = vpop.xlane.xlu0 %72
    %v74 = vsel %vm38, %v67, 0.0
    %75 = vadd.xlane.f32.xlu0 %v74
    %v76 = vpop.xlane.xlu0 %75
    %v77 = vsel %vm38, %v68, 0.0
    %78 = vadd.xlane.f32.xlu0 %v77
    %v79 = vpop.xlane.xlu0 %78
    %v80 = vsel %vm38, %v69, 0.0
    %81 = vadd.xlane.f32.xlu0 %v80
    %v82 = vpop.xlane.xlu0 %81
    %v83 = vsel %vm51, %v70, 0.0
    %84 = vadd.xlane.f32.xlu0 %v83
    %v85 = vpop.xlane.xlu0 %84
    %v86 = vmul.f32 %v73, %v55
    %v87 = vmul.f32 %v76, %v55
    %v88 = vmul.f32 %v79, %v55
    %v89 = vmul.f32 %v82, %v55
    %v90 = vmul.f32 %v85, %v55
    %v91 = vadd.f32 %v86, 1e-05
    %v92 = vadd.f32 %v87, 1e-05
    %v93 = vadd.f32 %v88, 1e-05
    %v94 = vadd.f32 %v89, 1e-05
    %v95 = vadd.f32 %v90, 1e-05
    %v96 = vrsqrt.pop %v91
    %v97 = vrsqrt.pop %v92
    %v98 = vrsqrt.pop %v93
    %v99 = vrsqrt.pop %v94
    %v100 = vrsqrt.pop %v95
    %v101 = vmul.f32 %v61, %v96
    %v102 = vmul.f32 %v62, %v97
    %v103 = vmul.f32 %v63, %v98
    %v104 = vmul.f32 %v64, %v99
    %v105 = vmul.f32 %v65, %v100
    %v107 = vlaneseq
    %v108 = vshrl.u32 %v107, 7
    %v109 = vsub.s32 0, %v108
    %v110 = vrot.slane %v36, %v109
    %v112 = vmul.f32 %v101, %v110
    %v113 = vmul.f32 %v102, %v110
    %v114 = vmul.f32 %v103, %v110
    %v115 = vmul.f32 %v104, %v110
    %v116 = vmul.f32 %v105, %v110
    %v118 = vlaneseq
    %v119 = vshrl.u32 %v118, 7
    %v120 = vsub.s32 0, %v119
    %v121 = vrot.slane %v37, %v120
    %v123 = vadd.f32 %v112, %v121
    %v124 = vadd.f32 %v113, %v121
    %v125 = vadd.f32 %v114, %v121
    %v126 = vadd.f32 %v115, %v121
    %v127 = vadd.f32 %v116, %v121
    %v128 = vpack.c.bf16 %v124, %v123
    %v129 = vpack.c.bf16 %v126, %v125
    %v130 = vpack.c.bf16 %v127, %v127
    %v134 = vunpack.c.l.b16 %v128
    %v135 = vunpack.c.h.b16 %v128
    %v136 = vunpack.c.l.b16 %v129
    %v137 = vunpack.c.h.b16 %v129
    %v138 = vunpack.c.l.b16 %v130
    %v139 = vpack.c.b16 %v134, %v134
    %v140 = vpack.c.b16 %v135, %v135
    %v141 = vpack.c.b16 %v136, %v136
    %v142 = vpack.c.b16 %v137, %v137
    %v143 = vpack.c.b16 %v138, %v138
    %vm149 = vcmask 519168
    %150 = vst.msk [vmem:[#allocation2] sm:$0xf] %vm149, %v139
    %151 = vst.msk [vmem:[#allocation2 + $0x4] sm:$0xf] %vm149, %v140
    %152 = vst.msk [vmem:[#allocation2 + $0x8] sm:$0xf] %vm149, %v141
    %153 = vst.msk [vmem:[#allocation2 + $0xc] sm:$0xf] %vm149, %v142
    %vm154 = vcmask 516096
    %155 = vst.msk [vmem:[#allocation2 + $0x10] sm:$0x1] %vm154, %v143
    %156 = vst.msk [vmem:[#allocation3] sm:$0xff] %vm38, 0.0
    %157 = vst.msk [vmem:[#allocation3 + $0x8] sm:$0xff] %vm38, 0.0
    %158 = vst.msk [vmem:[#allocation3 + $0x10] sm:$0xff] %vm38, 0.0
    %159 = vst.msk [vmem:[#allocation3 + $0x18] sm:$0xff] %vm38, 0.0
    %160 = vst.msk [vmem:[#allocation3 + $0x20] sm:$0x3] %vm51, 0.0
  $region33: #{encoder_layer.3} parent=0 // pred_fallthru
    _
  %v161 = vld [vmem:[#allocation2] sm:$0xf]
  %v162 = vld [vmem:[#allocation2 + $0x4] sm:$0xf]
  %v163 = vld [vmem:[#allocation2 + $0x8] sm:$0xf]
  %v164 = vld [vmem:[#allocation2 + $0xc] sm:$0xf]
  %v165 = vld [vmem:[#allocation2 + $0x10] sm:$0x1]
  %v166 = vld [vmem:[%s3] sm:$0xff]
  %v167 = vld [vmem:[%s3 + $0x8] sm:$0xff]
  %v168 = vld [vmem:[%s3 + $0x10] sm:$0xff]
  %v169 = vld [vmem:[%s3 + $0x18] sm:$0xff]
  %v170 = vld [vmem:[%s3 + $0x20] sm:$0xff]
  %v171 = vld [vmem:[%s3 + $0x28] sm:$0xff]
  %v172 = vld [vmem:[%s3 + $0x30] sm:$0xff]
  %v173 = vld [vmem:[%s3 + $0x38] sm:$0xff]
  %v174 = vld [vmem:[%s4] sm:$0x3]
  %v176 = vlaneseq
  %v177 = vshrl.u32 %v176, 7
  %v178 = vsub.s32 0, %v177
  %v179 = vrot.slane %v174, %v178
  %v180 = vlaneseq
  %v181 = vshrl.u32 %v180, 7
  %v182 = vsub.s32 1, %v181
  %v183 = vrot.slane %v174, %v182
  %v191 = vunpack.c.l.b16 %v161
  %v192 = vunpack.c.l.b16 %v162
  %v193 = vunpack.c.l.b16 %v163
  %v194 = vunpack.c.l.b16 %v164
  %v195 = vunpack.c.l.b16 %v165
  %v196 = vpack.c.b16 %v192, %v191
  %v197 = vpack.c.b16 %v194, %v193
  %v198 = vpack.c.b16 %v195, %v195
  %v207 = vunpack.c.l.b16 %v166
  %v208 = vunpack.c.h.b16 %v166
  %v209 = vunpack.c.l.b16 %v167
  %v210 = vunpack.c.h.b16 %v167
  %v211 = vunpack.c.l.b16 %v168
  %v212 = vunpack.c.h.b16 %v168
  %v213 = vunpack.c.l.b16 %v169
  %v214 = vunpack.c.h.b16 %v169
  %v215 = vunpack.c.l.b16 %v170
  %v216 = vunpack.c.h.b16 %v170
  %v217 = vunpack.c.l.b16 %v171
  %v218 = vunpack.c.h.b16 %v171
  %v219 = vunpack.c.l.b16 %v172
  %v220 = vunpack.c.h.b16 %v172
  %v221 = vunpack.c.l.b16 %v173
  %v222 = vunpack.c.h.b16 %v173
  %v223 = vpack.c.b16 %v209, %v207
  %v224 = vpack.c.b16 %v210, %v208
  %v225 = vpack.c.b16 %v213, %v211
  %v226 = vpack.c.b16 %v214, %v212
  %v227 = vpack.c.b16 %v217, %v215
  %v228 = vpack.c.b16 %v218, %v216
  %v229 = vpack.c.b16 %v221, %v219
  %v230 = vpack.c.b16 %v222, %v220
  %vm239 = vcmask 523264
  %v241 = vsel %vm239, %v196, 0
  %v244 = vsel %vm239, %v197, 0
  %v247 = vsel %vm239, %v198, 0
  %249 = vmatprep.subr.bf16.mxu0 0
  %250 = vmatpush1.bf16.msra.mxu0 0
  %251 = vmatprep.subr.bf16.mxu0 0
  %252 = vmatpush1.bf16.msra.mxu0 0
  %253 = vmatprep.subr.bf16.mxu0 0
  %254 = vmatpush1.bf16.msra.mxu0 0
  %255 = vmatprep.subr.bf16.mxu0 0
  %256 = vmatpush1.bf16.msra.mxu0 0
  %257 = vmatprep.subr.bf16.mxu0 %v230
  %258 = vmatpush1.bf16.msra.mxu0 %v229
  %259 = vmatprep.subr.bf16.mxu0 %v228
  %260 = vmatpush1.bf16.msra.mxu0 %v227
  %261 = vmatprep.subr.bf16.mxu0 %v226
  %262 = vmatpush1.bf16.msra.mxu0 %v225
  %263 = vmatprep.subr.bf16.mxu0 %v224
  %264 = vmatpush1.bf16.msra.mxu0 %v223
  %265 = vmatprep.subr.bf16.mxu0 0
  %266 = vmatpush2.bf16.msra.mxu0 0
  %267 = vmatprep.subr.bf16.mxu0 0
  %268 = vmatpush2.bf16.msra.mxu0 0
  %269 = vmatprep.subr.bf16.mxu0 0
  %270 = vmatpush2.bf16.msra.mxu0 0
  %271 = vmatprep.subr.bf16.mxu0 0
  %272 = vmatpush2.bf16.msra.mxu0 0
  %273 = vmatprep.subr.bf16.mxu0 0
  %274 = vmatpush2.bf16.msra.mxu0 0
  %275 = vmatprep.subr.bf16.mxu0 0
  %276 = vmatpush2.bf16.msra.mxu0 0
  %277 = vmatprep.subr.bf16.mxu0 0
  %278 = vmatpush2.bf16.msra.mxu0 0
  %279 = vmatprep.subr.bf16.mxu0 0
  %280 = vmatpush2.bf16.msra.mxu0 0
  %281 = vmatprep.mubr.bf16.mxu0 0
  %282 = vmatmul.mubr.bf16.gmra.mxu0 %v241
  %v283 = vpop.f32.mrf.mxu0
  %v284 = vadd.f32 %v179, %v283
  %v285 = vpop.f32.mrf.mxu0
  %v286 = vadd.f32 %v183, %v285
  %v287 = vpop.f32.mrf.mxu0
  %v288 = vadd.f32 %v179, %v287
  %v289 = vpop.f32.mrf.mxu0
  %v290 = vadd.f32 %v183, %v289
  %291 = vmatprep.mubr.bf16.mxu0 0
  %292 = vmatmul.mubr.bf16.gmra.mxu0 %v244
  %v293 = vpop.f32.mrf.mxu0
  %v294 = vadd.f32 %v179, %v293
  %v295 = vpop.f32.mrf.mxu0
  %v296 = vadd.f32 %v183, %v295
  %v297 = vpop.f32.mrf.mxu0
  %v298 = vadd.f32 %v179, %v297
  %v299 = vpop.f32.mrf.mxu0
  %v300 = vadd.f32 %v183, %v299
  %301 = vmatprep.mubr.bf16.mxu0 0
  %302 = vmatmul.mubr.bf16.gmra.mxu0 %v247
  %v303 = vpop.f32.mrf.mxu0
  %v304 = vadd.f32 %v179, %v303
  %v305 = vpop.f32.mrf.mxu0
  %v306 = vadd.f32 %v183, %v305
  %v307 = vpop.f32.mrf.mxu0
  %v308 = vpop.f32.mrf.mxu0
  %309 = vdwg.mxu0
  %v310 = vmul.f32 %v284, 0.5
  %v311 = vmul.f32 %v286, 0.5
  %v312 = vmul.f32 %v288, 0.5
  %v313 = vmul.f32 %v290, 0.5
  %v314 = vmul.f32 %v294, 0.5
  %v315 = vmul.f32 %v296, 0.5
  %v316 = vmul.f32 %v298, 0.5
  %v317 = vmul.f32 %v300, 0.5
  %v318 = vmul.f32 %v304, 0.5
  %v319 = vmul.f32 %v306, 0.5
  %v320 = vmul.f32 %v284, 0.70710677
  %v321 = vmul.f32 %v286, 0.70710677
  %v322 = vmul.f32 %v288, 0.70710677
  %v323 = vmul.f32 %v290, 0.70710677
  %v324 = vmul.f32 %v294, 0.70710677
  %v325 = vmul.f32 %v296, 0.70710677
  %v326 = vmul.f32 %v298, 0.70710677
  %v327 = vmul.f32 %v300, 0.70710677
  %v328 = vmul.f32 %v304, 0.70710677
  %v329 = vmul.f32 %v306, 0.70710677
  %v330 = vand.u32 2147483647, %v320
  %v331 = vand.u32 2147483647, %v321
  %v332 = vand.u32 2147483647, %v322
  %v333 = vand.u32 2147483647, %v323
  %v334 = vand.u32 2147483647, %v324
  %v335 = vand.u32 2147483647, %v325
  %v336 = vand.u32 2147483647, %v326
  %v337 = vand.u32 2147483647, %v327
  %v338 = vand.u32 2147483647, %v328
  %v339 = vand.u32 2147483647, %v329
  %v340 = vmul.f32 %v330, 0.3275911
  %v341 = vmul.f32 %v331, 0.3275911
  %v342 = vmul.f32 %v332, 0.3275911
  %v343 = vmul.f32 %v333, 0.3275911
  %v344 = vmul.f32 %v334, 0.3275911
  %v345 = vmul.f32 %v335, 0.3275911
  %v346 = vmul.f32 %v336, 0.3275911
  %v347 = vmul.f32 %v337, 0.3275911
  %v348 = vmul.f32 %v338, 0.3275911
  %v349 = vmul.f32 %v339, 0.3275911
  %v350 = vadd.f32 %v340, 1.0
  %v351 = vadd.f32 %v341, 1.0
  %v352 = vadd.f32 %v342, 1.0
  %v353 = vadd.f32 %v343, 1.0
  %v354 = vadd.f32 %v344, 1.0
  %v355 = vadd.f32 %v345, 1.0
  %v356 = vadd.f32 %v346, 1.0
  %v357 = vadd.f32 %v347, 1.0
  %v358 = vadd.f32 %v348, 1.0
  %v359 = vadd.f32 %v349, 1.0
  %v360 = vrcp.pop %v350
  %v361 = vrcp.pop %v351
  %v362 = vrcp.pop %v352
  %v363 = vrcp.pop %v353
  %v364 = vrcp.pop %v354
  %v365 = vrcp.pop %v355
  %v366 = vrcp.pop %v356
  %v367 = vrcp.pop %v357
  %v368 = vrcp.pop %v358
  %v369 = vrcp.pop %v359
  %v370 = vmul.f32 %v360, 1.0614054
  %v371 = vmul.f32 %v361, 1.0614054
  %v372 = vmul.f32 %v362, 1.0614054
  %v373 = vmul.f32 %v363, 1.0614054
  %v374 = vmul.f32 %v364, 1.0614054
  %v375 = vmul.f32 %v365, 1.0614054
  %v376 = vmul.f32 %v366, 1.0614054
  %v377 = vmul.f32 %v367, 1.0614054
  %v378 = vmul.f32 %v368, 1.0614054
  %v379 = vmul.f32 %v369, 1.0614054
  %v380 = vadd.f32 %v370, -1.4531521
  %v381 = vadd.f32 %v371, -1.4531521
  %v382 = vadd.f32 %v372, -1.4531521
  %v383 = vadd.f32 %v373, -1.4531521
  %v384 = vadd.f32 %v374, -1.4531521
  %v385 = vadd.f32 %v375, -1.4531521
  %v386 = vadd.f32 %v376, -1.4531521
  %v387 = vadd.f32 %v377, -1.4531521
  %v388 = vadd.f32 %v378, -1.4531521
  %v389 = vadd.f32 %v379, -1.4531521
  %v390 = vmul.f32 %v380, %v360
  %v391 = vmul.f32 %v381, %v361
  %v392 = vmul.f32 %v382, %v362
  %v393 = vmul.f32 %v383, %v363
  %v394 = vmul.f32 %v384, %v364
  %v395 = vmul.f32 %v385, %v365
  %v396 = vmul.f32 %v386, %v366
  %v397 = vmul.f32 %v387, %v367
  %v398 = vmul.f32 %v388, %v368
  %v399 = vmul.f32 %v389, %v369
  %v400 = vadd.f32 %v390, 1.4214138
  %v401 = vadd.f32 %v391, 1.4214138
  %v402 = vadd.f32 %v392, 1.4214138
  %v403 = vadd.f32 %v393, 1.4214138
  %v404 = vadd.f32 %v394, 1.4214138
  %v405 = vadd.f32 %v395, 1.4214138
  %v406 = vadd.f32 %v396, 1.4214138
  %v407 = vadd.f32 %v397, 1.4214138
  %v408 = vadd.f32 %v398, 1.4214138
  %v409 = vadd.f32 %v399, 1.4214138
  %v410 = vmul.f32 %v400, %v360
  %v411 = vmul.f32 %v401, %v361
  %v412 = vmul.f32 %v402, %v362
  %v413 = vmul.f32 %v403, %v363
  %v414 = vmul.f32 %v404, %v364
  %v415 = vmul.f32 %v405, %v365
  %v416 = vmul.f32 %v406, %v366
  %v417 = vmul.f32 %v407, %v367
  %v418 = vmul.f32 %v408, %v368
  %v419 = vmul.f32 %v409, %v369
  %v420 = vadd.f32 %v410, -0.28449672
  %v421 = vadd.f32 %v411, -0.28449672
  %v422 = vadd.f32 %v412, -0.28449672
  %v423 = vadd.f32 %v413, -0.28449672
  %v424 = vadd.f32 %v414, -0.28449672
  %v425 = vadd.f32 %v415, -0.28449672
  %v426 = vadd.f32 %v416, -0.28449672
  %v427 = vadd.f32 %v417, -0.28449672
  %v428 = vadd.f32 %v418, -0.28449672
  %v429 = vadd.f32 %v419, -0.28449672
  %v430 = vmul.f32 %v420, %v360
  %v431 = vmul.f32 %v421, %v361
  %v432 = vmul.f32 %v422, %v362
  %v433 = vmul.f32 %v423, %v363
  %v434 = vmul.f32 %v424, %v364
  %v435 = vmul.f32 %v425, %v365
  %v436 = vmul.f32 %v426, %v366
  %v437 = vmul.f32 %v427, %v367
  %v438 = vmul.f32 %v428, %v368
  %v439 = vmul.f32 %v429, %v369
  %v440 = vadd.f32 %v430, 0.2548296
  %v441 = vadd.f32 %v431, 0.2548296
  %v442 = vadd.f32 %v432, 0.2548296
  %v443 = vadd.f32 %v433, 0.2548296
  %v444 = vadd.f32 %v434, 0.2548296
  %v445 = vadd.f32 %v435, 0.2548296
  %v446 = vadd.f32 %v436, 0.2548296
  %v447 = vadd.f32 %v437, 0.2548296
  %v448 = vadd.f32 %v438, 0.2548296
  %v449 = vadd.f32 %v439, 0.2548296
  %v450 = vmul.f32 %v440, %v360
  %v451 = vmul.f32 %v441, %v361
  %v452 = vmul.f32 %v442, %v362
  %v453 = vmul.f32 %v443, %v363
  %v454 = vmul.f32 %v444, %v364
  %v455 = vmul.f32 %v445, %v365
  %v456 = vmul.f32 %v446, %v366
  %v457 = vmul.f32 %v447, %v367
  %v458 = vmul.f32 %v448, %v368
  %v459 = vmul.f32 %v449, %v369
  %v460 = vsub.f32 0.0, %v330
  %v461 = vsub.f32 0.0, %v331
  %v462 = vsub.f32 0.0, %v332
  %v463 = vsub.f32 0.0, %v333
  %v464 = vsub.f32 0.0, %v334
  %v465 = vsub.f32 0.0, %v335
  %v466 = vsub.f32 0.0, %v336
  %v467 = vsub.f32 0.0, %v337
  %v468 = vsub.f32 0.0, %v338
  %v469 = vsub.f32 0.0, %v339
  %v470 = vmul.f32 %v460, %v330
  %v471 = vmul.f32 %v461, %v331
  %v472 = vmul.f32 %v462, %v332
  %v473 = vmul.f32 %v463, %v333
  %v474 = vmul.f32 %v464, %v334
  %v475 = vmul.f32 %v465, %v335
  %v476 = vmul.f32 %v466, %v336
  %v477 = vmul.f32 %v467, %v337
  %v478 = vmul.f32 %v468, %v338
  %v479 = vmul.f32 %v469, %v339
  %v480 = vmul.f32 %v470, 1.442695
  %v481 = vpow.pop %v480
  %v482 = vmul.f32 %v471, 1.442695
  %v483 = vpow.pop %v482
  %v484 = vmul.f32 %v472, 1.442695
  %v485 = vpow.pop %v484
  %v486 = vmul.f32 %v473, 1.442695
  %v487 = vpow.pop %v486
  %v488 = vmul.f32 %v474, 1.442695
  %v489 = vpow.pop %v488
  %v490 = vmul.f32 %v475, 1.442695
  %v491 = vpow.pop %v490
  %v492 = vmul.f32 %v476, 1.442695
  %v493 = vpow.pop %v492
  %v494 = vmul.f32 %v477, 1.442695
  %v495 = vpow.pop %v494
  %v496 = vmul.f32 %v478, 1.442695
  %v497 = vpow.pop %v496
  %v498 = vmul.f32 %v479, 1.442695
  %v499 = vpow.pop %v498
  %v500 = vmul.f32 %v450, %v481
  %v501 = vmul.f32 %v451, %v483
  %v502 = vmul.f32 %v452, %v485
  %v503 = vmul.f32 %v453, %v487
  %v504 = vmul.f32 %v454, %v489
  %v505 = vmul.f32 %v455, %v491
  %v506 = vmul.f32 %v456, %v493
  %v507 = vmul.f32 %v457, %v495
  %v508 = vmul.f32 %v458, %v497
  %v509 = vmul.f32 %v459, %v499
  %v510 = vsub.f32 1.0, %v500
  %v511 = vsub.f32 1.0, %v501
  %v512 = vsub.f32 1.0, %v502
  %v513 = vsub.f32 1.0, %v503
  %v514 = vsub.f32 1.0, %v504
  %v515 = vsub.f32 1.0, %v505
  %v516 = vsub.f32 1.0, %v506
  %v517 = vsub.f32 1.0, %v507
  %v518 = vsub.f32 1.0, %v508
  %v519 = vsub.f32 1.0, %v509
  %vm520 = vcmp.lt.f32.partialorder %v320, 0.0
  %vm521 = vcmp.lt.f32.partialorder %v321, 0.0
  %vm522 = vcmp.lt.f32.partialorder %v322, 0.0
  %vm523 = vcmp.lt.f32.partialorder %v323, 0.0
  %vm524 = vcmp.lt.f32.partialorder %v324, 0.0
  %vm525 = vcmp.lt.f32.partialorder %v325, 0.0
  %vm526 = vcmp.lt.f32.partialorder %v326, 0.0
  %vm527 = vcmp.lt.f32.partialorder %v327, 0.0
  %vm528 = vcmp.lt.f32.partialorder %v328, 0.0
  %vm529 = vcmp.lt.f32.partialorder %v329, 0.0
  %v530 = vsub.f32 0.0, %v510
  %v531 = vsub.f32 0.0, %v511
  %v532 = vsub.f32 0.0, %v512
  %v533 = vsub.f32 0.0, %v513
  %v534 = vsub.f32 0.0, %v514
  %v535 = vsub.f32 0.0, %v515
  %v536 = vsub.f32 0.0, %v516
  %v537 = vsub.f32 0.0, %v517
  %v538 = vsub.f32 0.0, %v518
  %v539 = vsub.f32 0.0, %v519
  %v540 = vsel %vm520, %v530, %v510
  %v541 = vsel %vm521, %v531, %v511
  %v542 = vsel %vm522, %v532, %v512
  %v543 = vsel %vm523, %v533, %v513
  %v544 = vsel %vm524, %v534, %v514
  %v545 = vsel %vm525, %v535, %v515
  %v546 = vsel %vm526, %v536, %v516
  %v547 = vsel %vm527, %v537, %v517
  %v548 = vsel %vm528, %v538, %v518
  %v549 = vsel %vm529, %v539, %v519
  %v550 = vadd.f32 %v540, 1.0
  %v551 = vadd.f32 %v541, 1.0
  %v552 = vadd.f32 %v542, 1.0
  %v553 = vadd.f32 %v543, 1.0
  %v554 = vadd.f32 %v544, 1.0
  %v555 = vadd.f32 %v545, 1.0
  %v556 = vadd.f32 %v546, 1.0
  %v557 = vadd.f32 %v547, 1.0
  %v558 = vadd.f32 %v548, 1.0
  %v559 = vadd.f32 %v549, 1.0
  %v560 = vmul.f32 %v310, %v550
  %v561 = vmul.f32 %v311, %v551
  %v562 = vmul.f32 %v312, %v552
  %v563 = vmul.f32 %v313, %v553
  %v564 = vmul.f32 %v314, %v554
  %v565 = vmul.f32 %v315, %v555
  %v566 = vmul.f32 %v316, %v556
  %v567 = vmul.f32 %v317, %v557
  %v568 = vmul.f32 %v318, %v558
  %v569 = vmul.f32 %v319, %v559
  %v570 = vld [vmem:[#allocation3] sm:$0xff]
  %v571 = vld [vmem:[#allocation3 + $0x8] sm:$0xff]
  %v572 = vld [vmem:[#allocation3 + $0x10] sm:$0xff]
  %v573 = vld [vmem:[#allocation3 + $0x18] sm:$0xff]
  %v574 = vld [vmem:[#allocation3 + $0x20] sm:$0x3]
  %v575 = vpack.c.bf16 %v562, %v560
  %v576 = vpack.c.bf16 %v563, %v561
  %v577 = vpack.c.bf16 %v566, %v564
  %v578 = vpack.c.bf16 %v567, %v565
  %v579 = vpack.c.bf16 %v568, %v568
  %v580 = vpack.c.bf16 %v569, %v569
  %v581 = vld [vmem:[%s5] sm:$0xf]
  %v582 = vld [vmem:[%s5 + $0x4] sm:$0xf]
  %v583 = vld [vmem:[%s5 + $0x8] sm:$0xf]
  %v584 = vld [vmem:[%s5 + $0xc] sm:$0xf]
  %v585 = vld [vmem:[%s5 + $0x10] sm:$0xf]
  %v586 = vld [vmem:[%s5 + $0x14] sm:$0xf]
  %v587 = vld [vmem:[%s5 + $0x18] sm:$0xf]
  %v588 = vld [vmem:[%s5 + $0x1c] sm:$0xf]
  %v589 = vld [vmem:[%s5 + $0x20] sm:$0xf]
  %v590 = vld [vmem:[%s5 + $0x24] sm:$0xf]
  %v591 = vld [vmem:[%s5 + $0x28] sm:$0xf]
  %v592 = vld [vmem:[%s5 + $0x2c] sm:$0xf]
  %v593 = vld [vmem:[%s5 + $0x30] sm:$0xf]
  %v594 = vld [vmem:[%s5 + $0x34] sm:$0xf]
  %v595 = vld [vmem:[%s5 + $0x38] sm:$0xf]
  %v596 = vld [vmem:[%s5 + $0x3c] sm:$0xf]
  %v597 = vld [vmem:[%s5 + $0x40] sm:$0xf]
  %v598 = vld [vmem:[%s5 + $0x44] sm:$0xf]
  %v599 = vld [vmem:[%s5 + $0x48] sm:$0xf]
  %v600 = vld [vmem:[%s5 + $0x4c] sm:$0xf]
  %v601 = vld [vmem:[%s5 + $0x50] sm:$0xf]
  %v602 = vld [vmem:[%s5 + $0x54] sm:$0xf]
  %v603 = vld [vmem:[%s5 + $0x58] sm:$0xf]
  %v604 = vld [vmem:[%s5 + $0x5c] sm:$0xf]
  %v605 = vld [vmem:[%s5 + $0x60] sm:$0xf]
  %v606 = vld [vmem:[%s5 + $0x64] sm:$0xf]
  %v607 = vld [vmem:[%s5 + $0x68] sm:$0xf]
  %v608 = vld [vmem:[%s5 + $0x6c] sm:$0xf]
  %v609 = vld [vmem:[%s5 + $0x70] sm:$0xf]
  %v610 = vld [vmem:[%s5 + $0x74] sm:$0xf]
  %v611 = vld [vmem:[%s5 + $0x78] sm:$0xf]
  %v612 = vld [vmem:[%s5 + $0x7c] sm:$0xf]
  %v645 = vunpack.c.l.b16 %v581
  %v646 = vunpack.c.l.b16 %v582
  %v647 = vunpack.c.l.b16 %v583
  %v648 = vunpack.c.l.b16 %v584
  %v649 = vunpack.c.l.b16 %v585
  %v650 = vunpack.c.l.b16 %v586
  %v651 = vunpack.c.l.b16 %v587
  %v652 = vunpack.c.l.b16 %v588
  %v653 = vunpack.c.l.b16 %v589
  %v654 = vunpack.c.l.b16 %v590
  %v655 = vunpack.c.l.b16 %v591
  %v656 = vunpack.c.l.b16 %v592
  %v657 = vunpack.c.l.b16 %v593
  %v658 = vunpack.c.l.b16 %v594
  %v659 = vunpack.c.l.b16 %v595
  %v660 = vunpack.c.l.b16 %v596
  %v661 = vunpack.c.l.b16 %v597
  %v662 = vunpack.c.l.b16 %v598
  %v663 = vunpack.c.l.b16 %v599
  %v664 = vunpack.c.l.b16 %v600
  %v665 = vunpack.c.l.b16 %v601
  %v666 = vunpack.c.l.b16 %v602
  %v667 = vunpack.c.l.b16 %v603
  %v668 = vunpack.c.l.b16 %v604
  %v669 = vunpack.c.l.b16 %v605
  %v670 = vunpack.c.l.b16 %v606
  %v671 = vunpack.c.l.b16 %v607
  %v672 = vunpack.c.l.b16 %v608
  %v673 = vunpack.c.l.b16 %v609
  %v674 = vunpack.c.l.b16 %v610
  %v675 = vunpack.c.l.b16 %v611
  %v676 = vunpack.c.l.b16 %v612
  %v677 = vpack.c.b16 %v646, %v645
  %v678 = vpack.c.b16 %v648, %v647
  %v679 = vpack.c.b16 %v650, %v649
  %v680 = vpack.c.b16 %v652, %v651
  %v681 = vpack.c.b16 %v654, %v653
  %v682 = vpack.c.b16 %v656, %v655
  %v683 = vpack.c.b16 %v658, %v657
  %v684 = vpack.c.b16 %v660, %v659
  %v685 = vpack.c.b16 %v662, %v661
  %v686 = vpack.c.b16 %v664, %v663
  %v687 = vpack.c.b16 %v666, %v665
  %v688 = vpack.c.b16 %v668, %v667
  %v689 = vpack.c.b16 %v670, %v669
  %v690 = vpack.c.b16 %v672, %v671
  %v691 = vpack.c.b16 %v674, %v673
  %v692 = vpack.c.b16 %v676, %v675
  %709 = vmatprep.subr.bf16.mxu0 0
  %710 = vmatpush1.bf16.msra.mxu0 %v684
  %711 = vmatprep.subr.bf16.mxu0 0
  %712 = vmatpush1.bf16.msra.mxu0 %v683
  %713 = vmatprep.subr.bf16.mxu0 0
  %714 = vmatpush1.bf16.msra.mxu0 %v682
  %715 = vmatprep.subr.bf16.mxu0 0
  %716 = vmatpush1.bf16.msra.mxu0 %v681
  %717 = vmatprep.subr.bf16.mxu0 0
  %718 = vmatpush1.bf16.msra.mxu0 %v680
  %719 = vmatprep.subr.bf16.mxu0 0
  %720 = vmatpush1.bf16.msra.mxu0 %v679
  %721 = vmatprep.subr.bf16.mxu0 0
  %722 = vmatpush1.bf16.msra.mxu0 %v678
  %723 = vmatprep.subr.bf16.mxu0 0
  %724 = vmatpush1.bf16.msra.mxu0 %v677
  %725 = vmatprep.subr.bf16.mxu0 0
  %726 = vmatpush2.bf16.msra.mxu0 %v692
  %727 = vmatprep.subr.bf16.mxu0 0
  %728 = vmatpush2.bf16.msra.mxu0 %v691
  %729 = vmatprep.subr.bf16.mxu0 0
  %730 = vmatpush2.bf16.msra.mxu0 %v690
  %731 = vmatprep.subr.bf16.mxu0 0
  %732 = vmatpush2.bf16.msra.mxu0 %v689
  %733 = vmatprep.subr.bf16.mxu0 0
  %734 = vmatpush2.bf16.msra.mxu0 %v688
  %735 = vmatprep.subr.bf16.mxu0 0
  %736 = vmatpush2.bf16.msra.mxu0 %v687
  %737 = vmatprep.subr.bf16.mxu0 0
  %738 = vmatpush2.bf16.msra.mxu0 %v686
  %739 = vmatprep.subr.bf16.mxu0 0
  %740 = vmatpush2.bf16.msra.mxu0 %v685
  %741 = vmatprep.mubr.bf16.mxu0 %v576
  %742 = vmatmul.mubr.bf16.gmra.mxu0 %v575
  %v743 = vpop.f32.mrf.mxu0
  %v744 = vadd.f32 0.0, %v743
  %v745 = vpop.f32.mrf.mxu0
  %v746 = vpop.f32.mrf.mxu0
  %v747 = vadd.f32 0.0, %v746
  %v748 = vpop.f32.mrf.mxu0
  %749 = vmatprep.mubr.bf16.mxu0 %v578
  %750 = vmatmul.mubr.bf16.gmra.mxu0 %v577
  %v751 = vpop.f32.mrf.mxu0
  %v752 = vadd.f32 0.0, %v751
  %v753 = vpop.f32.mrf.mxu0
  %v754 = vpop.f32.mrf.mxu0
  %v755 = vadd.f32 0.0, %v754
  %v756 = vpop.f32.mrf.mxu0
  %757 = vmatprep.mubr.bf16.mxu0 %v580
  %758 = vmatmul.mubr.bf16.gmra.mxu0 %v579
  %v759 = vpop.f32.mrf.mxu0
  %v760 = vadd.f32 0.0, %v759
  %v761 = vpop.f32.mrf.mxu0
  %v762 = vpop.f32.mrf.mxu0
  %v763 = vpop.f32.mrf.mxu0
  %764 = vdwg.mxu0
  %v765 = vadd.f32 %v570, %v744
  %v766 = vadd.f32 %v571, %v747
  %v767 = vadd.f32 %v572, %v752
  %v768 = vadd.f32 %v573, %v755
  %v769 = vadd.f32 %v574, %v760
  %770 = vst.msk [vmem:[#allocation3] sm:$0xff] %vm239, %v765
  %771 = vst.msk [vmem:[#allocation3 + $0x8] sm:$0xff] %vm239, %v766
  %772 = vst.msk [vmem:[#allocation3 + $0x10] sm:$0xff] %vm239, %v767
  %773 = vst.msk [vmem:[#allocation3 + $0x18] sm:$0xff] %vm239, %v768
  %vm774 = vcmask 517120
  %775 = vst.msk [vmem:[#allocation3 + $0x20] sm:$0x3] %vm774, %v769
  // Predicated region
  $region34: #{encoder_layer.3} parent=0 // pred_check
    %p776 = pneg %p27
  $region35: #{encoder_layer.3} parent=0 // pred_check_branch
    %778 = sbr.rel (%p776) target = $region37
  $region36: #{encoder_layer.3} parent=0 // pred_region
    %v779 = vld [vmem:[#allocation3] sm:$0xff]
    %v780 = vld [vmem:[#allocation3 + $0x8] sm:$0xff]
    %v781 = vld [vmem:[#allocation3 + $0x10] sm:$0xff]
    %v782 = vld [vmem:[#allocation3 + $0x18] sm:$0xff]
    %v783 = vld [vmem:[#allocation3 + $0x20] sm:$0x3]
    %v784 = vld [vmem:[%s6] sm:$0x1]
    %v786 = vlaneseq
    %v787 = vshrl.u32 %v786, 7
    %v788 = vsub.s32 0, %v787
    %v789 = vrot.slane %v784, %v788
    %v791 = vadd.f32 %v779, %v789
    %v792 = vadd.f32 %v780, %v789
    %v793 = vadd.f32 %v781, %v789
    %v794 = vadd.f32 %v782, %v789
    %v795 = vadd.f32 %v783, %v789
    %v796 = vld [vmem:[%s0] sm:$0xff]
    %v797 = vld [vmem:[%s0 + $0x8] sm:$0xff]
    %v798 = vld [vmem:[%s0 + $0x10] sm:$0xff]
    %v799 = vld [vmem:[%s0 + $0x18] sm:$0xff]
    %v800 = vld [vmem:[%s0 + $0x20] sm:$0x3]
    %v801 = vadd.f32 %v791, %v796
    %v802 = vadd.f32 %v792, %v797
    %v803 = vadd.f32 %v793, %v798
    %v804 = vadd.f32 %v794, %v799
    %v805 = vadd.f32 %v795, %v800
    %806 = vst.msk [vmem:[%s7] sm:$0xff] %vm239, %v801
    %807 = vst.msk [vmem:[%s7 + $0x8] sm:$0xff] %vm239, %v802
    %808 = vst.msk [vmem:[%s7 + $0x10] sm:$0xff] %vm239, %v803
    %809 = vst.msk [vmem:[%s7 + $0x18] sm:$0xff] %vm239, %v804
    %810 = vst.msk [vmem:[%s7 + $0x20] sm:$0x3] %vm774, %v805
  $region37: #{encoder_layer.3} parent=0 // pred_fallthru
    _
  // Predicated region
  $region38: #{encoder_layer.3} parent=0 // pred_check
    _
  $region39: #{encoder_layer.3} parent=0 // pred_check_branch
    %812 = sbr.rel (0) target = $region41
  $region40: #{encoder_layer.3} parent=0 // pred_region
    _
  $region41: #{encoder_layer.3} parent=0 // pred_fallthru
    _
  // Predicated region
  $region42: #{encoder_layer.3} parent=0 // pred_check
    _
  $region43: #{encoder_layer.3} parent=0 // pred_check_branch
    %814 = sbr.rel (0) target = $region45
  $region44: #{encoder_layer.3} parent=0 // pred_region
    _
  $region45: #{encoder_layer.3} parent=0 // pred_fallthru
    _

// kernel: encoder_layer.2
$region0: #{encoder_layer.2}
  #allocation0 [shape = 'u32[]', space=smem, size = 0x4, offset = 0x4, fixed_abs, tag = 'smem constant byte address 0x4 - core index']
  #allocation1 [shape = 'u32[144,128]{1,0:T(1,128)}', space=vmem, size = 0x12000, scoped, tag = 'internal scratch']
  #allocation2 [shape = 'f32[17,64]{1,0:T(8,128)}', space=vmem, size = 0x3000, scoped, tag = 'scratch operand']
  %s0 = inlined_call_operand.vmem [shape: f32[2,17,64], index: 0, kind: input, shape index: {}]
  %s1 = inlined_call_operand.vmem [shape: f32[1,64], index: 1, kind: input, shape index: {}]
  %s2 = inlined_call_operand.vmem [shape: f32[1,64], index: 2, kind: input, shape index: {}]
  %s3 = inlined_call_operand.vmem [shape: bf16[64,192], index: 3, kind: input, shape index: {}]
  %s4 = inlined_call_operand.hbm [shape: bf16[17,17,32], index: 4, kind: input, shape index: {}]
  %s5 = inlined_call_operand.hbm [shape: bf16[17,17,32], index: 5, kind: input, shape index: {}]
  %s6 = inlined_call_operand.vmem [shape: bf16[64,64], index: 6, kind: input, shape index: {}]
  %s7 = inlined_call_operand.vmem [shape: f32[1,64], index: 7, kind: input, shape index: {}]
  %s8 = inlined_call_operand.vmem [shape: f32[2,17,64], index: 8, kind: output, shape index: {}]
  %s9 = sld [smem:[#allocation0]]
  $region73: #{encoder_layer.2} parent=0
    _
  %s11 = ssub.s32 1, %s9
  %s12 = scalar_select 0, %s11, %s9
  $region1: #{encoder_layer.2} parent=0
    #allocation3 [shape = 'u8[104448]{0}', space=vmem, size = 0x19800, scoped, tag = 'input window, operand 4, single buffered']
    #allocation4 [shape = 's32[2]{0}', space=sflag, size = 0x8, scoped, tag = 'scoped memory for encoder_layer.2']
    #allocation5 [shape = 'u8[104448]{0}', space=vmem, size = 0x19800, scoped, tag = 'input window, operand 5, single buffered']
    #allocation6 [shape = 's32[1]{0}', space=sflag, size = 0x4, scoped, tag = 'scoped memory for encoder_layer.2']
    %13 = vsyncpa [#allocation4], 0
    %14 = vsyncpa [#allocation6], 0
    loop: start=0, step=1, limit=4
    $region2: #{encoder_layer.2} parent=1 // loop_pre_header
      _
    $region3: #{encoder_layer.2} parent=1 // loop_header
      %s16 = sphi 0, %s20
      %p17 = scmp.ge.s32.totalorder %s16, 4
      %s26 = sphi 0, %s28
      %s29 = sphi 0, %s26
      %s30 = sphi 0, %s29
      %s46 = sphi 0, %s30
      %s50 = sphi 0, %s50
      %s52 = sphi 0, %s50
      %s53 = sphi 0, %s52
      %s67 = sphi 0, %s53
      %s71 = sphi 0, %s71
      %s73 = sphi 0, %s71
      %s74 = sphi 0, %s73
      %s88 = sphi 0, %s74
      %s92 = sphi 0, %s92
      %s94 = sphi 0, %s92
      %s95 = sphi 0, %s94
      %s109 = sphi 0, %s95
      %s113 = sphi 0, %s113
      %s115 = sphi 0, %s113
      %s116 = sphi 0, %s115
      %s130 = sphi 0, %s116
      %s134 = sphi 0, %s134
      %s136 = sphi 0, %s134
      %s137 = sphi 0, %s136
      %s151 = sphi 0, %s137
      %s155 = sphi 0, %s155
      %s157 = sphi 0, %s155
      %s158 = sphi 0, %s157
      %s172 = sphi 0, %s158
      %s176 = sphi 0, %s176
      %s178 = sphi 0, %s176
      %s179 = sphi 0, %s178
      %s193 = sphi 0, %s179
      %s199 = sphi 0, %s201
      %s202 = sphi 0, %s199
      %s203 = sphi 0, %s202
      %s219 = sphi 0, %s203
    $region4: #{encoder_layer.2} parent=1 // loop_header_branch
      %19 = sbr.rel (%p17) target = $region8
    $region5: #{encoder_layer.2} parent=1 // loop_body
      %s21 = ssub.s32 %s16, 1
      %s22 = ssub.s32 %s16, 2
      %s23 = sadd.s32 %s16, 1
      %s24 = ssub.s32 %s16, %s23
      %p25 = scmp.eq.s32.totalorder %s24, 0
      %s27 = sadd.s32 %s26, 1
      %s28 = scalar_select %p25, %s26, %s27
      %p31 = pneg %p25
      %p32 = scmp.eq.s32.totalorder %s16, 1
      %p33 = por %p31, %p32
      %p34 = scmp.ne.s32.totalorder %s26, %s29
      %p35 = scmp.eq.s32.totalorder %s16, 0
      %p36 = por %p34, %p35
      %p37 = scmp.ne.s32.totalorder %s26, %s29
      %p38 = scmp.eq.s32.totalorder %s21, 1
      %p39 = por %p37, %p38
      %p40 = scmp.ne.s32.totalorder %s29, %s30
      %p41 = scmp.eq.s32.totalorder %s21, 0
      %p42 = por %p40, %p41
      %p43 = scmp.ne.s32.totalorder %s29, %s30
      %p44 = scmp.eq.s32.totalorder %s22, 1
      %p45 = por %p43, %p44
      %p47 = scmp.ne.s32.totalorder %s30, %s46
      %p48 = scmp.eq.s32.totalorder %s22, 0
      %p49 = por %p47, %p48
      %s51 = sadd.s32 %s50, 1
      %p54 = scmp.eq.s32.totalorder %s16, 1
      %p55 = scmp.ne.s32.totalorder %s50, %s52
      %p56 = scmp.eq.s32.totalorder %s16, 0
      %p57 = por %p55, %p56
      %p58 = scmp.ne.s32.totalorder %s50, %s52
      %p59 = scmp.eq.s32.totalorder %s21, 1
      %p60 = por %p58, %p59
      %p61 = scmp.ne.s32.totalorder %s52, %s53
      %p62 = scmp.eq.s32.totalorder %s21, 0
      %p63 = por %p61, %p62
      %p64 = scmp.ne.s32.totalorder %s52, %s53
      %p65 = scmp.eq.s32.totalorder %s22, 1
      %p66 = por %p64, %p65
      %p68 = scmp.ne.s32.totalorder %s53, %s67
      %p69 = scmp.eq.s32.totalorder %s22, 0
      %p70 = por %p68, %p69
      %s72 = sadd.s32 %s71, 1
      %p75 = scmp.eq.s32.totalorder %s16, 1
      %p76 = scmp.ne.s32.totalorder %s71, %s73
      %p77 = scmp.eq.s32.totalorder %s16, 0
      %p78 = por %p76, %p77
      %p79 = scmp.ne.s32.totalorder %s71, %s73
      %p80 = scmp.eq.s32.totalorder %s21, 1
      %p81 = por %p79, %p80
      %p82 = scmp.ne.s32.totalorder %s73, %s74
      %p83 = scmp.eq.s32.totalorder %s21, 0
      %p84 = por %p82, %p83
      %p85 = scmp.ne.s32.totalorder %s73, %s74
      %p86 = scmp.eq.s32.totalorder %s22, 1
      %p87 = por %p85, %p86
      %p89 = scmp.ne.s32.totalorder %s74, %s88
      %p90 = scmp.eq.s32.totalorder %s22, 0
      %p91 = por %p89, %p90
      %s93 = sadd.s32 %s92, 1
      %p96 = scmp.eq.s32.totalorder %s16, 1
      %p97 = scmp.ne.s32.totalorder %s92, %s94
      %p98 = scmp.eq.s32.totalorder %s16, 0
      %p99 = por %p97, %p98
      %p100 = scmp.ne.s32.totalorder %s92, %s94
      %p101 = scmp.eq.s32.totalorder %s21, 1
      %p102 = por %p100, %p101
      %p103 = scmp.ne.s32.totalorder %s94, %s95
      %p104 = scmp.eq.s32.totalorder %s21, 0
      %p105 = por %p103, %p104
      %p106 = scmp.ne.s32.totalorder %s94, %s95
      %p107 = scmp.eq.s32.totalorder %s22, 1
      %p108 = por %p106, %p107
      %p110 = scmp.ne.s32.totalorder %s95, %s109
      %p111 = scmp.eq.s32.totalorder %s22, 0
      %p112 = por %p110, %p111
      %s114 = sadd.s32 %s113, 1
      %p117 = scmp.eq.s32.totalorder %s16, 1
      %p118 = scmp.ne.s32.totalorder %s113, %s115
      %p119 = scmp.eq.s32.totalorder %s16, 0
      %p120 = por %p118, %p119
      %p121 = scmp.ne.s32.totalorder %s113, %s115
      %p122 = scmp.eq.s32.totalorder %s21, 1
      %p123 = por %p121, %p122
      %p124 = scmp.ne.s32.totalorder %s115, %s116
      %p125 = scmp.eq.s32.totalorder %s21, 0
      %p126 = por %p124, %p125
      %p127 = scmp.ne.s32.totalorder %s115, %s116
      %p128 = scmp.eq.s32.totalorder %s22, 1
      %p129 = por %p127, %p128
      %p131 = scmp.ne.s32.totalorder %s116, %s130
      %p132 = scmp.eq.s32.totalorder %s22, 0
      %p133 = por %p131, %p132
      %s135 = sadd.s32 %s134, 1
      %p138 = scmp.eq.s32.totalorder %s16, 1
      %p139 = scmp.ne.s32.totalorder %s134, %s136
      %p140 = scmp.eq.s32.totalorder %s16, 0
      %p141 = por %p139, %p140
      %p142 = scmp.ne.s32.totalorder %s134, %s136
      %p143 = scmp.eq.s32.totalorder %s21, 1
      %p144 = por %p142, %p143
      %p145 = scmp.ne.s32.totalorder %s136, %s137
      %p146 = scmp.eq.s32.totalorder %s21, 0
      %p147 = por %p145, %p146
      %p148 = scmp.ne.s32.totalorder %s136, %s137
      %p149 = scmp.eq.s32.totalorder %s22, 1
      %p150 = por %p148, %p149
      %p152 = scmp.ne.s32.totalorder %s137, %s151
      %p153 = scmp.eq.s32.totalorder %s22, 0
      %p154 = por %p152, %p153
      %s156 = sadd.s32 %s155, 1
      %p159 = scmp.eq.s32.totalorder %s16, 1
      %p160 = scmp.ne.s32.totalorder %s155, %s157
      %p161 = scmp.eq.s32.totalorder %s16, 0
      %p162 = por %p160, %p161
      %p163 = scmp.ne.s32.totalorder %s155, %s157
      %p164 = scmp.eq.s32.totalorder %s21, 1
      %p165 = por %p163, %p164
      %p166 = scmp.ne.s32.totalorder %s157, %s158
      %p167 = scmp.eq.s32.totalorder %s21, 0
      %p168 = por %p166, %p167
      %p169 = scmp.ne.s32.totalorder %s157, %s158
      %p170 = scmp.eq.s32.totalorder %s22, 1
      %p171 = por %p169, %p170
      %p173 = scmp.ne.s32.totalorder %s158, %s172
      %p174 = scmp.eq.s32.totalorder %s22, 0
      %p175 = por %p173, %p174
      %s177 = sadd.s32 %s176, 1
      %p180 = scmp.eq.s32.totalorder %s16, 1
      %p181 = scmp.ne.s32.totalorder %s176, %s178
      %p182 = scmp.eq.s32.totalorder %s16, 0
      %p183 = por %p181, %p182
      %p184 = scmp.ne.s32.totalorder %s176, %s178
      %p185 = scmp.eq.s32.totalorder %s21, 1
      %p186 = por %p184, %p185
      %p187 = scmp.ne.s32.totalorder %s178, %s179
      %p188 = scmp.eq.s32.totalorder %s21, 0
      %p189 = por %p187, %p188
      %p190 = scmp.ne.s32.totalorder %s178, %s179
      %p191 = scmp.eq.s32.totalorder %s22, 1
      %p192 = por %p190, %p191
      %p194 = scmp.ne.s32.totalorder %s179, %s193
      %p195 = scmp.eq.s32.totalorder %s22, 0
      %p196 = por %p194, %p195
      %s197 = ssub.s32 %s16, %s23
      %p198 = scmp.eq.s32.totalorder %s197, 0
      %s200 = sadd.s32 %s199, 1
      %s201 = scalar_select %p198, %s199, %s200
      %p204 = pneg %p198
      %p205 = scmp.eq.s32.totalorder %s16, 1
      %p206 = por %p204, %p205
      %p207 = scmp.ne.s32.totalorder %s199, %s202
      %p208 = scmp.eq.s32.totalorder %s16, 0
      %p209 = por %p207, %p208
      %p210 = scmp.ne.s32.totalorder %s199, %s202
      %p211 = scmp.eq.s32.totalorder %s21, 1
      %p212 = por %p210, %p211
      %p213 = scmp.ne.s32.totalorder %s202, %s203
      %p214 = scmp.eq.s32.totalorder %s21, 0
      %p215 = por %p213, %p214
      %p216 = scmp.ne.s32.totalorder %s202, %s203
      %p217 = scmp.eq.s32.totalorder %s22, 1
      %p218 = por %p216, %p217
      %p220 = scmp.ne.s32.totalorder %s203, %s219
      %p221 = scmp.eq.s32.totalorder %s22, 0
      %p222 = por %p220, %p221
      %p223 = scmp.le.s32.totalorder 1, %s16
      %p224 = scmp.lt.s32.totalorder %s16, 3
      %p225 = pnand %p223, %p224
      %p226 = pneg %p225
      // Predicated region
      $region9: #{encoder_layer.2} parent=5 // pred_check
        _
      $region10: #{encoder_layer.2} parent=5 // pred_check_branch
        %228 = sbr.rel (%p225) target = $region12
      $region11: #{encoder_layer.2} parent=5 // pred_region
        %s229 = ssub.s32 %s16, 1
        // Predicated region
        $region13: #{encoder_layer.2} parent=11 // pred_check
          %p230 = pneg %p63
        $region14: #{encoder_layer.2} parent=11 // pred_check_branch
          %232 = sbr.rel (%p230) target = $region16
        $region15: #{encoder_layer.2} parent=11 // pred_region
          _
        $region16: #{encoder_layer.2} parent=11 // pred_fallthru
          _
        // Predicated region
        $region17: #{encoder_layer.2} parent=11 // pred_check
          %p233 = pneg %p84
        $region18: #{encoder_layer.2} parent=11 // pred_check_branch
          %235 = sbr.rel (%p233) target = $region20
        $region19: #{encoder_layer.2} parent=11 // pred_region
          _
        $region20: #{encoder_layer.2} parent=11 // pred_fallthru
          _
        // Predicated region
        $region21: #{encoder_layer.2} parent=11 // pred_check
          %p236 = pneg %p105
        $region22: #{encoder_layer.2} parent=11 // pred_check_branch
          %238 = sbr.rel (%p236) target = $region24
        $region23: #{encoder_layer.2} parent=11 // pred_region
          _
        $region24: #{encoder_layer.2} parent=11 // pred_fallthru
          _
        // Predicated region
        $region25: #{encoder_layer.2} parent=11 // pred_check
          %p239 = pneg %p126
        $region26: #{encoder_layer.2} parent=11 // pred_check_branch
          %241 = sbr.rel (%p239) target = $region28
        $region27: #{encoder_layer.2} parent=11 // pred_region
          %s243 = ssub.s32 3264, 3264
          %244 = vsyncadd [#allocation4], %s243
          %s245 = sshll.u32 [#allocation3], 4
          %s246 = int_to_ptr.vmem [resolvable:$true] %s245
          %251 = dma.hbm_to_vmem [thread:$0]  %s4, 3264, %s246, [#allocation4], 64, 64, 4
        $region28: #{encoder_layer.2} parent=11 // pred_fallthru
          _
        // Predicated region
        $region29: #{encoder_layer.2} parent=11 // pred_check
          %p252 = pneg %p147
        $region30: #{encoder_layer.2} parent=11 // pred_check_branch
          %254 = sbr.rel (%p252) target = $region32
        $region31: #{encoder_layer.2} parent=11 // pred_region
          %s256 = ssub.s32 3264, 3264
          %257 = vsyncadd [#allocation6], %s256
          %s258 = sshll.u32 [#allocation5], 4
          %s259 = int_to_ptr.vmem [resolvable:$true] %s258
          %264 = dma.hbm_to_vmem [thread:$0]  %s5, 3264, %s259, [#allocation6], 64, 64, 4
        $region32: #{encoder_layer.2} parent=11 // pred_fallthru
          _
        // Predicated region
        $region33: #{encoder_layer.2} parent=11 // pred_check
          %p265 = pneg %p168
        $region34: #{encoder_layer.2} parent=11 // pred_check_branch
          %267 = sbr.rel (%p265) target = $region36
        $region35: #{encoder_layer.2} parent=11 // pred_region
          _
        $region36: #{encoder_layer.2} parent=11 // pred_fallthru
          _
        // Predicated region
        $region37: #{encoder_layer.2} parent=11 // pred_check
          %p268 = pneg %p189
        $region38: #{encoder_layer.2} parent=11 // pred_check_branch
          %270 = sbr.rel (%p268) target = $region40
        $region39: #{encoder_layer.2} parent=11 // pred_region
          _
        $region40: #{encoder_layer.2} parent=11 // pred_fallthru
          _
      $region12: #{encoder_layer.2} parent=5 // pred_fallthru
        _
      %p271 = scmp.lt.s32.totalorder %s16, 2
      // Predicated region
      $region41: #{encoder_layer.2} parent=5 // pred_check
        %p272 = pneg %p271
      $region42: #{encoder_layer.2} parent=5 // pred_check_branch
        %274 = sbr.rel (%p272) target = $region44
      $region43: #{encoder_layer.2} parent=5 // pred_region
        // Predicated region
        $region45: #{encoder_layer.2} parent=43 // pred_check
          %p275 = pneg %p36
        $region46: #{encoder_layer.2} parent=43 // pred_check_branch
          %277 = sbr.rel (%p275) target = $region48
        $region47: #{encoder_layer.2} parent=43 // pred_region
          %p278 = scmp.lt.s32.totalorder %s16, 1
          %s279 = scalar_select %p278, %s16, 1
          %s280 = smul.addr %s279, 3
          %s281 = smul.addr %s280, 8
          %s282 = scalar_lea.vmem %s0, %s281
        $region48: #{encoder_layer.2} parent=43 // pred_fallthru
          _
      $region44: #{encoder_layer.2} parent=5 // pred_fallthru
        _
      %p283 = scmp.le.s32.totalorder 1, %s16
      %p284 = scmp.lt.s32.totalorder %s16, 3
      %p285 = pnand %p283, %p284
      %p286 = pneg %p285
      // Predicated region
      $region49: #{encoder_layer.2} parent=5 // pred_check
        _
      $region50: #{encoder_layer.2} parent=5 // pred_check_branch
        %288 = sbr.rel (%p285) target = $region52
      $region51: #{encoder_layer.2} parent=5 // pred_region
        %s289 = ssub.s32 %s16, 1
        // Predicated region
        $region53: #{encoder_layer.2} parent=51 // pred_check
          %p290 = pneg %p126
        $region54: #{encoder_layer.2} parent=51 // pred_check_branch
          %292 = sbr.rel (%p290) target = $region56
        $region55: #{encoder_layer.2} parent=51 // pred_region
          %293 = dma.done [#allocation4], 3264
        $region56: #{encoder_layer.2} parent=51 // pred_fallthru
          _
        // Predicated region
        $region57: #{encoder_layer.2} parent=51 // pred_check
          %p294 = pneg %p147
        $region58: #{encoder_layer.2} parent=51 // pred_check_branch
          %296 = sbr.rel (%p294) target = $region60
        $region59: #{encoder_layer.2} parent=51 // pred_region
          %297 = dma.done [#allocation6], 3264
        $region60: #{encoder_layer.2} parent=51 // pred_fallthru
          _
        %p298 = scmp.lt.s32.totalorder %s21, 1
        %s299 = scalar_select %p298, %s21, 1
        %s300 = smul.addr %s299, 3
        %s301 = smul.addr %s300, 8
        %s302 = scalar_lea.vmem %s0, %s301
        %p303 = pneg %p42
        %p304 = pneg %p39
        %p305 = pneg %p63
        %p306 = pneg %p60
        %p307 = pneg %p84
        %p308 = pneg %p81
        %p309 = pneg %p105
        %p310 = pneg %p102
        %p311 = pneg %p126
        %p312 = pneg %p123
        %p313 = pneg %p147
        %p314 = pneg %p144
        %p315 = pneg %p168
        %p316 = pneg %p165
        %p317 = pneg %p189
        %p318 = pneg %p186
        %p319 = pneg %p215
        %p320 = pneg %p212
        %p321 = scmp.lt.s32.totalorder %s21, 1
        %s322 = scalar_select %p321, %s21, 1
        %s323 = smul.addr %s322, 3
        %s324 = smul.addr %s323, 8
        %s325 = scalar_lea.vmem %s8, %s324
        %p326 = scmp.lt.s32.totalorder %s21, 1
        %s327 = scalar_select %p326, %s21, 1
        %s328 = smul.addr %s327, 3
        %s329 = smul.addr %s328, 8
        %s330 = scalar_lea.vmem %s0, %s329
        %p331 = scmp.lt.s32.totalorder %s21, 1
        %s332 = scalar_select %p331, %s21, 1
        %s333 = smul.addr %s332, 3
        %s334 = smul.addr %s333, 8
        %s335 = scalar_lea.vmem %s8, %s334
        %v337 = vld [vmem:[%s330] sm:$0xff]
        %v338 = vld [vmem:[%s330 + $0x8] sm:$0xff]
        %v339 = vld [vmem:[%s330 + $0x10] sm:$0x1]
        %v340 = vld [vmem:[%s1] sm:$0x1]
        %v341 = vld [vmem:[%s2] sm:$0x1]
        %vm342 = vcmask 523264
        %v343 = vsel %vm342, %v337, 0.0
        %344 = vadd.xlane.f32.xlu0 %v343
        %v345 = vpop.xlane.xlu0 %344
        %v346 = vsel %vm342, %v338, 0.0
        %347 = vadd.xlane.f32.xlu0 %v346
        %v348 = vpop.xlane.xlu0 %347
        %vm349 = vcmask 516096
        %v350 = vsel %vm349, %v339, 0.0
        %351 = vadd.xlane.f32.xlu0 %v350
        %v352 = vpop.xlane.xlu0 %351
        %v353 = vrcp.pop 64.0
        %v354 = vmul.f32 %v345, %v353
        %v355 = vmul.f32 %v348, %v353
        %v356 = vmul.f32 %v352, %v353
        %v357 = vsub.f32 %v337, %v354
        %v358 = vsub.f32 %v338, %v355
        %v359 = vsub.f32 %v339, %v356
        %v360 = vmul.f32 %v357, %v357
        %v361 = vmul.f32 %v358, %v358
        %v362 = vmul.f32 %v359, %v359
        %v363 = vsel %vm342, %v360, 0.0
        %364 = vadd.xlane.f32.xlu0 %v363
        %v365 = vpop.xlane.xlu0 %364
        %v366 = vsel %vm342, %v361, 0.0
        %367 = vadd.xlane.f32.xlu0 %v366
        %v368 = vpop.xlane.xlu0 %367
        %v369 = vsel %vm349, %v362, 0.0
        %370 = vadd.xlane.f32.xlu0 %v369
        %v371 = vpop.xlane.xlu0 %370
        %v372 = vmul.f32 %v365, %v353
        %v373 = vmul.f32 %v368, %v353
        %v374 = vmul.f32 %v371, %v353
        %v375 = vadd.f32 %v372, 1e-05
        %v376 = vadd.f32 %v373, 1e-05
        %v377 = vadd.f32 %v374, 1e-05
        %v378 = vrsqrt.pop %v375
        %v379 = vrsqrt.pop %v376
        %v380 = vrsqrt.pop %v377
        %v381 = vmul.f32 %v357, %v378
        %v382 = vmul.f32 %v358, %v379
        %v383 = vmul.f32 %v359, %v380
        %v385 = vlaneseq
        %v386 = vshrl.u32 %v385, 7
        %v387 = vsub.s32 0, %v386
        %v388 = vrot.slane %v340, %v387
        %v390 = vmul.f32 %v381, %v388
        %v391 = vmul.f32 %v382, %v388
        %v392 = vmul.f32 %v383, %v388
        %v394 = vlaneseq
        %v395 = vshrl.u32 %v394, 7
        %v396 = vsub.s32 0, %v395
        %v397 = vrot.slane %v341, %v396
        %v399 = vadd.f32 %v390, %v397
        %v400 = vadd.f32 %v391, %v397
        %v401 = vadd.f32 %v392, %v397
        %v402 = vpack.c.bf16 %v400, %v399
        %v403 = vpack.c.bf16 %v401, %v401
        %v404 = vld [vmem:[%s3] sm:$0xff]
        %v405 = vld [vmem:[%s3 + $0x8] sm:$0xff]
        %v406 = vld [vmem:[%s3 + $0x10] sm:$0xff]
        %v407 = vld [vmem:[%s3 + $0x18] sm:$0xff]
        %v408 = vld [vmem:[%s3 + $0x20] sm:$0xff]
        %v409 = vld [vmem:[%s3 + $0x28] sm:$0xff]
        %v410 = vld [vmem:[%s3 + $0x30] sm:$0xff]
        %v411 = vld [vmem:[%s3 + $0x38] sm:$0xff]
        %v420 = vunpack.c.l.b16 %v404
        %v421 = vunpack.c.h.b16 %v404
        %v422 = vunpack.c.l.b16 %v405
        %v423 = vunpack.c.h.b16 %v405
        %v424 = vunpack.c.l.b16 %v406
        %v425 = vunpack.c.h.b16 %v406
        %v426 = vunpack.c.l.b16 %v407
        %v427 = vunpack.c.h.b16 %v407
        %v428 = vunpack.c.l.b16 %v408
        %v429 = vunpack.c.h.b16 %v408
        %v430 = vunpack.c.l.b16 %v409
        %v431 = vunpack.c.h.b16 %v409
        %v432 = vunpack.c.l.b16 %v410
        %v433 = vunpack.c.h.b16 %v410
        %v434 = vunpack.c.l.b16 %v411
        %v435 = vunpack.c.h.b16 %v411
        %v436 = vpack.c.b16 %v422, %v420
        %v437 = vpack.c.b16 %v423, %v421
        %v438 = vpack.c.b16 %v426, %v424
        %v439 = vpack.c.b16 %v427, %v425
        %v440 = vpack.c.b16 %v430, %v428
        %v441 = vpack.c.b16 %v431, %v429
        %v442 = vpack.c.b16 %v434, %v432
        %v443 = vpack.c.b16 %v435, %v433
        %v453 = vsel %vm342, %v402, 0
        %v456 = vsel %vm342, %v403, 0
        %458 = vmatprep.subr.bf16.mxu0 0
        %459 = vmatpush1.bf16.msra.mxu0 0
        %460 = vmatprep.subr.bf16.mxu0 0
        %461 = vmatpush1.bf16.msra.mxu0 0
        %462 = vmatprep.subr.bf16.mxu0 0
        %463 = vmatpush1.bf16.msra.mxu0 0
        %464 = vmatprep.subr.bf16.mxu0 0
        %465 = vmatpush1.bf16.msra.mxu0 0
        %466 = vmatprep.subr.bf16.mxu0 %v443
        %467 = vmatpush1.bf16.msra.mxu0 %v442
        %468 = vmatprep.subr.bf16.mxu0 %v441
        %469 = vmatpush1.bf16.msra.mxu0 %v440
        %470 = vmatprep.subr.bf16.mxu0 %v439
        %471 = vmatpush1.bf16.msra.mxu0 %v438
        %472 = vmatprep.subr.bf16.mxu0 %v437
        %473 = vmatpush1.bf16.msra.mxu0 %v436
        %474 = vmatprep.subr.bf16.mxu0 0
        %475 = vmatpush2.bf16.msra.mxu0 0
        %476 = vmatprep.subr.bf16.mxu0 0
        %477 = vmatpush2.bf16.msra.mxu0 0
        %478 = vmatprep.subr.bf16.mxu0 0
        %479 = vmatpush2.bf16.msra.mxu0 0
        %480 = vmatprep.subr.bf16.mxu0 0
        %481 = vmatpush2.bf16.msra.mxu0 0
        %482 = vmatprep.subr.bf16.mxu0 0
        %483 = vmatpush2.bf16.msra.mxu0 0
        %484 = vmatprep.subr.bf16.mxu0 0
        %485 = vmatpush2.bf16.msra.mxu0 0
        %486 = vmatprep.subr.bf16.mxu0 0
        %487 = vmatpush2.bf16.msra.mxu0 0
        %488 = vmatprep.subr.bf16.mxu0 0
        %489 = vmatpush2.bf16.msra.mxu0 0
        %490 = vmatprep.mubr.bf16.mxu0 0
        %491 = vmatmul.mubr.bf16.gmra.mxu0 %v453
        %v492 = vpop.f32.mrf.mxu0
        %v493 = vadd.f32 0.0, %v492
        %v494 = vpop.f32.mrf.mxu0
        %v495 = vadd.f32 0.0, %v494
        %v496 = vpop.f32.mrf.mxu0
        %v497 = vadd.f32 0.0, %v496
        %v498 = vpop.f32.mrf.mxu0
        %v499 = vadd.f32 0.0, %v498
        %500 = vmatprep.mubr.bf16.mxu0 0
        %501 = vmatmul.mubr.bf16.gmra.mxu0 %v456
        %v502 = vpop.f32.mrf.mxu0
        %v503 = vadd.f32 0.0, %v502
        %v504 = vpop.f32.mrf.mxu0
        %v505 = vadd.f32 0.0, %v504
        %v506 = vpop.f32.mrf.mxu0
        %v507 = vpop.f32.mrf.mxu0
        %508 = vdwg.mxu0
        %v509 = vmul.f32 %v493, 0.17677669
        %v510 = vmul.f32 %v497, 0.17677669
        %v511 = vmul.f32 %v503, 0.17677669
        %v512 = vld [vmem:[#allocation3] sm:$0xf]
        %v513 = vld [vmem:[#allocation3 + $0x4] sm:$0xf]
        %v514 = vld [vmem:[#allocation3 + $0x8] sm:$0x1]
        %v515 = vld [vmem:[#allocation3 + $0xc] sm:$0xf]
        %v516 = vld [vmem:[#allocation3 + $0x10] sm:$0xf]
        %v517 = vld [vmem:[#allocation3 + $0x14] sm:$0x1]
        %v518 = vld [vmem:[#allocation3 + $0x18] sm:$0xf]
        %v519 = vld [vmem:[#allocation3 + $0x1c] sm:$0xf]
        %v520 = vld [vmem:[#allocation3 + $0x20] sm:$0x1]
        %v521 = vld [vmem:[#allocation3 + $0x24] sm:$0xf]
        %v522 = vld [vmem:[#allocation3 + $0x28] sm:$0xf]
        %v523 = vld [vmem:[#allocation3 + $0x2c] sm:$0x1]
        %v524 = vld [vmem:[#allocation3 + $0x30] sm:$0xf]
        %v525 = vld [vmem:[#allocation3 + $0x34] sm:$0xf]
        %v526 = vld [vmem:[#allocation3 + $0x38] sm:$0x1]
        %v527 = vld [vmem:[#allocation3 + $0x3c] sm:$0xf]
        %v528 = vld [vmem:[#allocation3 + $0x40] sm:$0xf]
        %v529 = vld [vmem:[#allocation3 + $0x44] sm:$0x1]
        %v530 = vld [vmem:[#allocation3 + $0x48] sm:$0xf]
        %v531 = vld [vmem:[#allocation3 + $0x4c] sm:$0xf]
        %v532 = vld [vmem:[#allocation3 + $0x50] sm:$0x1]
        %v533 = vld [vmem:[#allocation3 + $0x54] sm:$0xf]
        %v534 = vld [vmem:[#allocation3 + $0x58] sm:$0xf]
        %v535 = vld [vmem:[#allocation3 + $0x5c] sm:$0x1]
        %v536 = vld [vmem:[#allocation3 + $0x60] sm:$0xf]
        %v537 = vld [vmem:[#allocation3 + $0x64] sm:$0xf]
        %v538 = vld [vmem:[#allocation3 + $0x68] sm:$0x1]
        %v539 = vld [vmem:[#allocation3 + $0x6c] sm:$0xf]
        %v540 = vld [vmem:[#allocation3 + $0x70] sm:$0xf]
        %v541 = vld [vmem:[#allocation3 + $0x74] sm:$0x1]
        %v542 = vld [vmem:[#allocation3 + $0x78] sm:$0xf]
        %v543 = vld [vmem:[#allocation3 + $0x7c] sm:$0xf]
        %v544 = vld [vmem:[#allocation3 + $0x80] sm:$0x1]
        %v545 = vld [vmem:[#allocation3 + $0x84] sm:$0xf]
        %v546 = vld [vmem:[#allocation3 + $0x88] sm:$0xf]
        %v547 = vld [vmem:[#allocation3 + $0x8c] sm:$0x1]
        %v548 = vld [vmem:[#allocation3 + $0x90] sm:$0xf]
        %v549 = vld [vmem:[#allocation3 + $0x94] sm:$0xf]
        %v550 = vld [vmem:[#allocation3 + $0x98] sm:$0x1]
        %v551 = vld [vmem:[#allocation3 + $0x9c] sm:$0xf]
        %v552 = vld [vmem:[#allocation3 + $0xa0] sm:$0xf]
        %v553 = vld [vmem:[#allocation3 + $0xa4] sm:$0x1]
        %v554 = vld [vmem:[#allocation3 + $0xa8] sm:$0xf]
        %v555 = vld [vmem:[#allocation3 + $0xac] sm:$0xf]
        %v556 = vld [vmem:[#allocation3 + $0xb0] sm:$0x1]
        %v557 = vld [vmem:[#allocation3 + $0xb4] sm:$0xf]
        %v558 = vld [vmem:[#allocation3 + $0xb8] sm:$0xf]
        %v559 = vld [vmem:[#allocation3 + $0xbc] sm:$0x1]
        %v560 = vld [vmem:[#allocation3 + $0xc0] sm:$0xf]
        %v561 = vld [vmem:[#allocation3 + $0xc4] sm:$0xf]
        %v562 = vld [vmem:[#allocation3 + $0xc8] sm:$0x1]
        %v563 = vld [vmem:[#allocation5] sm:$0xf]
        %v564 = vld [vmem:[#allocation5 + $0x4] sm:$0xf]
        %v565 = vld [vmem:[#allocation5 + $0x8] sm:$0x1]
        %v566 = vld [vmem:[#allocation5 + $0xc] sm:$0xf]
        %v567 = vld [vmem:[#allocation5 + $0x10] sm:$0xf]
        %v568 = vld [vmem:[#allocation5 + $0x14] sm:$0x1]
        %v569 = vld [vmem:[#allocation5 + $0x18] sm:$0xf]
        %v570 = vld [vmem:[#allocation5 + $0x1c] sm:$0xf]
        %v571 = vld [vmem:[#allocation5 + $0x20] sm:$0x1]
        %v572 = vld [vmem:[#allocation5 + $0x24] sm:$0xf]
        %v573 = vld [vmem:[#allocation5 + $0x28] sm:$0xf]
        %v574 = vld [vmem:[#allocation5 + $0x2c] sm:$0x1]
        %v575 = vld [vmem:[#allocation5 + $0x30] sm:$0xf]
        %v576 = vld [vmem:[#allocation5 + $0x34] sm:$0xf]
        %v577 = vld [vmem:[#allocation5 + $0x38] sm:$0x1]
        %v578 = vld [vmem:[#allocation5 + $0x3c] sm:$0xf]
        %v579 = vld [vmem:[#allocation5 + $0x40] sm:$0xf]
        %v580 = vld [vmem:[#allocation5 + $0x44] sm:$0x1]
        %v581 = vld [vmem:[#allocation5 + $0x48] sm:$0xf]
        %v582 = vld [vmem:[#allocation5 + $0x4c] sm:$0xf]
        %v583 = vld [vmem:[#allocation5 + $0x50] sm:$0x1]
        %v584 = vld [vmem:[#allocation5 + $0x54] sm:$0xf]
        %v585 = vld [vmem:[#allocation5 + $0x58] sm:$0xf]
        %v586 = vld [vmem:[#allocation5 + $0x5c] sm:$0x1]
        %v587 = vld [vmem:[#allocation5 + $0x60] sm:$0xf]
        %v588 = vld [vmem:[#allocation5 + $0x64] sm:$0xf]
        %v589 = vld [vmem:[#allocation5 + $0x68] sm:$0x1]
        %v590 = vld [vmem:[#allocation5 + $0x6c] sm:$0xf]
        %v591 = vld [vmem:[#allocation5 + $0x70] sm:$0xf]
        %v592 = vld [vmem:[#allocation5 + $0x74] sm:$0x1]
        %v593 = vld [vmem:[#allocation5 + $0x78] sm:$0xf]
        %v594 = vld [vmem:[#allocation5 + $0x7c] sm:$0xf]
        %v595 = vld [vmem:[#allocation5 + $0x80] sm:$0x1]
        %v596 = vld [vmem:[#allocation5 + $0x84] sm:$0xf]
        %v597 = vld [vmem:[#allocation5 + $0x88] sm:$0xf]
        %v598 = vld [vmem:[#allocation5 + $0x8c] sm:$0x1]
        %v599 = vld [vmem:[#allocation5 + $0x90] sm:$0xf]
        %v600 = vld [vmem:[#allocation5 + $0x94] sm:$0xf]
        %v601 = vld [vmem:[#allocation5 + $0x98] sm:$0x1]
        %v602 = vld [vmem:[#allocation5 + $0x9c] sm:$0xf]
        %v603 = vld [vmem:[#allocation5 + $0xa0] sm:$0xf]
        %v604 = vld [vmem:[#allocation5 + $0xa4] sm:$0x1]
        %v605 = vld [vmem:[#allocation5 + $0xa8] sm:$0xf]
        %v606 = vld [vmem:[#allocation5 + $0xac] sm:$0xf]
        %v607 = vld [vmem:[#allocation5 + $0xb0] sm:$0x1]
        %v608 = vld [vmem:[#allocation5 + $0xb4] sm:$0xf]
        %v609 = vld [vmem:[#allocation5 + $0xb8] sm:$0xf]
        %v610 = vld [vmem:[#allocation5 + $0xbc] sm:$0x1]
        %v611 = vld [vmem:[#allocation5 + $0xc0] sm:$0xf]
        %v612 = vld [vmem:[#allocation5 + $0xc4] sm:$0xf]
        %v613 = vld [vmem:[#allocation5 + $0xc8] sm:$0x1]
        %v614 = vpack.c.bf16 %v510, %v509
        %v615 = vpack.c.bf16 %v511, %v511
        %v616 = vpack.c.bf16 %v497, %v493
        %v617 = vpack.c.bf16 %v503, %v503
        %v621 = vcombine.high %v509, %v509
        %v623 = vunpack.c.l.s4 1966171168
        %v624 = vunpack.c.0.s8 %v623
        %v625 = vlaneseq
        %v626 = vshrl.u32 %v625, 7
        %v627 = vsub.s32 %v624, %v626
        %v628 = vrot.slane %v509, %v627
        %v630 = vunpack.c.l.s4 1966171168
        %v631 = vunpack.c.0.s8 %v630
        %v632 = vlaneseq
        %v633 = vshrl.u32 %v632, 7
        %v634 = vsub.s32 %v631, %v633
        %v635 = vrot.slane %v621, %v634
        %v636 = vcombine.high %v628, %v628
        %v637 = vcombine.high %v635, %v635
        %v639 = vunpack.c.l.s4 1966171168
        %v640 = vunpack.c.0.s8 %v639
        %v641 = vlaneseq
        %v642 = vshrl.u32 %v641, 7
        %v643 = vsub.s32 %v640, %v642
        %v644 = vrot.slane %v628, %v643
        %v646 = vunpack.c.l.s4 1966171168
        %v647 = vunpack.c.0.s8 %v646
        %v648 = vlaneseq
        %v649 = vshrl.u32 %v648, 7
        %v650 = vsub.s32 %v647, %v649
        %v651 = vrot.slane %v635, %v650
        %v653 = vunpack.c.l.s4 1966171168
        %v654 = vunpack.c.0.s8 %v653
        %v655 = vlaneseq
        %v656 = vshrl.u32 %v655, 7
        %v657 = vsub.s32 %v654, %v656
        %v658 = vrot.slane %v636, %v657
        %v660 = vunpack.c.l.s4 1966171168
        %v661 = vunpack.c.0.s8 %v660
        %v662 = vlaneseq
        %v663 = vshrl.u32 %v662, 7
        %v664 = vsub.s32 %v661, %v663
        %v665 = vrot.slane %v637, %v664
        %v666 = vcombine.high %v644, %v644
        %v667 = vcombine.high %v651, %v651
        %v668 = vcombine.high %v658, %v658
        %v669 = vcombine.high %v665, %v665
        %v670 = vcombine.high %v510, %v510
        %v672 = vunpack.c.l.s4 1966171168
        %v673 = vunpack.c.0.s8 %v672
        %v674 = vlaneseq
        %v675 = vshrl.u32 %v674, 7
        %v676 = vsub.s32 %v673, %v675
        %v677 = vrot.slane %v510, %v676
        %v679 = vunpack.c.l.s4 1966171168
        %v680 = vunpack.c.0.s8 %v679
        %v681 = vlaneseq
        %v682 = vshrl.u32 %v681, 7
        %v683 = vsub.s32 %v680, %v682
        %v684 = vrot.slane %v670, %v683
        %v685 = vcombine.high %v677, %v677
        %v686 = vcombine.high %v684, %v684
        %v688 = vunpack.c.l.s4 1966171168
        %v689 = vunpack.c.0.s8 %v688
        %v690 = vlaneseq
        %v691 = vshrl.u32 %v690, 7
        %v692 = vsub.s32 %v689, %v691
        %v693 = vrot.slane %v677, %v692
        %v695 = vunpack.c.l.s4 1966171168
        %v696 = vunpack.c.0.s8 %v695
        %v697 = vlaneseq
        %v698 = vshrl.u32 %v697, 7
        %v699 = vsub.s32 %v696, %v698
        %v700 = vrot.slane %v684, %v699
        %v702 = vunpack.c.l.s4 1966171168
        %v703 = vunpack.c.0.s8 %v702
        %v704 = vlaneseq
        %v705 = vshrl.u32 %v704, 7
        %v706 = vsub.s32 %v703, %v705
        %v707 = vrot.slane %v685, %v706
        %v709 = vunpack.c.l.s4 1966171168
        %v710 = vunpack.c.0.s8 %v709
        %v711 = vlaneseq
        %v712 = vshrl.u32 %v711, 7
        %v713 = vsub.s32 %v710, %v712
        %v714 = vrot.slane %v686, %v713
        %v715 = vcombine.high %v693, %v693
        %v716 = vcombine.high %v700, %v700
        %v717 = vcombine.high %v707, %v707
        %v718 = vcombine.high %v714, %v714
        %v720 = vunpack.c.l.s4 1966171168
        %v721 = vunpack.c.0.s8 %v720
        %v722 = vlaneseq
        %v723 = vshrl.u32 %v722, 7
        %v724 = vsub.s32 %v721, %v723
        %v725 = vrot.slane %v511, %v724
        %v727 = vunpack.c.l.s4 1966171168
        %v728 = vunpack.c.0.s8 %v727
        %v729 = vlaneseq
        %v730 = vshrl.u32 %v729, 7
        %v731 = vsub.s32 %v728, %v730
        %v732 = vrot.slane %v725, %v731
        %v733 = vunpack.c.l.bf16 %v512
        %v734 = vunpack.c.l.bf16 %v513
        %v735 = vunpack.c.l.bf16 %v514
        %v736 = vunpack.c.l.bf16 %v515
        %v737 = vunpack.c.l.bf16 %v516
        %v738 = vunpack.c.l.bf16 %v517
        %v739 = vunpack.c.l.bf16 %v518
        %v740 = vunpack.c.l.bf16 %v519
        %v741 = vunpack.c.l.bf16 %v520
        %v742 = vunpack.c.l.bf16 %v521
        %v743 = vunpack.c.l.bf16 %v522
        %v744 = vunpack.c.l.bf16 %v523
        %v745 = vunpack.c.l.bf16 %v524
        %v746 = vunpack.c.l.bf16 %v525
        %v747 = vunpack.c.l.bf16 %v526
        %v748 = vunpack.c.l.bf16 %v527
        %v749 = vunpack.c.l.bf16 %v528
        %v750 = vunpack.c.l.bf16 %v529
        %v751 = vunpack.c.l.bf16 %v530
        %v752 = vunpack.c.l.bf16 %v531
        %v753 = vunpack.c.l.bf16 %v532
        %v754 = vunpack.c.l.bf16 %v533
        %v755 = vunpack.c.l.bf16 %v534
        %v756 = vunpack.c.l.bf16 %v535
        %v757 = vunpack.c.l.bf16 %v536
        %v758 = vunpack.c.l.bf16 %v537
        %v759 = vunpack.c.l.bf16 %v538
        %v760 = vunpack.c.l.bf16 %v539
        %v761 = vunpack.c.l.bf16 %v540
        %v762 = vunpack.c.l.bf16 %v541
        %v763 = vunpack.c.l.bf16 %v542
        %v764 = vunpack.c.l.bf16 %v543
        %v765 = vunpack.c.l.bf16 %v544
        %v766 = vunpack.c.l.bf16 %v545
        %v767 = vunpack.c.l.bf16 %v546
        %v768 = vunpack.c.l.bf16 %v547
        %v769 = vunpack.c.l.bf16 %v548
        %v770 = vunpack.c.l.bf16 %v549
        %v771 = vunpack.c.l.bf16 %v550
        %v772 = vunpack.c.l.bf16 %v551
        %v773 = vunpack.c.l.bf16 %v552
        %v774 = vunpack.c.l.bf16 %v553
        %v775 = vunpack.c.l.bf16 %v554
        %v776 = vunpack.c.l.bf16 %v555
        %v777 = vunpack.c.l.bf16 %v556
        %v778 = vunpack.c.l.bf16 %v557
        %v779 = vunpack.c.l.bf16 %v558
        %v780 = vunpack.c.l.bf16 %v559
        %v781 = vunpack.c.l.bf16 %v560
        %v782 = vunpack.c.l.bf16 %v561
        %v783 = vunpack.c.l.bf16 %v562
        %v784 = vlaneseq
        %v785 = vshrl.u32 %v784, 7
        %v786 = vsub.s32 0, %v785
        %v787 = vrot.slane %v644, %v786
        %v788 = vlaneseq
        %v789 = vshrl.u32 %v788, 7
        %v790 = vsub.s32 0, %v789
        %v791 = vrot.slane %v658, %v790
        %v792 = vlaneseq
        %v793 = vshrl.u32 %v792, 7
        %v794 = vsub.s32 0, %v793
        %v795 = vrot.slane %v666, %v794
        %v796 = vlaneseq
        %v797 = vshrl.u32 %v796, 7
        %v798 = vsub.s32 0, %v797
        %v799 = vrot.slane %v668, %v798
        %v800 = vlaneseq
        %v801 = vshrl.u32 %v800, 7
        %v802 = vsub.s32 0, %v801
        %v803 = vrot.slane %v651, %v802
        %v804 = vlaneseq
        %v805 = vshrl.u32 %v804, 7
        %v806 = vsub.s32 0, %v805
        %v807 = vrot.slane %v665, %v806
        %v808 = vlaneseq
        %v809 = vshrl.u32 %v808, 7
        %v810 = vsub.s32 0, %v809
        %v811 = vrot.slane %v667, %v810
        %v812 = vlaneseq
        %v813 = vshrl.u32 %v812, 7
        %v814 = vsub.s32 0, %v813
        %v815 = vrot.slane %v669, %v814
        %v816 = vlaneseq
        %v817 = vshrl.u32 %v816, 7
        %v818 = vsub.s32 0, %v817
        %v819 = vrot.slane %v693, %v818
        %v820 = vlaneseq
        %v821 = vshrl.u32 %v820, 7
        %v822 = vsub.s32 0, %v821
        %v823 = vrot.slane %v707, %v822
        %v824 = vlaneseq
        %v825 = vshrl.u32 %v824, 7
        %v826 = vsub.s32 0, %v825
        %v827 = vrot.slane %v715, %v826
        %v828 = vlaneseq
        %v829 = vshrl.u32 %v828, 7
        %v830 = vsub.s32 0, %v829
        %v831 = vrot.slane %v717, %v830
        %v832 = vlaneseq
        %v833 = vshrl.u32 %v832, 7
        %v834 = vsub.s32 0, %v833
        %v835 = vrot.slane %v700, %v834
        %v836 = vlaneseq
        %v837 = vshrl.u32 %v836, 7
        %v838 = vsub.s32 0, %v837
        %v839 = vrot.slane %v714, %v838
        %v840 = vlaneseq
        %v841 = vshrl.u32 %v840, 7
        %v842 = vsub.s32 0, %v841
        %v843 = vrot.slane %v716, %v842
        %v844 = vlaneseq
        %v845 = vshrl.u32 %v844, 7
        %v846 = vsub.s32 0, %v845
        %v847 = vrot.slane %v718, %v846
        %v848 = vlaneseq
        %v849 = vshrl.u32 %v848, 7
        %v850 = vsub.s32 0, %v849
        %v851 = vrot.slane %v732, %v850
        %v869 = vmul.f32 %v733, %v787
        %v870 = vmul.f32 %v734, %v787
        %v871 = vmul.f32 %v735, %v787
        %v872 = vmul.f32 %v736, %v791
        %v873 = vmul.f32 %v737, %v791
        %v874 = vmul.f32 %v738, %v791
        %v875 = vmul.f32 %v739, %v795
        %v876 = vmul.f32 %v740, %v795
        %v877 = vmul.f32 %v741, %v795
        %v878 = vmul.f32 %v742, %v799
        %v879 = vmul.f32 %v743, %v799
        %v880 = vmul.f32 %v744, %v799
        %v881 = vmul.f32 %v745, %v803
        %v882 = vmul.f32 %v746, %v803
        %v883 = vmul.f32 %v747, %v803
        %v884 = vmul.f32 %v748, %v807
        %v885 = vmul.f32 %v749, %v807
        %v886 = vmul.f32 %v750, %v807
        %v887 = vmul.f32 %v751, %v811
        %v888 = vmul.f32 %v752, %v811
        %v889 = vmul.f32 %v753, %v811
        %v890 = vmul.f32 %v754, %v815
        %v891 = vmul.f32 %v755, %v815
        %v892 = vmul.f32 %v756, %v815
        %v893 = vmul.f32 %v757, %v819
        %v894 = vmul.f32 %v758, %v819
        %v895 = vmul.f32 %v759, %v819
        %v896 = vmul.f32 %v760, %v823
        %v897 = vmul.f32 %v761, %v823
        %v898 = vmul.f32 %v762, %v823
        %v899 = vmul.f32 %v763, %v827
        %v900 = vmul.f32 %v764, %v827
        %v901 = vmul.f32 %v765, %v827
        %v902 = vmul.f32 %v766, %v831
        %v903 = vmul.f32 %v767, %v831
        %v904 = vmul.f32 %v768, %v831
        %v905 = vmul.f32 %v769, %v835
        %v906 = vmul.f32 %v770, %v835
        %v907 = vmul.f32 %v771, %v835
        %v908 = vmul.f32 %v772, %v839
        %v909 = vmul.f32 %v773, %v839
        %v910 = vmul.f32 %v774, %v839
        %v911 = vmul.f32 %v775, %v843
        %v912 = vmul.f32 %v776, %v843
        %v913 = vmul.f32 %v777, %v843
        %v914 = vmul.f32 %v778, %v847
        %v915 = vmul.f32 %v779, %v847
        %v916 = vmul.f32 %v780, %v847
        %v917 = vmul.f32 %v781, %v851
        %v918 = vmul.f32 %v782, %v851
        %v919 = vmul.f32 %v783, %v851
        %vm920 = vcmask 261120
        %v921 = vsel %vm920, %v869, 0.0
        %922 = vadd.xlane.f32.xlu0 %v921
        %v923 = vpop.xlane.xlu0 %922
        %v924 = vsel %vm920, %v870, 0.0
        %925 = vadd.xlane.f32.xlu0 %v924
        %v926 = vpop.xlane.xlu0 %925
        %vm927 = vcmask 253952
        %v928 = vsel %vm927, %v871, 0.0
        %929 = vadd.xlane.f32.xlu0 %v928
        %v930 = vpop.xlane.xlu0 %929
        %v931 = vsel %vm920, %v872, 0.0
        %932 = vadd.xlane.f32.xlu0 %v931
        %v933 = vpop.xlane.xlu0 %932
        %v934 = vsel %vm920, %v873, 0.0
        %935 = vadd.xlane.f32.xlu0 %v934
        %v936 = vpop.xlane.xlu0 %935
        %v937 = vsel %vm927, %v874, 0.0
        %938 = vadd.xlane.f32.xlu0 %v937
        %v939 = vpop.xlane.xlu0 %938
        %v940 = vsel %vm920, %v875, 0.0
        %941 = vadd.xlane.f32.xlu0 %v940
        %v942 = vpop.xlane.xlu0 %941
        %v943 = vsel %vm920, %v876, 0.0
        %944 = vadd.xlane.f32.xlu0 %v943
        %v945 = vpop.xlane.xlu0 %944
        %v946 = vsel %vm927, %v877, 0.0
        %947 = vadd.xlane.f32.xlu0 %v946
        %v948 = vpop.xlane.xlu0 %947
        %v949 = vsel %vm920, %v878, 0.0
        %950 = vadd.xlane.f32.xlu0 %v949
        %v951 = vpop.xlane.xlu0 %950
        %v952 = vsel %vm920, %v879, 0.0
        %953 = vadd.xlane.f32.xlu0 %v952
        %v954 = vpop.xlane.xlu0 %953
        %v955 = vsel %vm927, %v880, 0.0
        %956 = vadd.xlane.f32.xlu0 %v955
        %v957 = vpop.xlane.xlu0 %956
        %v958 = vsel %vm920, %v881, 0.0
        %959 = vadd.xlane.f32.xlu0 %v958
        %v960 = vpop.xlane.xlu0 %959
        %v961 = vsel %vm920, %v882, 0.0
        %962 = vadd.xlane.f32.xlu0 %v961
        %v963 = vpop.xlane.xlu0 %962
        %v964 = vsel %vm927, %v883, 0.0
        %965 = vadd.xlane.f32.xlu0 %v964
        %v966 = vpop.xlane.xlu0 %965
        %v967 = vsel %vm920, %v884, 0.0
        %968 = vadd.xlane.f32.xlu0 %v967
        %v969 = vpop.xlane.xlu0 %968
        %v970 = vsel %vm920, %v885, 0.0
        %971 = vadd.xlane.f32.xlu0 %v970
        %v972 = vpop.xlane.xlu0 %971
        %v973 = vsel %vm927, %v886, 0.0
        %974 = vadd.xlane.f32.xlu0 %v973
        %v975 = vpop.xlane.xlu0 %974
        %v976 = vsel %vm920, %v887, 0.0
        %977 = vadd.xlane.f32.xlu0 %v976
        %v978 = vpop.xlane.xlu0 %977
        %v979 = vsel %vm920, %v888, 0.0
        %980 = vadd.xlane.f32.xlu0 %v979
        %v981 = vpop.xlane.xlu0 %980
        %v982 = vsel %vm927, %v889, 0.0
        %983 = vadd.xlane.f32.xlu0 %v982
        %v984 = vpop.xlane.xlu0 %983
        %v985 = vsel %vm920, %v890, 0.0
        %986 = vadd.xlane.f32.xlu0 %v985
        %v987 = vpop.xlane.xlu0 %986
        %v988 = vsel %vm920, %v891, 0.0
        %989 = vadd.xlane.f32.xlu0 %v988
        %v990 = vpop.xlane.xlu0 %989
        %v991 = vsel %vm927, %v892, 0.0
        %992 = vadd.xlane.f32.xlu0 %v991
        %v993 = vpop.xlane.xlu0 %992
        %v994 = vsel %vm920, %v893, 0.0
        %995 = vadd.xlane.f32.xlu0 %v994
        %v996 = vpop.xlane.xlu0 %995
        %v997 = vsel %vm920, %v894, 0.0
        %998 = vadd.xlane.f32.xlu0 %v997
        %v999 = vpop.xlane.xlu0 %998
        %v1000 = vsel %vm927, %v895, 0.0
        %1001 = vadd.xlane.f32.xlu0 %v1000
        %v1002 = vpop.xlane.xlu0 %1001
        %v1003 = vsel %vm920, %v896, 0.0
        %1004 = vadd.xlane.f32.xlu0 %v1003
        %v1005 = vpop.xlane.xlu0 %1004
        %v1006 = vsel %vm920, %v897, 0.0
        %1007 = vadd.xlane.f32.xlu0 %v1006
        %v1008 = vpop.xlane.xlu0 %1007
        %v1009 = vsel %vm927, %v898, 0.0
        %1010 = vadd.xlane.f32.xlu0 %v1009
        %v1011 = vpop.xlane.xlu0 %1010
        %v1012 = vsel %vm920, %v899, 0.0
        %1013 = vadd.xlane.f32.xlu0 %v1012
        %v1014 = vpop.xlane.xlu0 %1013
        %v1015 = vsel %vm920, %v900, 0.0
        %1016 = vadd.xlane.f32.xlu0 %v1015
        %v1017 = vpop.xlane.xlu0 %1016
        %v1018 = vsel %vm927, %v901, 0.0
        %1019 = vadd.xlane.f32.xlu0 %v1018
        %v1020 = vpop.xlane.xlu0 %1019
        %v1021 = vsel %vm920, %v902, 0.0
        %1022 = vadd.xlane.f32.xlu0 %v1021
        %v1023 = vpop.xlane.xlu0 %1022
        %v1024 = vsel %vm920, %v903, 0.0
        %1025 = vadd.xlane.f32.xlu0 %v1024
        %v1026 = vpop.xlane.xlu0 %1025
        %v1027 = vsel %vm927, %v904, 0.0
        %1028 = vadd.xlane.f32.xlu0 %v1027
        %v1029 = vpop.xlane.xlu0 %1028
        %v1030 = vsel %vm920, %v905, 0.0
        %1031 = vadd.xlane.f32.xlu0 %v1030
        %v1032 = vpop.xlane.xlu0 %1031
        %v1033 = vsel %vm920, %v906, 0.0
        %1034 = vadd.xlane.f32.xlu0 %v1033
        %v1035 = vpop.xlane.xlu0 %1034
        %v1036 = vsel %vm927, %v907, 0.0
        %1037 = vadd.xlane.f32.xlu0 %v1036
        %v1038 = vpop.xlane.xlu0 %1037
        %v1039 = vsel %vm920, %v908, 0.0
        %1040 = vadd.xlane.f32.xlu0 %v1039
        %v1041 = vpop.xlane.xlu0 %1040
        %v1042 = vsel %vm920, %v909, 0.0
        %1043 = vadd.xlane.f32.xlu0 %v1042
        %v1044 = vpop.xlane.xlu0 %1043
        %v1045 = vsel %vm927, %v910, 0.0
        %1046 = vadd.xlane.f32.xlu0 %v1045
        %v1047 = vpop.xlane.xlu0 %1046
        %v1048 = vsel %vm920, %v911, 0.0
        %1049 = vadd.xlane.f32.xlu0 %v1048
        %v1050 = vpop.xlane.xlu0 %1049
        %v1051 = vsel %vm920, %v912, 0.0
        %1052 = vadd.xlane.f32.xlu0 %v1051
        %v1053 = vpop.xlane.xlu0 %1052
        %v1054 = vsel %vm927, %v913, 0.0
        %1055 = vadd.xlane.f32.xlu0 %v1054
        %v1056 = vpop.xlane.xlu0 %1055
        %v1057 = vsel %vm920, %v914, 0.0
        %1058 = vadd.xlane.f32.xlu0 %v1057
        %v1059 = vpop.xlane.xlu0 %1058
        %v1060 = vsel %vm920, %v915, 0.0
        %1061 = vadd.xlane.f32.xlu0 %v1060
        %v1062 = vpop.xlane.xlu0 %1061
        %v1063 = vsel %vm927, %v916, 0.0
        %1064 = vadd.xlane.f32.xlu0 %v1063
        %v1065 = vpop.xlane.xlu0 %1064
        %v1066 = vsel %vm920, %v917, 0.0
        %1067 = vadd.xlane.f32.xlu0 %v1066
        %v1068 = vpop.xlane.xlu0 %1067
        %v1069 = vsel %vm920, %v918, 0.0
        %1070 = vadd.xlane.f32.xlu0 %v1069
        %v1071 = vpop.xlane.xlu0 %1070
        %v1072 = vsel %vm927, %v919, 0.0
        %1073 = vadd.xlane.f32.xlu0 %v1072
        %v1074 = vpop.xlane.xlu0 %1073
        %1077 = vrot.lane.b32.xlu0 %v616, 64
        %v1078 = vpop.permute.xlu0 %1077
        %1079 = vrot.lane.b32.xlu0 %v617, 64
        %v1080 = vpop.permute.xlu0 %1079
        %v1132 = vlaneseq
        %v1133 = vand.u32 %v1132, 127
        %v1134 = vlaneseq
        %v1135 = vshrl.u32 %v1134, 7
        %v1136 = vsub.s32 %v1133, %v1135
        %v1137 = vrot.slane %v923, %v1136
        %v1138 = vadd.s32 %v1133, 4294967288
        %v1139 = vlaneseq
        %v1140 = vshrl.u32 %v1139, 7
        %v1141 = vsub.s32 %v1138, %v1140
        %v1142 = vrot.slane %v926, %v1141
        %vm1143 = vcmask 130112
        %v1144 = vsel %vm1143, %v1142, %v1137
        %v1145 = vadd.s32 %v1133, 4294967280
        %v1146 = vlaneseq
        %v1147 = vshrl.u32 %v1146, 7
        %v1148 = vsub.s32 %v1145, %v1147
        %v1149 = vrot.slane %v930, %v1148
        %vm1150 = vcmask 195712
        %v1151 = vsel %vm1150, %v1149, %v1144
        %v1152 = vlaneseq
        %v1153 = vshrl.u32 %v1152, 7
        %v1154 = vsub.s32 %v1133, %v1153
        %v1155 = vrot.slane %v933, %v1154
        %v1156 = vlaneseq
        %v1157 = vshrl.u32 %v1156, 7
        %v1158 = vsub.s32 %v1138, %v1157
        %v1159 = vrot.slane %v936, %v1158
        %v1160 = vsel %vm1143, %v1159, %v1155
        %v1161 = vlaneseq
        %v1162 = vshrl.u32 %v1161, 7
        %v1163 = vsub.s32 %v1145, %v1162
        %v1164 = vrot.slane %v939, %v1163
        %v1165 = vsel %vm1150, %v1164, %v1160
        %v1166 = vlaneseq
        %v1167 = vshrl.u32 %v1166, 7
        %v1168 = vsub.s32 %v1133, %v1167
        %v1169 = vrot.slane %v942, %v1168
        %v1170 = vlaneseq
        %v1171 = vshrl.u32 %v1170, 7
        %v1172 = vsub.s32 %v1138, %v1171
        %v1173 = vrot.slane %v945, %v1172
        %v1174 = vsel %vm1143, %v1173, %v1169
        %v1175 = vlaneseq
        %v1176 = vshrl.u32 %v1175, 7
        %v1177 = vsub.s32 %v1145, %v1176
        %v1178 = vrot.slane %v948, %v1177
        %v1179 = vsel %vm1150, %v1178, %v1174
        %v1180 = vlaneseq
        %v1181 = vshrl.u32 %v1180, 7
        %v1182 = vsub.s32 %v1133, %v1181
        %v1183 = vrot.slane %v951, %v1182
        %v1184 = vlaneseq
        %v1185 = vshrl.u32 %v1184, 7
        %v1186 = vsub.s32 %v1138, %v1185
        %v1187 = vrot.slane %v954, %v1186
        %v1188 = vsel %vm1143, %v1187, %v1183
        %v1189 = vlaneseq
        %v1190 = vshrl.u32 %v1189, 7
        %v1191 = vsub.s32 %v1145, %v1190
        %v1192 = vrot.slane %v957, %v1191
        %v1193 = vsel %vm1150, %v1192, %v1188
        %v1194 = vlaneseq
        %v1195 = vshrl.u32 %v1194, 7
        %v1196 = vsub.s32 %v1133, %v1195
        %v1197 = vrot.slane %v960, %v1196
        %v1198 = vlaneseq
        %v1199 = vshrl.u32 %v1198, 7
        %v1200 = vsub.s32 %v1138, %v1199
        %v1201 = vrot.slane %v963, %v1200
        %v1202 = vsel %vm1143, %v1201, %v1197
        %v1203 = vlaneseq
        %v1204 = vshrl.u32 %v1203, 7
        %v1205 = vsub.s32 %v1145, %v1204
        %v1206 = vrot.slane %v966, %v1205
        %v1207 = vsel %vm1150, %v1206, %v1202
        %v1208 = vlaneseq
        %v1209 = vshrl.u32 %v1208, 7
        %v1210 = vsub.s32 %v1133, %v1209
        %v1211 = vrot.slane %v969, %v1210
        %v1212 = vlaneseq
        %v1213 = vshrl.u32 %v1212, 7
        %v1214 = vsub.s32 %v1138, %v1213
        %v1215 = vrot.slane %v972, %v1214
        %v1216 = vsel %vm1143, %v1215, %v1211
        %v1217 = vlaneseq
        %v1218 = vshrl.u32 %v1217, 7
        %v1219 = vsub.s32 %v1145, %v1218
        %v1220 = vrot.slane %v975, %v1219
        %v1221 = vsel %vm1150, %v1220, %v1216
        %v1222 = vlaneseq
        %v1223 = vshrl.u32 %v1222, 7
        %v1224 = vsub.s32 %v1133, %v1223
        %v1225 = vrot.slane %v978, %v1224
        %v1226 = vlaneseq
        %v1227 = vshrl.u32 %v1226, 7
        %v1228 = vsub.s32 %v1138, %v1227
        %v1229 = vrot.slane %v981, %v1228
        %v1230 = vsel %vm1143, %v1229, %v1225
        %v1231 = vlaneseq
        %v1232 = vshrl.u32 %v1231, 7
        %v1233 = vsub.s32 %v1145, %v1232
        %v1234 = vrot.slane %v984, %v1233
        %v1235 = vsel %vm1150, %v1234, %v1230
        %v1236 = vlaneseq
        %v1237 = vshrl.u32 %v1236, 7
        %v1238 = vsub.s32 %v1133, %v1237
        %v1239 = vrot.slane %v987, %v1238
        %v1240 = vlaneseq
        %v1241 = vshrl.u32 %v1240, 7
        %v1242 = vsub.s32 %v1138, %v1241
        %v1243 = vrot.slane %v990, %v1242
        %v1244 = vsel %vm1143, %v1243, %v1239
        %v1245 = vlaneseq
        %v1246 = vshrl.u32 %v1245, 7
        %v1247 = vsub.s32 %v1145, %v1246
        %v1248 = vrot.slane %v993, %v1247
        %v1249 = vsel %vm1150, %v1248, %v1244
        %v1250 = vlaneseq
        %v1251 = vshrl.u32 %v1250, 7
        %v1252 = vsub.s32 %v1133, %v1251
        %v1253 = vrot.slane %v996, %v1252
        %v1254 = vlaneseq
        %v1255 = vshrl.u32 %v1254, 7
        %v1256 = vsub.s32 %v1138, %v1255
        %v1257 = vrot.slane %v999, %v1256
        %v1258 = vsel %vm1143, %v1257, %v1253
        %v1259 = vlaneseq
        %v1260 = vshrl.u32 %v1259, 7
        %v1261 = vsub.s32 %v1145, %v1260
        %v1262 = vrot.slane %v1002, %v1261
        %v1263 = vsel %vm1150, %v1262, %v1258
        %v1264 = vlaneseq
        %v1265 = vshrl.u32 %v1264, 7
        %v1266 = vsub.s32 %v1133, %v1265
        %v1267 = vrot.slane %v1005, %v1266
        %v1268 = vlaneseq
        %v1269 = vshrl.u32 %v1268, 7
        %v1270 = vsub.s32 %v1138, %v1269
        %v1271 = vrot.slane %v1008, %v1270
        %v1272 = vsel %vm1143, %v1271, %v1267
        %v1273 = vlaneseq
        %v1274 = vshrl.u32 %v1273, 7
        %v1275 = vsub.s32 %v1145, %v1274
        %v1276 = vrot.slane %v1011, %v1275
        %v1277 = vsel %vm1150, %v1276, %v1272
        %v1278 = vlaneseq
        %v1279 = vshrl.u32 %v1278, 7
        %v1280 = vsub.s32 %v1133, %v1279
        %v1281 = vrot.slane %v1014, %v1280
        %v1282 = vlaneseq
        %v1283 = vshrl.u32 %v1282, 7
        %v1284 = vsub.s32 %v1138, %v1283
        %v1285 = vrot.slane %v1017, %v1284
        %v1286 = vsel %vm1143, %v1285, %v1281
        %v1287 = vlaneseq
        %v1288 = vshrl.u32 %v1287, 7
        %v1289 = vsub.s32 %v1145, %v1288
        %v1290 = vrot.slane %v1020, %v1289
        %v1291 = vsel %vm1150, %v1290, %v1286
        %v1292 = vlaneseq
        %v1293 = vshrl.u32 %v1292, 7
        %v1294 = vsub.s32 %v1133, %v1293
        %v1295 = vrot.slane %v1023, %v1294
        %v1296 = vlaneseq
        %v1297 = vshrl.u32 %v1296, 7
        %v1298 = vsub.s32 %v1138, %v1297
        %v1299 = vrot.slane %v1026, %v1298
        %v1300 = vsel %vm1143, %v1299, %v1295
        %v1301 = vlaneseq
        %v1302 = vshrl.u32 %v1301, 7
        %v1303 = vsub.s32 %v1145, %v1302
        %v1304 = vrot.slane %v1029, %v1303
        %v1305 = vsel %vm1150, %v1304, %v1300
        %v1306 = vlaneseq
        %v1307 = vshrl.u32 %v1306, 7
        %v1308 = vsub.s32 %v1133, %v1307
        %v1309 = vrot.slane %v1032, %v1308
        %v1310 = vlaneseq
        %v1311 = vshrl.u32 %v1310, 7
        %v1312 = vsub.s32 %v1138, %v1311
        %v1313 = vrot.slane %v1035, %v1312
        %v1314 = vsel %vm1143, %v1313, %v1309
        %v1315 = vlaneseq
        %v1316 = vshrl.u32 %v1315, 7
        %v1317 = vsub.s32 %v1145, %v1316
        %v1318 = vrot.slane %v1038, %v1317
        %v1319 = vsel %vm1150, %v1318, %v1314
        %v1320 = vlaneseq
        %v1321 = vshrl.u32 %v1320, 7
        %v1322 = vsub.s32 %v1133, %v1321
        %v1323 = vrot.slane %v1041, %v1322
        %v1324 = vlaneseq
        %v1325 = vshrl.u32 %v1324, 7
        %v1326 = vsub.s32 %v1138, %v1325
        %v1327 = vrot.slane %v1044, %v1326
        %v1328 = vsel %vm1143, %v1327, %v1323
        %v1329 = vlaneseq
        %v1330 = vshrl.u32 %v1329, 7
        %v1331 = vsub.s32 %v1145, %v1330
        %v1332 = vrot.slane %v1047, %v1331
        %v1333 = vsel %vm1150, %v1332, %v1328
        %v1334 = vlaneseq
        %v1335 = vshrl.u32 %v1334, 7
        %v1336 = vsub.s32 %v1133, %v1335
        %v1337 = vrot.slane %v1050, %v1336
        %v1338 = vlaneseq
        %v1339 = vshrl.u32 %v1338, 7
        %v1340 = vsub.s32 %v1138, %v1339
        %v1341 = vrot.slane %v1053, %v1340
        %v1342 = vsel %vm1143, %v1341, %v1337
        %v1343 = vlaneseq
        %v1344 = vshrl.u32 %v1343, 7
        %v1345 = vsub.s32 %v1145, %v1344
        %v1346 = vrot.slane %v1056, %v1345
        %v1347 = vsel %vm1150, %v1346, %v1342
        %v1348 = vlaneseq
        %v1349 = vshrl.u32 %v1348, 7
        %v1350 = vsub.s32 %v1133, %v1349
        %v1351 = vrot.slane %v1059, %v1350
        %v1352 = vlaneseq
        %v1353 = vshrl.u32 %v1352, 7
        %v1354 = vsub.s32 %v1138, %v1353
        %v1355 = vrot.slane %v1062, %v1354
        %v1356 = vsel %vm1143, %v1355, %v1351
        %v1357 = vlaneseq
        %v1358 = vshrl.u32 %v1357, 7
        %v1359 = vsub.s32 %v1145, %v1358
        %v1360 = vrot.slane %v1065, %v1359
        %v1361 = vsel %vm1150, %v1360, %v1356
        %v1362 = vlaneseq
        %v1363 = vshrl.u32 %v1362, 7
        %v1364 = vsub.s32 %v1133, %v1363
        %v1365 = vrot.slane %v1068, %v1364
        %v1366 = vlaneseq
        %v1367 = vshrl.u32 %v1366, 7
        %v1368 = vsub.s32 %v1138, %v1367
        %v1369 = vrot.slane %v1071, %v1368
        %v1370 = vsel %vm1143, %v1369, %v1365
        %v1371 = vlaneseq
        %v1372 = vshrl.u32 %v1371, 7
        %v1373 = vsub.s32 %v1145, %v1372
        %v1374 = vrot.slane %v1074, %v1373
        %v1375 = vsel %vm1150, %v1374, %v1370
        %vm1376 = vcmask 1041409
        %v1377 = vsel %vm1376, %v1165, %v1151
        %vm1378 = vcmask 1042434
        %v1379 = vsel %vm1378, %v1179, %v1377
        %vm1380 = vcmask 1043459
        %v1381 = vsel %vm1380, %v1193, %v1379
        %vm1382 = vcmask 1044484
        %v1383 = vsel %vm1382, %v1207, %v1381
        %vm1384 = vcmask 1045509
        %v1385 = vsel %vm1384, %v1221, %v1383
        %vm1386 = vcmask 1046534
        %v1387 = vsel %vm1386, %v1235, %v1385
        %vm1388 = vcmask 1047559
        %v1389 = vsel %vm1388, %v1249, %v1387
        %v1390 = vsel %vm1376, %v1277, %v1263
        %v1391 = vsel %vm1378, %v1291, %v1390
        %v1392 = vsel %vm1380, %v1305, %v1391
        %v1393 = vsel %vm1382, %v1319, %v1392
        %v1394 = vsel %vm1384, %v1333, %v1393
        %v1395 = vsel %vm1386, %v1347, %v1394
        %v1396 = vsel %vm1388, %v1361, %v1395
        %v1401 = vsel %vm920, %v614, 0
        %v1404 = vsel %vm920, %v615, 0
        %v1407 = vsel %vm920, %v1078, 0
        %v1410 = vsel %vm920, %v1080, 0
        %1412 = vmatprep.subr.bf16.mxu0 0
        %1413 = vmatpush1.bf16.xpose.msra.mxu0 0
        %1414 = vmatprep.subr.bf16.mxu0 0
        %1415 = vmatpush1.bf16.xpose.msra.mxu0 0
        %1416 = vmatprep.subr.bf16.mxu0 0
        %1417 = vmatpush1.bf16.xpose.msra.mxu0 0
        %1418 = vmatprep.subr.bf16.mxu0 0
        %1419 = vmatpush1.bf16.xpose.msra.mxu0 0
        %1420 = vmatprep.subr.bf16.mxu0 0
        %1421 = vmatpush1.bf16.xpose.msra.mxu0 0
        %1422 = vmatprep.subr.bf16.mxu0 0
        %1423 = vmatpush1.bf16.xpose.msra.mxu0 0
        %1424 = vmatprep.subr.bf16.mxu0 0
        %1425 = vmatpush1.bf16.xpose.msra.mxu0 %v1410
        %1426 = vmatprep.subr.bf16.mxu0 0
        %1427 = vmatpush1.bf16.xpose.msra.mxu0 %v1407
        %1428 = vmatprep.subr.bf16.mxu0 0
        %1429 = vmatpush2.bf16.xpose.msra.mxu0 0
        %1430 = vmatprep.subr.bf16.mxu0 0
        %1431 = vmatpush2.bf16.xpose.msra.mxu0 0
        %1432 = vmatprep.subr.bf16.mxu0 0
        %1433 = vmatpush2.bf16.xpose.msra.mxu0 0
        %1434 = vmatprep.subr.bf16.mxu0 0
        %1435 = vmatpush2.bf16.xpose.msra.mxu0 0
        %1436 = vmatprep.subr.bf16.mxu0 0
        %1437 = vmatpush2.bf16.xpose.msra.mxu0 0
        %1438 = vmatprep.subr.bf16.mxu0 0
        %1439 = vmatpush2.bf16.xpose.msra.mxu0 0
        %1440 = vmatprep.subr.bf16.mxu0 0
        %1441 = vmatpush2.bf16.xpose.msra.mxu0 0
        %1442 = vmatprep.subr.bf16.mxu0 0
        %1443 = vmatpush2.bf16.xpose.msra.mxu0 0
        %1444 = vmatprep.mubr.bf16.mxu0 0
        %1445 = vmatmul.mubr.bf16.gmra.mxu0 %v1401
        %v1446 = vpop.f32.mrf.mxu0
        %v1447 = vadd.f32 %v1389, %v1446
        %v1448 = vpop.f32.mrf.mxu0
        %v1449 = vpop.f32.mrf.mxu0
        %v1450 = vadd.f32 %v1396, %v1449
        %v1451 = vpop.f32.mrf.mxu0
        %1452 = vmatprep.mubr.bf16.mxu0 0
        %1453 = vmatmul.mubr.bf16.gmra.mxu0 %v1404
        %v1454 = vpop.f32.mrf.mxu0
        %v1455 = vadd.f32 %v1375, %v1454
        %v1456 = vpop.f32.mrf.mxu0
        %v1457 = vpop.f32.mrf.mxu0
        %v1458 = vpop.f32.mrf.mxu0
        %1459 = vdwg.mxu0
        %vm1460 = vcmask 138240
        %v1461 = vsel %vm1460, %v1447, -inf
        %1462 = vmax.xlane.f32.xlu0 %v1461
        %v1463 = vpop.xlane.xlu0 %1462
        %v1464 = vsel %vm1460, %v1450, -inf
        %1465 = vmax.xlane.f32.xlu0 %v1464
        %v1466 = vpop.xlane.xlu0 %1465
        %vm1467 = vcmask 131072
        %v1468 = vsel %vm1467, %v1455, -inf
        %1469 = vmax.xlane.f32.xlu0 %v1468
        %v1470 = vpop.xlane.xlu0 %1469
        %v1471 = vsub.f32 %v1447, %v1463
        %v1472 = vsub.f32 %v1450, %v1466
        %v1473 = vsub.f32 %v1455, %v1470
        %v1474 = vmul.f32 %v1471, 1.442695
        %v1475 = vpow.pop %v1474
        %v1476 = vmul.f32 %v1472, 1.442695
        %v1477 = vpow.pop %v1476
        %v1478 = vmul.f32 %v1473, 1.442695
        %v1479 = vpow.pop %v1478
        %v1480 = vsel %vm1460, %v1475, 0.0
        %1481 = vadd.xlane.f32.xlu0 %v1480
        %v1482 = vpop.xlane.xlu0 %1481
        %v1483 = vsel %vm1460, %v1477, 0.0
        %1484 = vadd.xlane.f32.xlu0 %v1483
        %v1485 = vpop.xlane.xlu0 %1484
        %v1486 = vsel %vm1467, %v1479, 0.0
        %1487 = vadd.xlane.f32.xlu0 %v1486
        %v1488 = vpop.xlane.xlu0 %1487
        %v1489 = vrcp.pop %v1482
        %v1490 = vrcp.pop %v1485
        %v1491 = vrcp.pop %v1488
        %v1492 = vmul.f32 %v1475, %v1489
        %v1493 = vmul.f32 %v1477, %v1490
        %v1494 = vmul.f32 %v1479, %v1491
        %v1495 = vpack.c.bf16 %v1493, %v1492
        %v1496 = vpack.c.bf16 %v1494, %v1494
        %v1497 = vpack.c.bf16 %v499, %v495
        %v1498 = vpack.c.bf16 %v505, %v505
        %v1499 = vlaneseq
        %v1500 = vshrl.u32 %v1499, 7
        %v1501 = vsub.s32 0, %v1500
        %v1502 = vrot.slane %v1492, %v1501
        %1504 = vbcast.lane.b32.xlu0 %v1502, 256
        %v1505 = vpop.permute.xlu0 %1504
        %s1507 = sor.u32 256, 8
        %1508 = vbcast.lane.b32.xlu0 %v1502, %s1507
        %v1509 = vpop.permute.xlu0 %1508
        %s1511 = sor.u32 256, 16
        %1512 = vbcast.lane.b32.xlu0 %v1502, %s1511
        %v1513 = vpop.permute.xlu0 %1512
        %v1514 = vlaneseq
        %v1515 = vshrl.u32 %v1514, 7
        %v1516 = vsub.s32 1, %v1515
        %v1517 = vrot.slane %v1492, %v1516
        %1519 = vbcast.lane.b32.xlu0 %v1517, 256
        %v1520 = vpop.permute.xlu0 %1519
        %s1522 = sor.u32 256, 8
        %1523 = vbcast.lane.b32.xlu0 %v1517, %s1522
        %v1524 = vpop.permute.xlu0 %1523
        %s1526 = sor.u32 256, 16
        %1527 = vbcast.lane.b32.xlu0 %v1517, %s1526
        %v1528 = vpop.permute.xlu0 %1527
        %v1529 = vlaneseq
        %v1530 = vshrl.u32 %v1529, 7
        %v1531 = vsub.s32 2, %v1530
        %v1532 = vrot.slane %v1492, %v1531
        %1534 = vbcast.lane.b32.xlu0 %v1532, 256
        %v1535 = vpop.permute.xlu0 %1534
        %s1537 = sor.u32 256, 8
        %1538 = vbcast.lane.b32.xlu0 %v1532, %s1537
        %v1539 = vpop.permute.xlu0 %1538
        %s1541 = sor.u32 256, 16
        %1542 = vbcast.lane.b32.xlu0 %v1532, %s1541
        %v1543 = vpop.permute.xlu0 %1542
        %v1544 = vlaneseq
        %v1545 = vshrl.u32 %v1544, 7
        %v1546 = vsub.s32 3, %v1545
        %v1547 = vrot.slane %v1492, %v1546
        %1549 = vbcast.lane.b32.xlu0 %v1547, 256
        %v1550 = vpop.permute.xlu0 %1549
        %s1552 = sor.u32 256, 8
        %1553 = vbcast.lane.b32.xlu0 %v1547, %s1552
        %v1554 = vpop.permute.xlu0 %1553
        %s1556 = sor.u32 256, 16
        %1557 = vbcast.lane.b32.xlu0 %v1547, %s1556
        %v1558 = vpop.permute.xlu0 %1557
        %v1559 = vlaneseq
        %v1560 = vshrl.u32 %v1559, 7
        %v1561 = vsub.s32 4, %v1560
        %v1562 = vrot.slane %v1492, %v1561
        %1564 = vbcast.lane.b32.xlu0 %v1562, 256
        %v1565 = vpop.permute.xlu0 %1564
        %s1567 = sor.u32 256, 8
        %1568 = vbcast.lane.b32.xlu0 %v1562, %s1567
        %v1569 = vpop.permute.xlu0 %1568
        %s1571 = sor.u32 256, 16
        %1572 = vbcast.lane.b32.xlu0 %v1562, %s1571
        %v1573 = vpop.permute.xlu0 %1572
        %v1574 = vlaneseq
        %v1575 = vshrl.u32 %v1574, 7
        %v1576 = vsub.s32 5, %v1575
        %v1577 = vrot.slane %v1492, %v1576
        %1579 = vbcast.lane.b32.xlu0 %v1577, 256
        %v1580 = vpop.permute.xlu0 %1579
        %s1582 = sor.u32 256, 8
        %1583 = vbcast.lane.b32.xlu0 %v1577, %s1582
        %v1584 = vpop.permute.xlu0 %1583
        %s1586 = sor.u32 256, 16
        %1587 = vbcast.lane.b32.xlu0 %v1577, %s1586
        %v1588 = vpop.permute.xlu0 %1587
        %v1589 = vlaneseq
        %v1590 = vshrl.u32 %v1589, 7
        %v1591 = vsub.s32 6, %v1590
        %v1592 = vrot.slane %v1492, %v1591
        %1594 = vbcast.lane.b32.xlu0 %v1592, 256
        %v1595 = vpop.permute.xlu0 %1594
        %s1597 = sor.u32 256, 8
        %1598 = vbcast.lane.b32.xlu0 %v1592, %s1597
        %v1599 = vpop.permute.xlu0 %1598
        %s1601 = sor.u32 256, 16
        %1602 = vbcast.lane.b32.xlu0 %v1592, %s1601
        %v1603 = vpop.permute.xlu0 %1602
        %v1604 = vlaneseq
        %v1605 = vshrl.u32 %v1604, 7
        %v1606 = vsub.s32 7, %v1605
        %v1607 = vrot.slane %v1492, %v1606
        %1609 = vbcast.lane.b32.xlu0 %v1607, 256
        %v1610 = vpop.permute.xlu0 %1609
        %s1612 = sor.u32 256, 8
        %1613 = vbcast.lane.b32.xlu0 %v1607, %s1612
        %v1614 = vpop.permute.xlu0 %1613
        %s1616 = sor.u32 256, 16
        %1617 = vbcast.lane.b32.xlu0 %v1607, %s1616
        %v1618 = vpop.permute.xlu0 %1617
        %v1619 = vlaneseq
        %v1620 = vshrl.u32 %v1619, 7
        %v1621 = vsub.s32 0, %v1620
        %v1622 = vrot.slane %v1493, %v1621
        %1624 = vbcast.lane.b32.xlu0 %v1622, 256
        %v1625 = vpop.permute.xlu0 %1624
        %s1627 = sor.u32 256, 8
        %1628 = vbcast.lane.b32.xlu0 %v1622, %s1627
        %v1629 = vpop.permute.xlu0 %1628
        %s1631 = sor.u32 256, 16
        %1632 = vbcast.lane.b32.xlu0 %v1622, %s1631
        %v1633 = vpop.permute.xlu0 %1632
        %v1634 = vlaneseq
        %v1635 = vshrl.u32 %v1634, 7
        %v1636 = vsub.s32 1, %v1635
        %v1637 = vrot.slane %v1493, %v1636
        %1639 = vbcast.lane.b32.xlu0 %v1637, 256
        %v1640 = vpop.permute.xlu0 %1639
        %s1642 = sor.u32 256, 8
        %1643 = vbcast.lane.b32.xlu0 %v1637, %s1642
        %v1644 = vpop.permute.xlu0 %1643
        %s1646 = sor.u32 256, 16
        %1647 = vbcast.lane.b32.xlu0 %v1637, %s1646
        %v1648 = vpop.permute.xlu0 %1647
        %v1649 = vlaneseq
        %v1650 = vshrl.u32 %v1649, 7
        %v1651 = vsub.s32 2, %v1650
        %v1652 = vrot.slane %v1493, %v1651
        %1654 = vbcast.lane.b32.xlu0 %v1652, 256
        %v1655 = vpop.permute.xlu0 %1654
        %s1657 = sor.u32 256, 8
        %1658 = vbcast.lane.b32.xlu0 %v1652, %s1657
        %v1659 = vpop.permute.xlu0 %1658
        %s1661 = sor.u32 256, 16
        %1662 = vbcast.lane.b32.xlu0 %v1652, %s1661
        %v1663 = vpop.permute.xlu0 %1662
        %v1664 = vlaneseq
        %v1665 = vshrl.u32 %v1664, 7
        %v1666 = vsub.s32 3, %v1665
        %v1667 = vrot.slane %v1493, %v1666
        %1669 = vbcast.lane.b32.xlu0 %v1667, 256
        %v1670 = vpop.permute.xlu0 %1669
        %s1672 = sor.u32 256, 8
        %1673 = vbcast.lane.b32.xlu0 %v1667, %s1672
        %v1674 = vpop.permute.xlu0 %1673
        %s1676 = sor.u32 256, 16
        %1677 = vbcast.lane.b32.xlu0 %v1667, %s1676
        %v1678 = vpop.permute.xlu0 %1677
        %v1679 = vlaneseq
        %v1680 = vshrl.u32 %v1679, 7
        %v1681 = vsub.s32 4, %v1680
        %v1682 = vrot.slane %v1493, %v1681
        %1684 = vbcast.lane.b32.xlu0 %v1682, 256
        %v1685 = vpop.permute.xlu0 %1684
        %s1687 = sor.u32 256, 8
        %1688 = vbcast.lane.b32.xlu0 %v1682, %s1687
        %v1689 = vpop.permute.xlu0 %1688
        %s1691 = sor.u32 256, 16
        %1692 = vbcast.lane.b32.xlu0 %v1682, %s1691
        %v1693 = vpop.permute.xlu0 %1692
        %v1694 = vlaneseq
        %v1695 = vshrl.u32 %v1694, 7
        %v1696 = vsub.s32 5, %v1695
        %v1697 = vrot.slane %v1493, %v1696
        %1699 = vbcast.lane.b32.xlu0 %v1697, 256
        %v1700 = vpop.permute.xlu0 %1699
        %s1702 = sor.u32 256, 8
        %1703 = vbcast.lane.b32.xlu0 %v1697, %s1702
        %v1704 = vpop.permute.xlu0 %1703
        %s1706 = sor.u32 256, 16
        %1707 = vbcast.lane.b32.xlu0 %v1697, %s1706
        %v1708 = vpop.permute.xlu0 %1707
        %v1709 = vlaneseq
        %v1710 = vshrl.u32 %v1709, 7
        %v1711 = vsub.s32 6, %v1710
        %v1712 = vrot.slane %v1493, %v1711
        %1714 = vbcast.lane.b32.xlu0 %v1712, 256
        %v1715 = vpop.permute.xlu0 %1714
        %s1717 = sor.u32 256, 8
        %1718 = vbcast.lane.b32.xlu0 %v1712, %s1717
        %v1719 = vpop.permute.xlu0 %1718
        %s1721 = sor.u32 256, 16
        %1722 = vbcast.lane.b32.xlu0 %v1712, %s1721
        %v1723 = vpop.permute.xlu0 %1722
        %v1724 = vlaneseq
        %v1725 = vshrl.u32 %v1724, 7
        %v1726 = vsub.s32 7, %v1725
        %v1727 = vrot.slane %v1493, %v1726
        %1729 = vbcast.lane.b32.xlu0 %v1727, 256
        %v1730 = vpop.permute.xlu0 %1729
        %s1732 = sor.u32 256, 8
        %1733 = vbcast.lane.b32.xlu0 %v1727, %s1732
        %v1734 = vpop.permute.xlu0 %1733
        %s1736 = sor.u32 256, 16
        %1737 = vbcast.lane.b32.xlu0 %v1727, %s1736
        %v1738 = vpop.permute.xlu0 %1737
        %v1739 = vlaneseq
        %v1740 = vshrl.u32 %v1739, 7
        %v1741 = vsub.s32 0, %v1740
        %v1742 = vrot.slane %v1494, %v1741
        %1744 = vbcast.lane.b32.xlu0 %v1742, 256
        %v1745 = vpop.permute.xlu0 %1744
        %s1747 = sor.u32 256, 8
        %1748 = vbcast.lane.b32.xlu0 %v1742, %s1747
        %v1749 = vpop.permute.xlu0 %1748
        %s1751 = sor.u32 256, 16
        %1752 = vbcast.lane.b32.xlu0 %v1742, %s1751
        %v1753 = vpop.permute.xlu0 %1752
        %v1754 = vunpack.c.l.bf16 %v563
        %v1755 = vunpack.c.l.bf16 %v564
        %v1756 = vunpack.c.l.bf16 %v565
        %v1757 = vunpack.c.l.bf16 %v566
        %v1758 = vunpack.c.l.bf16 %v567
        %v1759 = vunpack.c.l.bf16 %v568
        %v1760 = vunpack.c.l.bf16 %v569
        %v1761 = vunpack.c.l.bf16 %v570
        %v1762 = vunpack.c.l.bf16 %v571
        %v1763 = vunpack.c.l.bf16 %v572
        %v1764 = vunpack.c.l.bf16 %v573
        %v1765 = vunpack.c.l.bf16 %v574
        %v1766 = vunpack.c.l.bf16 %v575
        %v1767 = vunpack.c.l.bf16 %v576
        %v1768 = vunpack.c.l.bf16 %v577
        %v1769 = vunpack.c.l.bf16 %v578
        %v1770 = vunpack.c.l.bf16 %v579
        %v1771 = vunpack.c.l.bf16 %v580
        %v1772 = vunpack.c.l.bf16 %v581
        %v1773 = vunpack.c.l.bf16 %v582
        %v1774 = vunpack.c.l.bf16 %v583
        %v1775 = vunpack.c.l.bf16 %v584
        %v1776 = vunpack.c.l.bf16 %v585
        %v1777 = vunpack.c.l.bf16 %v586
        %v1778 = vunpack.c.l.bf16 %v587
        %v1779 = vunpack.c.l.bf16 %v588
        %v1780 = vunpack.c.l.bf16 %v589
        %v1781 = vunpack.c.l.bf16 %v590
        %v1782 = vunpack.c.l.bf16 %v591
        %v1783 = vunpack.c.l.bf16 %v592
        %v1784 = vunpack.c.l.bf16 %v593
        %v1785 = vunpack.c.l.bf16 %v594
        %v1786 = vunpack.c.l.bf16 %v595
        %v1787 = vunpack.c.l.bf16 %v596
        %v1788 = vunpack.c.l.bf16 %v597
        %v1789 = vunpack.c.l.bf16 %v598
        %v1790 = vunpack.c.l.bf16 %v599
        %v1791 = vunpack.c.l.bf16 %v600
        %v1792 = vunpack.c.l.bf16 %v601
        %v1793 = vunpack.c.l.bf16 %v602
        %v1794 = vunpack.c.l.bf16 %v603
        %v1795 = vunpack.c.l.bf16 %v604
        %v1796 = vunpack.c.l.bf16 %v605
        %v1797 = vunpack.c.l.bf16 %v606
        %v1798 = vunpack.c.l.bf16 %v607
        %v1799 = vunpack.c.l.bf16 %v608
        %v1800 = vunpack.c.l.bf16 %v609
        %v1801 = vunpack.c.l.bf16 %v610
        %v1802 = vunpack.c.l.bf16 %v611
        %v1803 = vunpack.c.l.bf16 %v612
        %v1804 = vunpack.c.l.bf16 %v613
        %v1805 = vmul.f32 %v1754, %v1505
        %v1806 = vmul.f32 %v1755, %v1509
        %v1807 = vmul.f32 %v1756, %v1513
        %v1808 = vmul.f32 %v1757, %v1520
        %v1809 = vmul.f32 %v1758, %v1524
        %v1810 = vmul.f32 %v1759, %v1528
        %v1811 = vmul.f32 %v1760, %v1535
        %v1812 = vmul.f32 %v1761, %v1539
        %v1813 = vmul.f32 %v1762, %v1543
        %v1814 = vmul.f32 %v1763, %v1550
        %v1815 = vmul.f32 %v1764, %v1554
        %v1816 = vmul.f32 %v1765, %v1558
        %v1817 = vmul.f32 %v1766, %v1565
        %v1818 = vmul.f32 %v1767, %v1569
        %v1819 = vmul.f32 %v1768, %v1573
        %v1820 = vmul.f32 %v1769, %v1580
        %v1821 = vmul.f32 %v1770, %v1584
        %v1822 = vmul.f32 %v1771, %v1588
        %v1823 = vmul.f32 %v1772, %v1595
        %v1824 = vmul.f32 %v1773, %v1599
        %v1825 = vmul.f32 %v1774, %v1603
        %v1826 = vmul.f32 %v1775, %v1610
        %v1827 = vmul.f32 %v1776, %v1614
        %v1828 = vmul.f32 %v1777, %v1618
        %v1829 = vmul.f32 %v1778, %v1625
        %v1830 = vmul.f32 %v1779, %v1629
        %v1831 = vmul.f32 %v1780, %v1633
        %v1832 = vmul.f32 %v1781, %v1640
        %v1833 = vmul.f32 %v1782, %v1644
        %v1834 = vmul.f32 %v1783, %v1648
        %v1835 = vmul.f32 %v1784, %v1655
        %v1836 = vmul.f32 %v1785, %v1659
        %v1837 = vmul.f32 %v1786, %v1663
        %v1838 = vmul.f32 %v1787, %v1670
        %v1839 = vmul.f32 %v1788, %v1674
        %v1840 = vmul.f32 %v1789, %v1678
        %v1841 = vmul.f32 %v1790, %v1685
        %v1842 = vmul.f32 %v1791, %v1689
        %v1843 = vmul.f32 %v1792, %v1693
        %v1844 = vmul.f32 %v1793, %v1700
        %v1845 = vmul.f32 %v1794, %v1704
        %v1846 = vmul.f32 %v1795, %v1708
        %v1847 = vmul.f32 %v1796, %v1715
        %v1848 = vmul.f32 %v1797, %v1719
        %v1849 = vmul.f32 %v1798, %v1723
        %v1850 = vmul.f32 %v1799, %v1730
        %v1851 = vmul.f32 %v1800, %v1734
        %v1852 = vmul.f32 %v1801, %v1738
        %v1853 = vmul.f32 %v1802, %v1745
        %v1854 = vmul.f32 %v1803, %v1749
        %v1855 = vmul.f32 %v1804, %v1753
        %v1856 = vsel %vm920, %v1805, 0.0
        %v1857 = vsel %vm920, %v1806, 0.0
        %v1858 = vadd.f32 %v1856, %v1857
        %v1859 = vsel %vm927, %v1807, 0.0
        %v1860 = vadd.f32 %v1858, %v1859
        %v1861 = vrot.slane %v1860, 4
        %v1862 = vadd.f32 %v1860, %v1861
        %v1863 = vrot.slane %v1862, 2
        %v1864 = vadd.f32 %v1862, %v1863
        %v1865 = vrot.slane %v1864, 1
        %v1866 = vadd.f32 %v1864, %v1865
        %v1867 = vsel %vm920, %v1808, 0.0
        %v1868 = vsel %vm920, %v1809, 0.0
        %v1869 = vadd.f32 %v1867, %v1868
        %v1870 = vsel %vm927, %v1810, 0.0
        %v1871 = vadd.f32 %v1869, %v1870
        %v1872 = vrot.slane %v1871, 4
        %v1873 = vadd.f32 %v1871, %v1872
        %v1874 = vrot.slane %v1873, 2
        %v1875 = vadd.f32 %v1873, %v1874
        %v1876 = vrot.slane %v1875, 1
        %v1877 = vadd.f32 %v1875, %v1876
        %v1878 = vsel %vm920, %v1811, 0.0
        %v1879 = vsel %vm920, %v1812, 0.0
        %v1880 = vadd.f32 %v1878, %v1879
        %v1881 = vsel %vm927, %v1813, 0.0
        %v1882 = vadd.f32 %v1880, %v1881
        %v1883 = vrot.slane %v1882, 4
        %v1884 = vadd.f32 %v1882, %v1883
        %v1885 = vrot.slane %v1884, 2
        %v1886 = vadd.f32 %v1884, %v1885
        %v1887 = vrot.slane %v1886, 1
        %v1888 = vadd.f32 %v1886, %v1887
        %v1889 = vsel %vm920, %v1814, 0.0
        %v1890 = vsel %vm920, %v1815, 0.0
        %v1891 = vadd.f32 %v1889, %v1890
        %v1892 = vsel %vm927, %v1816, 0.0
        %v1893 = vadd.f32 %v1891, %v1892
        %v1894 = vrot.slane %v1893, 4
        %v1895 = vadd.f32 %v1893, %v1894
        %v1896 = vrot.slane %v1895, 2
        %v1897 = vadd.f32 %v1895, %v1896
        %v1898 = vrot.slane %v1897, 1
        %v1899 = vadd.f32 %v1897, %v1898
        %v1900 = vsel %vm920, %v1817, 0.0
        %v1901 = vsel %vm920, %v1818, 0.0
        %v1902 = vadd.f32 %v1900, %v1901
        %v1903 = vsel %vm927, %v1819, 0.0
        %v1904 = vadd.f32 %v1902, %v1903
        %v1905 = vrot.slane %v1904, 4
        %v1906 = vadd.f32 %v1904, %v1905
        %v1907 = vrot.slane %v1906, 2
        %v1908 = vadd.f32 %v1906, %v1907
        %v1909 = vrot.slane %v1908, 1
        %v1910 = vadd.f32 %v1908, %v1909
        %v1911 = vsel %vm920, %v1820, 0.0
        %v1912 = vsel %vm920, %v1821, 0.0
        %v1913 = vadd.f32 %v1911, %v1912
        %v1914 = vsel %vm927, %v1822, 0.0
        %v1915 = vadd.f32 %v1913, %v1914
        %v1916 = vrot.slane %v1915, 4
        %v1917 = vadd.f32 %v1915, %v1916
        %v1918 = vrot.slane %v1917, 2
        %v1919 = vadd.f32 %v1917, %v1918
        %v1920 = vrot.slane %v1919, 1
        %v1921 = vadd.f32 %v1919, %v1920
        %v1922 = vsel %vm920, %v1823, 0.0
        %v1923 = vsel %vm920, %v1824, 0.0
        %v1924 = vadd.f32 %v1922, %v1923
        %v1925 = vsel %vm927, %v1825, 0.0
        %v1926 = vadd.f32 %v1924, %v1925
        %v1927 = vrot.slane %v1926, 4
        %v1928 = vadd.f32 %v1926, %v1927
        %v1929 = vrot.slane %v1928, 2
        %v1930 = vadd.f32 %v1928, %v1929
        %v1931 = vrot.slane %v1930, 1
        %v1932 = vadd.f32 %v1930, %v1931
        %v1933 = vsel %vm920, %v1826, 0.0
        %v1934 = vsel %vm920, %v1827, 0.0
        %v1935 = vadd.f32 %v1933, %v1934
        %v1936 = vsel %vm927, %v1828, 0.0
        %v1937 = vadd.f32 %v1935, %v1936
        %v1938 = vrot.slane %v1937, 4
        %v1939 = vadd.f32 %v1937, %v1938
        %v1940 = vrot.slane %v1939, 2
        %v1941 = vadd.f32 %v1939, %v1940
        %v1942 = vrot.slane %v1941, 1
        %v1943 = vadd.f32 %v1941, %v1942
        %v1944 = vsel %vm920, %v1829, 0.0
        %v1945 = vsel %vm920, %v1830, 0.0
        %v1946 = vadd.f32 %v1944, %v1945
        %v1947 = vsel %vm927, %v1831, 0.0
        %v1948 = vadd.f32 %v1946, %v1947
        %v1949 = vrot.slane %v1948, 4
        %v1950 = vadd.f32 %v1948, %v1949
        %v1951 = vrot.slane %v1950, 2
        %v1952 = vadd.f32 %v1950, %v1951
        %v1953 = vrot.slane %v1952, 1
        %v1954 = vadd.f32 %v1952, %v1953
        %v1955 = vsel %vm920, %v1832, 0.0
        %v1956 = vsel %vm920, %v1833, 0.0
        %v1957 = vadd.f32 %v1955, %v1956
        %v1958 = vsel %vm927, %v1834, 0.0
        %v1959 = vadd.f32 %v1957, %v1958
        %v1960 = vrot.slane %v1959, 4
        %v1961 = vadd.f32 %v1959, %v1960
        %v1962 = vrot.slane %v1961, 2
        %v1963 = vadd.f32 %v1961, %v1962
        %v1964 = vrot.slane %v1963, 1
        %v1965 = vadd.f32 %v1963, %v1964
        %v1966 = vsel %vm920, %v1835, 0.0
        %v1967 = vsel %vm920, %v1836, 0.0
        %v1968 = vadd.f32 %v1966, %v1967
        %v1969 = vsel %vm927, %v1837, 0.0
        %v1970 = vadd.f32 %v1968, %v1969
        %v1971 = vrot.slane %v1970, 4
        %v1972 = vadd.f32 %v1970, %v1971
        %v1973 = vrot.slane %v1972, 2
        %v1974 = vadd.f32 %v1972, %v1973
        %v1975 = vrot.slane %v1974, 1
        %v1976 = vadd.f32 %v1974, %v1975
        %v1977 = vsel %vm920, %v1838, 0.0
        %v1978 = vsel %vm920, %v1839, 0.0
        %v1979 = vadd.f32 %v1977, %v1978
        %v1980 = vsel %vm927, %v1840, 0.0
        %v1981 = vadd.f32 %v1979, %v1980
        %v1982 = vrot.slane %v1981, 4
        %v1983 = vadd.f32 %v1981, %v1982
        %v1984 = vrot.slane %v1983, 2
        %v1985 = vadd.f32 %v1983, %v1984
        %v1986 = vrot.slane %v1985, 1
        %v1987 = vadd.f32 %v1985, %v1986
        %v1988 = vsel %vm920, %v1841, 0.0
        %v1989 = vsel %vm920, %v1842, 0.0
        %v1990 = vadd.f32 %v1988, %v1989
        %v1991 = vsel %vm927, %v1843, 0.0
        %v1992 = vadd.f32 %v1990, %v1991
        %v1993 = vrot.slane %v1992, 4
        %v1994 = vadd.f32 %v1992, %v1993
        %v1995 = vrot.slane %v1994, 2
        %v1996 = vadd.f32 %v1994, %v1995
        %v1997 = vrot.slane %v1996, 1
        %v1998 = vadd.f32 %v1996, %v1997
        %v1999 = vsel %vm920, %v1844, 0.0
        %v2000 = vsel %vm920, %v1845, 0.0
        %v2001 = vadd.f32 %v1999, %v2000
        %v2002 = vsel %vm927, %v1846, 0.0
        %v2003 = vadd.f32 %v2001, %v2002
        %v2004 = vrot.slane %v2003, 4
        %v2005 = vadd.f32 %v2003, %v2004
        %v2006 = vrot.slane %v2005, 2
        %v2007 = vadd.f32 %v2005, %v2006
        %v2008 = vrot.slane %v2007, 1
        %v2009 = vadd.f32 %v2007, %v2008
        %v2010 = vsel %vm920, %v1847, 0.0
        %v2011 = vsel %vm920, %v1848, 0.0
        %v2012 = vadd.f32 %v2010, %v2011
        %v2013 = vsel %vm927, %v1849, 0.0
        %v2014 = vadd.f32 %v2012, %v2013
        %v2015 = vrot.slane %v2014, 4
        %v2016 = vadd.f32 %v2014, %v2015
        %v2017 = vrot.slane %v2016, 2
        %v2018 = vadd.f32 %v2016, %v2017
        %v2019 = vrot.slane %v2018, 1
        %v2020 = vadd.f32 %v2018, %v2019
        %v2021 = vsel %vm920, %v1850, 0.0
        %v2022 = vsel %vm920, %v1851, 0.0
        %v2023 = vadd.f32 %v2021, %v2022
        %v2024 = vsel %vm927, %v1852, 0.0
        %v2025 = vadd.f32 %v2023, %v2024
        %v2026 = vrot.slane %v2025, 4
        %v2027 = vadd.f32 %v2025, %v2026
        %v2028 = vrot.slane %v2027, 2
        %v2029 = vadd.f32 %v2027, %v2028
        %v2030 = vrot.slane %v2029, 1
        %v2031 = vadd.f32 %v2029, %v2030
        %v2032 = vsel %vm920, %v1853, 0.0
        %v2033 = vsel %vm920, %v1854, 0.0
        %v2034 = vadd.f32 %v2032, %v2033
        %v2035 = vsel %vm927, %v1855, 0.0
        %v2036 = vadd.f32 %v2034, %v2035
        %v2037 = vrot.slane %v2036, 4
        %v2038 = vadd.f32 %v2036, %v2037
        %v2039 = vrot.slane %v2038, 2
        %v2040 = vadd.f32 %v2038, %v2039
        %v2041 = vrot.slane %v2040, 1
        %v2042 = vadd.f32 %v2040, %v2041
        %v2060 = vsel %vm1376, %v1877, %v1866
        %v2061 = vsel %vm1378, %v1888, %v2060
        %v2062 = vsel %vm1380, %v1899, %v2061
        %v2063 = vsel %vm1382, %v1910, %v2062
        %v2064 = vsel %vm1384, %v1921, %v2063
        %v2065 = vsel %vm1386, %v1932, %v2064
        %v2066 = vsel %vm1388, %v1943, %v2065
        %v2067 = vsel %vm1376, %v1965, %v1954
        %v2068 = vsel %vm1378, %v1976, %v2067
        %v2069 = vsel %vm1380, %v1987, %v2068
        %v2070 = vsel %vm1382, %v1998, %v2069
        %v2071 = vsel %vm1384, %v2009, %v2070
        %v2072 = vsel %vm1386, %v2020, %v2071
        %v2073 = vsel %vm1388, %v2031, %v2072
        %v2078 = vsel %vm1460, %v1495, 0
        %v2081 = vsel %vm1460, %v1496, 0
        %vm2083 = vcmask 1040384
        %v2084 = vsel 0, 4294967295, 65535
        %v2085 = vsel %vm2083, %v2084, 0
        %v2087 = vand.u32 %v1498, %v2085
        %2089 = vmatprep.subr.bf16.mxu0 0
        %2090 = vmatpush1.bf16.msra.mxu0 0
        %2091 = vmatprep.subr.bf16.mxu0 0
        %2092 = vmatpush1.bf16.msra.mxu0 0
        %2093 = vmatprep.subr.bf16.mxu0 0
        %2094 = vmatpush1.bf16.msra.mxu0 0
        %2095 = vmatprep.subr.bf16.mxu0 0
        %2096 = vmatpush1.bf16.msra.mxu0 0
        %2097 = vmatprep.subr.bf16.mxu0 0
        %2098 = vmatpush1.bf16.msra.mxu0 0
        %2099 = vmatprep.subr.bf16.mxu0 0
        %2100 = vmatpush1.bf16.msra.mxu0 0
        %2101 = vmatprep.subr.bf16.mxu0 0
        %2102 = vmatpush1.bf16.msra.mxu0 %v2087
        %2103 = vmatprep.subr.bf16.mxu0 0
        %2104 = vmatpush1.bf16.msra.mxu0 %v1497
        %2105 = vmatprep.subr.bf16.mxu0 0
        %2106 = vmatpush2.bf16.msra.mxu0 0
        %2107 = vmatprep.subr.bf16.mxu0 0
        %2108 = vmatpush2.bf16.msra.mxu0 0
        %2109 = vmatprep.subr.bf16.mxu0 0
        %2110 = vmatpush2.bf16.msra.mxu0 0
        %2111 = vmatprep.subr.bf16.mxu0 0
        %2112 = vmatpush2.bf16.msra.mxu0 0
        %2113 = vmatprep.subr.bf16.mxu0 0
        %2114 = vmatpush2.bf16.msra.mxu0 0
        %2115 = vmatprep.subr.bf16.mxu0 0
        %2116 = vmatpush2.bf16.msra.mxu0 0
        %2117 = vmatprep.subr.bf16.mxu0 0
        %2118 = vmatpush2.bf16.msra.mxu0 0
        %2119 = vmatprep.subr.bf16.mxu0 0
        %2120 = vmatpush2.bf16.msra.mxu0 0
        %2121 = vmatprep.mubr.bf16.mxu0 0
        %2122 = vmatmul.mubr.bf16.gmra.mxu0 %v2078
        %v2123 = vpop.f32.mrf.mxu0
        %v2124 = vadd.f32 %v2066, %v2123
        %v2125 = vpop.f32.mrf.mxu0
        %v2126 = vpop.f32.mrf.mxu0
        %v2127 = vadd.f32 %v2073, %v2126
        %v2128 = vpop.f32.mrf.mxu0
        %2129 = vmatprep.mubr.bf16.mxu0 0
        %2130 = vmatmul.mubr.bf16.gmra.mxu0 %v2081
        %v2131 = vpop.f32.mrf.mxu0
        %v2132 = vadd.f32 %v2042, %v2131
        %v2133 = vpop.f32.mrf.mxu0
        %v2134 = vpop.f32.mrf.mxu0
        %v2135 = vpop.f32.mrf.mxu0
        %2136 = vdwg.mxu0
        %2137 = vst.msk [vmem:[#allocation2] sm:$0xff] %vm920, %v2124
        %2138 = vst.msk [vmem:[#allocation2 + $0x8] sm:$0xff] %vm920, %v2127
        %2139 = vst.msk [vmem:[#allocation2 + $0x10] sm:$0x1] %vm927, %v2132
        %2140 = vrot.lane.b32.xlu0 %v787, 96
        %v2141 = vpop.permute.xlu0 %2140
        %2142 = vrot.lane.b32.xlu0 %v791, 96
        %v2143 = vpop.permute.xlu0 %2142
        %2144 = vrot.lane.b32.xlu0 %v795, 96
        %v2145 = vpop.permute.xlu0 %2144
        %2146 = vrot.lane.b32.xlu0 %v799, 96
        %v2147 = vpop.permute.xlu0 %2146
        %2148 = vrot.lane.b32.xlu0 %v803, 96
        %v2149 = vpop.permute.xlu0 %2148
        %2150 = vrot.lane.b32.xlu0 %v807, 96
        %v2151 = vpop.permute.xlu0 %2150
        %2152 = vrot.lane.b32.xlu0 %v811, 96
        %v2153 = vpop.permute.xlu0 %2152
        %2154 = vrot.lane.b32.xlu0 %v815, 96
        %v2155 = vpop.permute.xlu0 %2154
        %2156 = vrot.lane.b32.xlu0 %v819, 96
        %v2157 = vpop.permute.xlu0 %2156
        %2158 = vrot.lane.b32.xlu0 %v823, 96
        %v2159 = vpop.permute.xlu0 %2158
        %2160 = vrot.lane.b32.xlu0 %v827, 96
        %v2161 = vpop.permute.xlu0 %2160
        %2162 = vrot.lane.b32.xlu0 %v831, 96
        %v2163 = vpop.permute.xlu0 %2162
        %2164 = vrot.lane.b32.xlu0 %v835, 96
        %v2165 = vpop.permute.xlu0 %2164
        %2166 = vrot.lane.b32.xlu0 %v839, 96
        %v2167 = vpop.permute.xlu0 %2166
        %2168 = vrot.lane.b32.xlu0 %v843, 96
        %v2169 = vpop.permute.xlu0 %2168
        %2170 = vrot.lane.b32.xlu0 %v847, 96
        %v2171 = vpop.permute.xlu0 %2170
        %2172 = vrot.lane.b32.xlu0 %v851, 96
        %v2173 = vpop.permute.xlu0 %2172
        %v2191 = vmul.f32 %v733, %v2141
        %v2192 = vmul.f32 %v734, %v2141
        %v2193 = vmul.f32 %v735, %v2141
        %v2194 = vmul.f32 %v736, %v2143
        %v2195 = vmul.f32 %v737, %v2143
        %v2196 = vmul.f32 %v738, %v2143
        %v2197 = vmul.f32 %v739, %v2145
        %v2198 = vmul.f32 %v740, %v2145
        %v2199 = vmul.f32 %v741, %v2145
        %v2200 = vmul.f32 %v742, %v2147
        %v2201 = vmul.f32 %v743, %v2147
        %v2202 = vmul.f32 %v744, %v2147
        %v2203 = vmul.f32 %v745, %v2149
        %v2204 = vmul.f32 %v746, %v2149
        %v2205 = vmul.f32 %v747, %v2149
        %v2206 = vmul.f32 %v748, %v2151
        %v2207 = vmul.f32 %v749, %v2151
        %v2208 = vmul.f32 %v750, %v2151
        %v2209 = vmul.f32 %v751, %v2153
        %v2210 = vmul.f32 %v752, %v2153
        %v2211 = vmul.f32 %v753, %v2153
        %v2212 = vmul.f32 %v754, %v2155
        %v2213 = vmul.f32 %v755, %v2155
        %v2214 = vmul.f32 %v756, %v2155
        %v2215 = vmul.f32 %v757, %v2157
        %v2216 = vmul.f32 %v758, %v2157
        %v2217 = vmul.f32 %v759, %v2157
        %v2218 = vmul.f32 %v760, %v2159
        %v2219 = vmul.f32 %v761, %v2159
        %v2220 = vmul.f32 %v762, %v2159
        %v2221 = vmul.f32 %v763, %v2161
        %v2222 = vmul.f32 %v764, %v2161
        %v2223 = vmul.f32 %v765, %v2161
        %v2224 = vmul.f32 %v766, %v2163
        %v2225 = vmul.f32 %v767, %v2163
        %v2226 = vmul.f32 %v768, %v2163
        %v2227 = vmul.f32 %v769, %v2165
        %v2228 = vmul.f32 %v770, %v2165
        %v2229 = vmul.f32 %v771, %v2165
        %v2230 = vmul.f32 %v772, %v2167
        %v2231 = vmul.f32 %v773, %v2167
        %v2232 = vmul.f32 %v774, %v2167
        %v2233 = vmul.f32 %v775, %v2169
        %v2234 = vmul.f32 %v776, %v2169
        %v2235 = vmul.f32 %v777, %v2169
        %v2236 = vmul.f32 %v778, %v2171
        %v2237 = vmul.f32 %v779, %v2171
        %v2238 = vmul.f32 %v780, %v2171
        %v2239 = vmul.f32 %v781, %v2173
        %v2240 = vmul.f32 %v782, %v2173
        %v2241 = vmul.f32 %v783, %v2173
        %v2242 = vsel %vm920, %v2191, 0.0
        %2243 = vadd.xlane.f32.xlu0 %v2242
        %v2244 = vpop.xlane.xlu0 %2243
        %v2245 = vsel %vm920, %v2192, 0.0
        %2246 = vadd.xlane.f32.xlu0 %v2245
        %v2247 = vpop.xlane.xlu0 %2246
        %v2248 = vsel %vm927, %v2193, 0.0
        %2249 = vadd.xlane.f32.xlu0 %v2248
        %v2250 = vpop.xlane.xlu0 %2249
        %v2251 = vsel %vm920, %v2194, 0.0
        %2252 = vadd.xlane.f32.xlu0 %v2251
        %v2253 = vpop.xlane.xlu0 %2252
        %v2254 = vsel %vm920, %v2195, 0.0
        %2255 = vadd.xlane.f32.xlu0 %v2254
        %v2256 = vpop.xlane.xlu0 %2255
        %v2257 = vsel %vm927, %v2196, 0.0
        %2258 = vadd.xlane.f32.xlu0 %v2257
        %v2259 = vpop.xlane.xlu0 %2258
        %v2260 = vsel %vm920, %v2197, 0.0
        %2261 = vadd.xlane.f32.xlu0 %v2260
        %v2262 = vpop.xlane.xlu0 %2261
        %v2263 = vsel %vm920, %v2198, 0.0
        %2264 = vadd.xlane.f32.xlu0 %v2263
        %v2265 = vpop.xlane.xlu0 %2264
        %v2266 = vsel %vm927, %v2199, 0.0
        %2267 = vadd.xlane.f32.xlu0 %v2266
        %v2268 = vpop.xlane.xlu0 %2267
        %v2269 = vsel %vm920, %v2200, 0.0
        %2270 = vadd.xlane.f32.xlu0 %v2269
        %v2271 = vpop.xlane.xlu0 %2270
        %v2272 = vsel %vm920, %v2201, 0.0
        %2273 = vadd.xlane.f32.xlu0 %v2272
        %v2274 = vpop.xlane.xlu0 %2273
        %v2275 = vsel %vm927, %v2202, 0.0
        %2276 = vadd.xlane.f32.xlu0 %v2275
        %v2277 = vpop.xlane.xlu0 %2276
        %v2278 = vsel %vm920, %v2203, 0.0
        %2279 = vadd.xlane.f32.xlu0 %v2278
        %v2280 = vpop.xlane.xlu0 %2279
        %v2281 = vsel %vm920, %v2204, 0.0
        %2282 = vadd.xlane.f32.xlu0 %v2281
        %v2283 = vpop.xlane.xlu0 %2282
        %v2284 = vsel %vm927, %v2205, 0.0
        %2285 = vadd.xlane.f32.xlu0 %v2284
        %v2286 = vpop.xlane.xlu0 %2285
        %v2287 = vsel %vm920, %v2206, 0.0
        %2288 = vadd.xlane.f32.xlu0 %v2287
        %v2289 = vpop.xlane.xlu0 %2288
        %v2290 = vsel %vm920, %v2207, 0.0
        %2291 = vadd.xlane.f32.xlu0 %v2290
        %v2292 = vpop.xlane.xlu0 %2291
        %v2293 = vsel %vm927, %v2208, 0.0
        %2294 = vadd.xlane.f32.xlu0 %v2293
        %v2295 = vpop.xlane.xlu0 %2294
        %v2296 = vsel %vm920, %v2209, 0.0
        %2297 = vadd.xlane.f32.xlu0 %v2296
        %v2298 = vpop.xlane.xlu0 %2297
        %v2299 = vsel %vm920, %v2210, 0.0
        %2300 = vadd.xlane.f32.xlu0 %v2299
        %v2301 = vpop.xlane.xlu0 %2300
        %v2302 = vsel %vm927, %v2211, 0.0
        %2303 = vadd.xlane.f32.xlu0 %v2302
        %v2304 = vpop.xlane.xlu0 %2303
        %v2305 = vsel %vm920, %v2212, 0.0
        %2306 = vadd.xlane.f32.xlu0 %v2305
        %v2307 = vpop.xlane.xlu0 %2306
        %v2308 = vsel %vm920, %v2213, 0.0
        %2309 = vadd.xlane.f32.xlu0 %v2308
        %v2310 = vpop.xlane.xlu0 %2309
        %v2311 = vsel %vm927, %v2214, 0.0
        %2312 = vadd.xlane.f32.xlu0 %v2311
        %v2313 = vpop.xlane.xlu0 %2312
        %v2314 = vsel %vm920, %v2215, 0.0
        %2315 = vadd.xlane.f32.xlu0 %v2314
        %v2316 = vpop.xlane.xlu0 %2315
        %v2317 = vsel %vm920, %v2216, 0.0
        %2318 = vadd.xlane.f32.xlu0 %v2317
        %v2319 = vpop.xlane.xlu0 %2318
        %v2320 = vsel %vm927, %v2217, 0.0
        %2321 = vadd.xlane.f32.xlu0 %v2320
        %v2322 = vpop.xlane.xlu0 %2321
        %v2323 = vsel %vm920, %v2218, 0.0
        %2324 = vadd.xlane.f32.xlu0 %v2323
        %v2325 = vpop.xlane.xlu0 %2324
        %v2326 = vsel %vm920, %v2219, 0.0
        %2327 = vadd.xlane.f32.xlu0 %v2326
        %v2328 = vpop.xlane.xlu0 %2327
        %v2329 = vsel %vm927, %v2220, 0.0
        %2330 = vadd.xlane.f32.xlu0 %v2329
        %v2331 = vpop.xlane.xlu0 %2330
        %v2332 = vsel %vm920, %v2221, 0.0
        %2333 = vadd.xlane.f32.xlu0 %v2332
        %v2334 = vpop.xlane.xlu0 %2333
        %v2335 = vsel %vm920, %v2222, 0.0
        %2336 = vadd.xlane.f32.xlu0 %v2335
        %v2337 = vpop.xlane.xlu0 %2336
        %v2338 = vsel %vm927, %v2223, 0.0
        %2339 = vadd.xlane.f32.xlu0 %v2338
        %v2340 = vpop.xlane.xlu0 %2339
        %v2341 = vsel %vm920, %v2224, 0.0
        %2342 = vadd.xlane.f32.xlu0 %v2341
        %v2343 = vpop.xlane.xlu0 %2342
        %v2344 = vsel %vm920, %v2225, 0.0
        %2345 = vadd.xlane.f32.xlu0 %v2344
        %v2346 = vpop.xlane.xlu0 %2345
        %v2347 = vsel %vm927, %v2226, 0.0
        %2348 = vadd.xlane.f32.xlu0 %v2347
        %v2349 = vpop.xlane.xlu0 %2348
        %v2350 = vsel %vm920, %v2227, 0.0
        %2351 = vadd.xlane.f32.xlu0 %v2350
        %v2352 = vpop.xlane.xlu0 %2351
        %v2353 = vsel %vm920, %v2228, 0.0
        %2354 = vadd.xlane.f32.xlu0 %v2353
        %v2355 = vpop.xlane.xlu0 %2354
        %v2356 = vsel %vm927, %v2229, 0.0
        %2357 = vadd.xlane.f32.xlu0 %v2356
        %v2358 = vpop.xlane.xlu0 %2357
        %v2359 = vsel %vm920, %v2230, 0.0
        %2360 = vadd.xlane.f32.xlu0 %v2359
        %v2361 = vpop.xlane.xlu0 %2360
        %v2362 = vsel %vm920, %v2231, 0.0
        %2363 = vadd.xlane.f32.xlu0 %v2362
        %v2364 = vpop.xlane.xlu0 %2363
        %v2365 = vsel %vm927, %v2232, 0.0
        %2366 = vadd.xlane.f32.xlu0 %v2365
        %v2367 = vpop.xlane.xlu0 %2366
        %v2368 = vsel %vm920, %v2233, 0.0
        %2369 = vadd.xlane.f32.xlu0 %v2368
        %v2370 = vpop.xlane.xlu0 %2369
        %v2371 = vsel %vm920, %v2234, 0.0
        %2372 = vadd.xlane.f32.xlu0 %v2371
        %v2373 = vpop.xlane.xlu0 %2372
        %v2374 = vsel %vm927, %v2235, 0.0
        %2375 = vadd.xlane.f32.xlu0 %v2374
        %v2376 = vpop.xlane.xlu0 %2375
        %v2377 = vsel %vm920, %v2236, 0.0
        %2378 = vadd.xlane.f32.xlu0 %v2377
        %v2379 = vpop.xlane.xlu0 %2378
        %v2380 = vsel %vm920, %v2237, 0.0
        %2381 = vadd.xlane.f32.xlu0 %v2380
        %v2382 = vpop.xlane.xlu0 %2381
        %v2383 = vsel %vm927, %v2238, 0.0
        %2384 = vadd.xlane.f32.xlu0 %v2383
        %v2385 = vpop.xlane.xlu0 %2384
        %v2386 = vsel %vm920, %v2239, 0.0
        %2387 = vadd.xlane.f32.xlu0 %v2386
        %v2388 = vpop.xlane.xlu0 %2387
        %v2389 = vsel %vm920, %v2240, 0.0
        %2390 = vadd.xlane.f32.xlu0 %v2389
        %v2391 = vpop.xlane.xlu0 %2390
        %v2392 = vsel %vm927, %v2241, 0.0
        %2393 = vadd.xlane.f32.xlu0 %v2392
        %v2394 = vpop.xlane.xlu0 %2393
        %2397 = vrot.lane.b32.xlu0 %v614, 96
        %v2398 = vpop.permute.xlu0 %2397
        %2399 = vrot.lane.b32.xlu0 %v615, 96
        %v2400 = vpop.permute.xlu0 %2399
        %2401 = vrot.lane.b32.xlu0 %v616, 32
        %v2402 = vpop.permute.xlu0 %2401
        %2403 = vrot.lane.b32.xlu0 %v617, 32
        %v2404 = vpop.permute.xlu0 %2403
        %v2456 = vlaneseq
        %v2457 = vshrl.u32 %v2456, 7
        %v2458 = vsub.s32 %v1133, %v2457
        %v2459 = vrot.slane %v2244, %v2458
        %v2460 = vlaneseq
        %v2461 = vshrl.u32 %v2460, 7
        %v2462 = vsub.s32 %v1138, %v2461
        %v2463 = vrot.slane %v2247, %v2462
        %v2464 = vsel %vm1143, %v2463, %v2459
        %v2465 = vlaneseq
        %v2466 = vshrl.u32 %v2465, 7
        %v2467 = vsub.s32 %v1145, %v2466
        %v2468 = vrot.slane %v2250, %v2467
        %v2469 = vsel %vm1150, %v2468, %v2464
        %v2470 = vlaneseq
        %v2471 = vshrl.u32 %v2470, 7
        %v2472 = vsub.s32 %v1133, %v2471
        %v2473 = vrot.slane %v2253, %v2472
        %v2474 = vlaneseq
        %v2475 = vshrl.u32 %v2474, 7
        %v2476 = vsub.s32 %v1138, %v2475
        %v2477 = vrot.slane %v2256, %v2476
        %v2478 = vsel %vm1143, %v2477, %v2473
        %v2479 = vlaneseq
        %v2480 = vshrl.u32 %v2479, 7
        %v2481 = vsub.s32 %v1145, %v2480
        %v2482 = vrot.slane %v2259, %v2481
        %v2483 = vsel %vm1150, %v2482, %v2478
        %v2484 = vlaneseq
        %v2485 = vshrl.u32 %v2484, 7
        %v2486 = vsub.s32 %v1133, %v2485
        %v2487 = vrot.slane %v2262, %v2486
        %v2488 = vlaneseq
        %v2489 = vshrl.u32 %v2488, 7
        %v2490 = vsub.s32 %v1138, %v2489
        %v2491 = vrot.slane %v2265, %v2490
        %v2492 = vsel %vm1143, %v2491, %v2487
        %v2493 = vlaneseq
        %v2494 = vshrl.u32 %v2493, 7
        %v2495 = vsub.s32 %v1145, %v2494
        %v2496 = vrot.slane %v2268, %v2495
        %v2497 = vsel %vm1150, %v2496, %v2492
        %v2498 = vlaneseq
        %v2499 = vshrl.u32 %v2498, 7
        %v2500 = vsub.s32 %v1133, %v2499
        %v2501 = vrot.slane %v2271, %v2500
        %v2502 = vlaneseq
        %v2503 = vshrl.u32 %v2502, 7
        %v2504 = vsub.s32 %v1138, %v2503
        %v2505 = vrot.slane %v2274, %v2504
        %v2506 = vsel %vm1143, %v2505, %v2501
        %v2507 = vlaneseq
        %v2508 = vshrl.u32 %v2507, 7
        %v2509 = vsub.s32 %v1145, %v2508
        %v2510 = vrot.slane %v2277, %v2509
        %v2511 = vsel %vm1150, %v2510, %v2506
        %v2512 = vlaneseq
        %v2513 = vshrl.u32 %v2512, 7
        %v2514 = vsub.s32 %v1133, %v2513
        %v2515 = vrot.slane %v2280, %v2514
        %v2516 = vlaneseq
        %v2517 = vshrl.u32 %v2516, 7
        %v2518 = vsub.s32 %v1138, %v2517
        %v2519 = vrot.slane %v2283, %v2518
        %v2520 = vsel %vm1143, %v2519, %v2515
        %v2521 = vlaneseq
        %v2522 = vshrl.u32 %v2521, 7
        %v2523 = vsub.s32 %v1145, %v2522
        %v2524 = vrot.slane %v2286, %v2523
        %v2525 = vsel %vm1150, %v2524, %v2520
        %v2526 = vlaneseq
        %v2527 = vshrl.u32 %v2526, 7
        %v2528 = vsub.s32 %v1133, %v2527
        %v2529 = vrot.slane %v2289, %v2528
        %v2530 = vlaneseq
        %v2531 = vshrl.u32 %v2530, 7
        %v2532 = vsub.s32 %v1138, %v2531
        %v2533 = vrot.slane %v2292, %v2532
        %v2534 = vsel %vm1143, %v2533, %v2529
        %v2535 = vlaneseq
        %v2536 = vshrl.u32 %v2535, 7
        %v2537 = vsub.s32 %v1145, %v2536
        %v2538 = vrot.slane %v2295, %v2537
        %v2539 = vsel %vm1150, %v2538, %v2534
        %v2540 = vlaneseq
        %v2541 = vshrl.u32 %v2540, 7
        %v2542 = vsub.s32 %v1133, %v2541
        %v2543 = vrot.slane %v2298, %v2542
        %v2544 = vlaneseq
        %v2545 = vshrl.u32 %v2544, 7
        %v2546 = vsub.s32 %v1138, %v2545
        %v2547 = vrot.slane %v2301, %v2546
        %v2548 = vsel %vm1143, %v2547, %v2543
        %v2549 = vlaneseq
        %v2550 = vshrl.u32 %v2549, 7
        %v2551 = vsub.s32 %v1145, %v2550
        %v2552 = vrot.slane %v2304, %v2551
        %v2553 = vsel %vm1150, %v2552, %v2548
        %v2554 = vlaneseq
        %v2555 = vshrl.u32 %v2554, 7
        %v2556 = vsub.s32 %v1133, %v2555
        %v2557 = vrot.slane %v2307, %v2556
        %v2558 = vlaneseq
        %v2559 = vshrl.u32 %v2558, 7
        %v2560 = vsub.s32 %v1138, %v2559
        %v2561 = vrot.slane %v2310, %v2560
        %v2562 = vsel %vm1143, %v2561, %v2557
        %v2563 = vlaneseq
        %v2564 = vshrl.u32 %v2563, 7
        %v2565 = vsub.s32 %v1145, %v2564
        %v2566 = vrot.slane %v2313, %v2565
        %v2567 = vsel %vm1150, %v2566, %v2562
        %v2568 = vlaneseq
        %v2569 = vshrl.u32 %v2568, 7
        %v2570 = vsub.s32 %v1133, %v2569
        %v2571 = vrot.slane %v2316, %v2570
        %v2572 = vlaneseq
        %v2573 = vshrl.u32 %v2572, 7
        %v2574 = vsub.s32 %v1138, %v2573
        %v2575 = vrot.slane %v2319, %v2574
        %v2576 = vsel %vm1143, %v2575, %v2571
        %v2577 = vlaneseq
        %v2578 = vshrl.u32 %v2577, 7
        %v2579 = vsub.s32 %v1145, %v2578
        %v2580 = vrot.slane %v2322, %v2579
        %v2581 = vsel %vm1150, %v2580, %v2576
        %v2582 = vlaneseq
        %v2583 = vshrl.u32 %v2582, 7
        %v2584 = vsub.s32 %v1133, %v2583
        %v2585 = vrot.slane %v2325, %v2584
        %v2586 = vlaneseq
        %v2587 = vshrl.u32 %v2586, 7
        %v2588 = vsub.s32 %v1138, %v2587
        %v2589 = vrot.slane %v2328, %v2588
        %v2590 = vsel %vm1143, %v2589, %v2585
        %v2591 = vlaneseq
        %v2592 = vshrl.u32 %v2591, 7
        %v2593 = vsub.s32 %v1145, %v2592
        %v2594 = vrot.slane %v2331, %v2593
        %v2595 = vsel %vm1150, %v2594, %v2590
        %v2596 = vlaneseq
        %v2597 = vshrl.u32 %v2596, 7
        %v2598 = vsub.s32 %v1133, %v2597
        %v2599 = vrot.slane %v2334, %v2598
        %v2600 = vlaneseq
        %v2601 = vshrl.u32 %v2600, 7
        %v2602 = vsub.s32 %v1138, %v2601
        %v2603 = vrot.slane %v2337, %v2602
        %v2604 = vsel %vm1143, %v2603, %v2599
        %v2605 = vlaneseq
        %v2606 = vshrl.u32 %v2605, 7
        %v2607 = vsub.s32 %v1145, %v2606
        %v2608 = vrot.slane %v2340, %v2607
        %v2609 = vsel %vm1150, %v2608, %v2604
        %v2610 = vlaneseq
        %v2611 = vshrl.u32 %v2610, 7
        %v2612 = vsub.s32 %v1133, %v2611
        %v2613 = vrot.slane %v2343, %v2612
        %v2614 = vlaneseq
        %v2615 = vshrl.u32 %v2614, 7
        %v2616 = vsub.s32 %v1138, %v2615
        %v2617 = vrot.slane %v2346, %v2616
        %v2618 = vsel %vm1143, %v2617, %v2613
        %v2619 = vlaneseq
        %v2620 = vshrl.u32 %v2619, 7
        %v2621 = vsub.s32 %v1145, %v2620
        %v2622 = vrot.slane %v2349, %v2621
        %v2623 = vsel %vm1150, %v2622, %v2618
        %v2624 = vlaneseq
        %v2625 = vshrl.u32 %v2624, 7
        %v2626 = vsub.s32 %v1133, %v2625
        %v2627 = vrot.slane %v2352, %v2626
        %v2628 = vlaneseq
        %v2629 = vshrl.u32 %v2628, 7
        %v2630 = vsub.s32 %v1138, %v2629
        %v2631 = vrot.slane %v2355, %v2630
        %v2632 = vsel %vm1143, %v2631, %v2627
        %v2633 = vlaneseq
        %v2634 = vshrl.u32 %v2633, 7
        %v2635 = vsub.s32 %v1145, %v2634
        %v2636 = vrot.slane %v2358, %v2635
        %v2637 = vsel %vm1150, %v2636, %v2632
        %v2638 = vlaneseq
        %v2639 = vshrl.u32 %v2638, 7
        %v2640 = vsub.s32 %v1133, %v2639
        %v2641 = vrot.slane %v2361, %v2640
        %v2642 = vlaneseq
        %v2643 = vshrl.u32 %v2642, 7
        %v2644 = vsub.s32 %v1138, %v2643
        %v2645 = vrot.slane %v2364, %v2644
        %v2646 = vsel %vm1143, %v2645, %v2641
        %v2647 = vlaneseq
        %v2648 = vshrl.u32 %v2647, 7
        %v2649 = vsub.s32 %v1145, %v2648
        %v2650 = vrot.slane %v2367, %v2649
        %v2651 = vsel %vm1150, %v2650, %v2646
        %v2652 = vlaneseq
        %v2653 = vshrl.u32 %v2652, 7
        %v2654 = vsub.s32 %v1133, %v2653
        %v2655 = vrot.slane %v2370, %v2654
        %v2656 = vlaneseq
        %v2657 = vshrl.u32 %v2656, 7
        %v2658 = vsub.s32 %v1138, %v2657
        %v2659 = vrot.slane %v2373, %v2658
        %v2660 = vsel %vm1143, %v2659, %v2655
        %v2661 = vlaneseq
        %v2662 = vshrl.u32 %v2661, 7
        %v2663 = vsub.s32 %v1145, %v2662
        %v2664 = vrot.slane %v2376, %v2663
        %v2665 = vsel %vm1150, %v2664, %v2660
        %v2666 = vlaneseq
        %v2667 = vshrl.u32 %v2666, 7
        %v2668 = vsub.s32 %v1133, %v2667
        %v2669 = vrot.slane %v2379, %v2668
        %v2670 = vlaneseq
        %v2671 = vshrl.u32 %v2670, 7
        %v2672 = vsub.s32 %v1138, %v2671
        %v2673 = vrot.slane %v2382, %v2672
        %v2674 = vsel %vm1143, %v2673, %v2669
        %v2675 = vlaneseq
        %v2676 = vshrl.u32 %v2675, 7
        %v2677 = vsub.s32 %v1145, %v2676
        %v2678 = vrot.slane %v2385, %v2677
        %v2679 = vsel %vm1150, %v2678, %v2674
        %v2680 = vlaneseq
        %v2681 = vshrl.u32 %v2680, 7
        %v2682 = vsub.s32 %v1133, %v2681
        %v2683 = vrot.slane %v2388, %v2682
        %v2684 = vlaneseq
        %v2685 = vshrl.u32 %v2684, 7
        %v2686 = vsub.s32 %v1138, %v2685
        %v2687 = vrot.slane %v2391, %v2686
        %v2688 = vsel %vm1143, %v2687, %v2683
        %v2689 = vlaneseq
        %v2690 = vshrl.u32 %v2689, 7
        %v2691 = vsub.s32 %v1145, %v2690
        %v2692 = vrot.slane %v2394, %v2691
        %v2693 = vsel %vm1150, %v2692, %v2688
        %v2694 = vsel %vm1376, %v2483, %v2469
        %v2695 = vsel %vm1378, %v2497, %v2694
        %v2696 = vsel %vm1380, %v2511, %v2695
        %v2697 = vsel %vm1382, %v2525, %v2696
        %v2698 = vsel %vm1384, %v2539, %v2697
        %v2699 = vsel %vm1386, %v2553, %v2698
        %v2700 = vsel %vm1388, %v2567, %v2699
        %v2701 = vsel %vm1376, %v2595, %v2581
        %v2702 = vsel %vm1378, %v2609, %v2701
        %v2703 = vsel %vm1380, %v2623, %v2702
        %v2704 = vsel %vm1382, %v2637, %v2703
        %v2705 = vsel %vm1384, %v2651, %v2704
        %v2706 = vsel %vm1386, %v2665, %v2705
        %v2707 = vsel %vm1388, %v2679, %v2706
        %v2712 = vsel %vm920, %v2398, 0
        %v2715 = vsel %vm920, %v2400, 0
        %v2718 = vsel %vm920, %v2402, 0
        %v2721 = vsel %vm920, %v2404, 0
        %2723 = vmatprep.subr.bf16.mxu0 0
        %2724 = vmatpush1.bf16.xpose.msra.mxu0 0
        %2725 = vmatprep.subr.bf16.mxu0 0
        %2726 = vmatpush1.bf16.xpose.msra.mxu0 0
        %2727 = vmatprep.subr.bf16.mxu0 0
        %2728 = vmatpush1.bf16.xpose.msra.mxu0 0
        %2729 = vmatprep.subr.bf16.mxu0 0
        %2730 = vmatpush1.bf16.xpose.msra.mxu0 0
        %2731 = vmatprep.subr.bf16.mxu0 0
        %2732 = vmatpush1.bf16.xpose.msra.mxu0 0
        %2733 = vmatprep.subr.bf16.mxu0 0
        %2734 = vmatpush1.bf16.xpose.msra.mxu0 0
        %2735 = vmatprep.subr.bf16.mxu0 0
        %2736 = vmatpush1.bf16.xpose.msra.mxu0 %v2721
        %2737 = vmatprep.subr.bf16.mxu0 0
        %2738 = vmatpush1.bf16.xpose.msra.mxu0 %v2718
        %2739 = vmatprep.subr.bf16.mxu0 0
        %2740 = vmatpush2.bf16.xpose.msra.mxu0 0
        %2741 = vmatprep.subr.bf16.mxu0 0
        %2742 = vmatpush2.bf16.xpose.msra.mxu0 0
        %2743 = vmatprep.subr.bf16.mxu0 0
        %2744 = vmatpush2.bf16.xpose.msra.mxu0 0
        %2745 = vmatprep.subr.bf16.mxu0 0
        %2746 = vmatpush2.bf16.xpose.msra.mxu0 0
        %2747 = vmatprep.subr.bf16.mxu0 0
        %2748 = vmatpush2.bf16.xpose.msra.mxu0 0
        %2749 = vmatprep.subr.bf16.mxu0 0
        %2750 = vmatpush2.bf16.xpose.msra.mxu0 0
        %2751 = vmatprep.subr.bf16.mxu0 0
        %2752 = vmatpush2.bf16.xpose.msra.mxu0 0
        %2753 = vmatprep.subr.bf16.mxu0 0
        %2754 = vmatpush2.bf16.xpose.msra.mxu0 0
        %2755 = vmatprep.mubr.bf16.mxu0 0
        %2756 = vmatmul.mubr.bf16.gmra.mxu0 %v2712
        %v2757 = vpop.f32.mrf.mxu0
        %v2758 = vadd.f32 %v2700, %v2757
        %v2759 = vpop.f32.mrf.mxu0
        %v2760 = vpop.f32.mrf.mxu0
        %v2761 = vadd.f32 %v2707, %v2760
        %v2762 = vpop.f32.mrf.mxu0
        %2763 = vmatprep.mubr.bf16.mxu0 0
        %2764 = vmatmul.mubr.bf16.gmra.mxu0 %v2715
        %v2765 = vpop.f32.mrf.mxu0
        %v2766 = vadd.f32 %v2693, %v2765
        %v2767 = vpop.f32.mrf.mxu0
        %v2768 = vpop.f32.mrf.mxu0
        %v2769 = vpop.f32.mrf.mxu0
        %2770 = vdwg.mxu0
        %v2771 = vsel %vm1460, %v2758, -inf
        %2772 = vmax.xlane.f32.xlu0 %v2771
        %v2773 = vpop.xlane.xlu0 %2772
        %v2774 = vsel %vm1460, %v2761, -inf
        %2775 = vmax.xlane.f32.xlu0 %v2774
        %v2776 = vpop.xlane.xlu0 %2775
        %v2777 = vsel %vm1467, %v2766, -inf
        %2778 = vmax.xlane.f32.xlu0 %v2777
        %v2779 = vpop.xlane.xlu0 %2778
        %v2780 = vsub.f32 %v2758, %v2773
        %v2781 = vsub.f32 %v2761, %v2776
        %v2782 = vsub.f32 %v2766, %v2779
        %v2783 = vmul.f32 %v2780, 1.442695
        %v2784 = vpow.pop %v2783
        %v2785 = vmul.f32 %v2781, 1.442695
        %v2786 = vpow.pop %v2785
        %v2787 = vmul.f32 %v2782, 1.442695
        %v2788 = vpow.pop %v2787
        %v2789 = vsel %vm1460, %v2784, 0.0
        %2790 = vadd.xlane.f32.xlu0 %v2789
        %v2791 = vpop.xlane.xlu0 %2790
        %v2792 = vsel %vm1460, %v2786, 0.0
        %2793 = vadd.xlane.f32.xlu0 %v2792
        %v2794 = vpop.xlane.xlu0 %2793
        %v2795 = vsel %vm1467, %v2788, 0.0
        %2796 = vadd.xlane.f32.xlu0 %v2795
        %v2797 = vpop.xlane.xlu0 %2796
        %v2798 = vrcp.pop %v2791
        %v2799 = vrcp.pop %v2794
        %v2800 = vrcp.pop %v2797
        %v2801 = vmul.f32 %v2784, %v2798
        %v2802 = vmul.f32 %v2786, %v2799
        %v2803 = vmul.f32 %v2788, %v2800
        %v2804 = vpack.c.bf16 %v2802, %v2801
        %v2805 = vpack.c.bf16 %v2803, %v2803
        %v2806 = vlaneseq
        %v2807 = vshrl.u32 %v2806, 7
        %v2808 = vsub.s32 0, %v2807
        %v2809 = vrot.slane %v2801, %v2808
        %2811 = vbcast.lane.b32.xlu0 %v2809, 256
        %v2812 = vpop.permute.xlu0 %2811
        %s2814 = sor.u32 256, 8
        %2815 = vbcast.lane.b32.xlu0 %v2809, %s2814
        %v2816 = vpop.permute.xlu0 %2815
        %s2818 = sor.u32 256, 16
        %2819 = vbcast.lane.b32.xlu0 %v2809, %s2818
        %v2820 = vpop.permute.xlu0 %2819
        %v2821 = vlaneseq
        %v2822 = vshrl.u32 %v2821, 7
        %v2823 = vsub.s32 1, %v2822
        %v2824 = vrot.slane %v2801, %v2823
        %2826 = vbcast.lane.b32.xlu0 %v2824, 256
        %v2827 = vpop.permute.xlu0 %2826
        %s2829 = sor.u32 256, 8
        %2830 = vbcast.lane.b32.xlu0 %v2824, %s2829
        %v2831 = vpop.permute.xlu0 %2830
        %s2833 = sor.u32 256, 16
        %2834 = vbcast.lane.b32.xlu0 %v2824, %s2833
        %v2835 = vpop.permute.xlu0 %2834
        %v2836 = vlaneseq
        %v2837 = vshrl.u32 %v2836, 7
        %v2838 = vsub.s32 2, %v2837
        %v2839 = vrot.slane %v2801, %v2838
        %2841 = vbcast.lane.b32.xlu0 %v2839, 256
        %v2842 = vpop.permute.xlu0 %2841
        %s2844 = sor.u32 256, 8
        %2845 = vbcast.lane.b32.xlu0 %v2839, %s2844
        %v2846 = vpop.permute.xlu0 %2845
        %s2848 = sor.u32 256, 16
        %2849 = vbcast.lane.b32.xlu0 %v2839, %s2848
        %v2850 = vpop.permute.xlu0 %2849
        %v2851 = vlaneseq
        %v2852 = vshrl.u32 %v2851, 7
        %v2853 = vsub.s32 3, %v2852
        %v2854 = vrot.slane %v2801, %v2853
        %2856 = vbcast.lane.b32.xlu0 %v2854, 256
        %v2857 = vpop.permute.xlu0 %2856
        %s2859 = sor.u32 256, 8
        %2860 = vbcast.lane.b32.xlu0 %v2854, %s2859
        %v2861 = vpop.permute.xlu0 %2860
        %s2863 = sor.u32 256, 16
        %2864 = vbcast.lane.b32.xlu0 %v2854, %s2863
        %v2865 = vpop.permute.xlu0 %2864
        %v2866 = vlaneseq
        %v2867 = vshrl.u32 %v2866, 7
        %v2868 = vsub.s32 4, %v2867
        %v2869 = vrot.slane %v2801, %v2868
        %2871 = vbcast.lane.b32.xlu0 %v2869, 256
        %v2872 = vpop.permute.xlu0 %2871
        %s2874 = sor.u32 256, 8
        %2875 = vbcast.lane.b32.xlu0 %v2869, %s2874
        %v2876 = vpop.permute.xlu0 %2875
        %s2878 = sor.u32 256, 16
        %2879 = vbcast.lane.b32.xlu0 %v2869, %s2878
        %v2880 = vpop.permute.xlu0 %2879
        %v2881 = vlaneseq
        %v2882 = vshrl.u32 %v2881, 7
        %v2883 = vsub.s32 5, %v2882
        %v2884 = vrot.slane %v2801, %v2883
        %2886 = vbcast.lane.b32.xlu0 %v2884, 256
        %v2887 = vpop.permute.xlu0 %2886
        %s2889 = sor.u32 256, 8
        %2890 = vbcast.lane.b32.xlu0 %v2884, %s2889
        %v2891 = vpop.permute.xlu0 %2890
        %s2893 = sor.u32 256, 16
        %2894 = vbcast.lane.b32.xlu0 %v2884, %s2893
        %v2895 = vpop.permute.xlu0 %2894
        %v2896 = vlaneseq
        %v2897 = vshrl.u32 %v2896, 7
        %v2898 = vsub.s32 6, %v2897
        %v2899 = vrot.slane %v2801, %v2898
        %2901 = vbcast.lane.b32.xlu0 %v2899, 256
        %v2902 = vpop.permute.xlu0 %2901
        %s2904 = sor.u32 256, 8
        %2905 = vbcast.lane.b32.xlu0 %v2899, %s2904
        %v2906 = vpop.permute.xlu0 %2905
        %s2908 = sor.u32 256, 16
        %2909 = vbcast.lane.b32.xlu0 %v2899, %s2908
        %v2910 = vpop.permute.xlu0 %2909
        %v2911 = vlaneseq
        %v2912 = vshrl.u32 %v2911, 7
        %v2913 = vsub.s32 7, %v2912
        %v2914 = vrot.slane %v2801, %v2913
        %2916 = vbcast.lane.b32.xlu0 %v2914, 256
        %v2917 = vpop.permute.xlu0 %2916
        %s2919 = sor.u32 256, 8
        %2920 = vbcast.lane.b32.xlu0 %v2914, %s2919
        %v2921 = vpop.permute.xlu0 %2920
        %s2923 = sor.u32 256, 16
        %2924 = vbcast.lane.b32.xlu0 %v2914, %s2923
        %v2925 = vpop.permute.xlu0 %2924
        %v2926 = vlaneseq
        %v2927 = vshrl.u32 %v2926, 7
        %v2928 = vsub.s32 0, %v2927
        %v2929 = vrot.slane %v2802, %v2928
        %2931 = vbcast.lane.b32.xlu0 %v2929, 256
        %v2932 = vpop.permute.xlu0 %2931
        %s2934 = sor.u32 256, 8
        %2935 = vbcast.lane.b32.xlu0 %v2929, %s2934
        %v2936 = vpop.permute.xlu0 %2935
        %s2938 = sor.u32 256, 16
        %2939 = vbcast.lane.b32.xlu0 %v2929, %s2938
        %v2940 = vpop.permute.xlu0 %2939
        %v2941 = vlaneseq
        %v2942 = vshrl.u32 %v2941, 7
        %v2943 = vsub.s32 1, %v2942
        %v2944 = vrot.slane %v2802, %v2943
        %2946 = vbcast.lane.b32.xlu0 %v2944, 256
        %v2947 = vpop.permute.xlu0 %2946
        %s2949 = sor.u32 256, 8
        %2950 = vbcast.lane.b32.xlu0 %v2944, %s2949
        %v2951 = vpop.permute.xlu0 %2950
        %s2953 = sor.u32 256, 16
        %2954 = vbcast.lane.b32.xlu0 %v2944, %s2953
        %v2955 = vpop.permute.xlu0 %2954
        %v2956 = vlaneseq
        %v2957 = vshrl.u32 %v2956, 7
        %v2958 = vsub.s32 2, %v2957
        %v2959 = vrot.slane %v2802, %v2958
        %2961 = vbcast.lane.b32.xlu0 %v2959, 256
        %v2962 = vpop.permute.xlu0 %2961
        %s2964 = sor.u32 256, 8
        %2965 = vbcast.lane.b32.xlu0 %v2959, %s2964
        %v2966 = vpop.permute.xlu0 %2965
        %s2968 = sor.u32 256, 16
        %2969 = vbcast.lane.b32.xlu0 %v2959, %s2968
        %v2970 = vpop.permute.xlu0 %2969
        %v2971 = vlaneseq
        %v2972 = vshrl.u32 %v2971, 7
        %v2973 = vsub.s32 3, %v2972
        %v2974 = vrot.slane %v2802, %v2973
        %2976 = vbcast.lane.b32.xlu0 %v2974, 256
        %v2977 = vpop.permute.xlu0 %2976
        %s2979 = sor.u32 256, 8
        %2980 = vbcast.lane.b32.xlu0 %v2974, %s2979
        %v2981 = vpop.permute.xlu0 %2980
        %s2983 = sor.u32 256, 16
        %2984 = vbcast.lane.b32.xlu0 %v2974, %s2983
        %v2985 = vpop.permute.xlu0 %2984
        %v2986 = vlaneseq
        %v2987 = vshrl.u32 %v2986, 7
        %v2988 = vsub.s32 4, %v2987
        %v2989 = vrot.slane %v2802, %v2988
        %2991 = vbcast.lane.b32.xlu0 %v2989, 256
        %v2992 = vpop.permute.xlu0 %2991
        %s2994 = sor.u32 256, 8
        %2995 = vbcast.lane.b32.xlu0 %v2989, %s2994
        %v2996 = vpop.permute.xlu0 %2995
        %s2998 = sor.u32 256, 16
        %2999 = vbcast.lane.b32.xlu0 %v2989, %s2998
        %v3000 = vpop.permute.xlu0 %2999
        %v3001 = vlaneseq
        %v3002 = vshrl.u32 %v3001, 7
        %v3003 = vsub.s32 5, %v3002
        %v3004 = vrot.slane %v2802, %v3003
        %3006 = vbcast.lane.b32.xlu0 %v3004, 256
        %v3007 = vpop.permute.xlu0 %3006
        %s3009 = sor.u32 256, 8
        %3010 = vbcast.lane.b32.xlu0 %v3004, %s3009
        %v3011 = vpop.permute.xlu0 %3010
        %s3013 = sor.u32 256, 16
        %3014 = vbcast.lane.b32.xlu0 %v3004, %s3013
        %v3015 = vpop.permute.xlu0 %3014
        %v3016 = vlaneseq
        %v3017 = vshrl.u32 %v3016, 7
        %v3018 = vsub.s32 6, %v3017
        %v3019 = vrot.slane %v2802, %v3018
        %3021 = vbcast.lane.b32.xlu0 %v3019, 256
        %v3022 = vpop.permute.xlu0 %3021
        %s3024 = sor.u32 256, 8
        %3025 = vbcast.lane.b32.xlu0 %v3019, %s3024
        %v3026 = vpop.permute.xlu0 %3025
        %s3028 = sor.u32 256, 16
        %3029 = vbcast.lane.b32.xlu0 %v3019, %s3028
        %v3030 = vpop.permute.xlu0 %3029
        %v3031 = vlaneseq
        %v3032 = vshrl.u32 %v3031, 7
        %v3033 = vsub.s32 7, %v3032
        %v3034 = vrot.slane %v2802, %v3033
        %3036 = vbcast.lane.b32.xlu0 %v3034, 256
        %v3037 = vpop.permute.xlu0 %3036
        %s3039 = sor.u32 256, 8
        %3040 = vbcast.lane.b32.xlu0 %v3034, %s3039
        %v3041 = vpop.permute.xlu0 %3040
        %s3043 = sor.u32 256, 16
        %3044 = vbcast.lane.b32.xlu0 %v3034, %s3043
        %v3045 = vpop.permute.xlu0 %3044
        %v3046 = vlaneseq
        %v3047 = vshrl.u32 %v3046, 7
        %v3048 = vsub.s32 0, %v3047
        %v3049 = vrot.slane %v2803, %v3048
        %3051 = vbcast.lane.b32.xlu0 %v3049, 256
        %v3052 = vpop.permute.xlu0 %3051
        %s3054 = sor.u32 256, 8
        %3055 = vbcast.lane.b32.xlu0 %v3049, %s3054
        %v3056 = vpop.permute.xlu0 %3055
        %s3058 = sor.u32 256, 16
        %3059 = vbcast.lane.b32.xlu0 %v3049, %s3058
        %v3060 = vpop.permute.xlu0 %3059
        %v3061 = vmul.f32 %v1754, %v2812
        %v3062 = vmul.f32 %v1755, %v2816
        %v3063 = vmul.f32 %v1756, %v2820
        %v3064 = vmul.f32 %v1757, %v2827
        %v3065 = vmul.f32 %v1758, %v2831
        %v3066 = vmul.f32 %v1759, %v2835
        %v3067 = vmul.f32 %v1760, %v2842
        %v3068 = vmul.f32 %v1761, %v2846
        %v3069 = vmul.f32 %v1762, %v2850
        %v3070 = vmul.f32 %v1763, %v2857
        %v3071 = vmul.f32 %v1764, %v2861
        %v3072 = vmul.f32 %v1765, %v2865
        %v3073 = vmul.f32 %v1766, %v2872
        %v3074 = vmul.f32 %v1767, %v2876
        %v3075 = vmul.f32 %v1768, %v2880
        %v3076 = vmul.f32 %v1769, %v2887
        %v3077 = vmul.f32 %v1770, %v2891
        %v3078 = vmul.f32 %v1771, %v2895
        %v3079 = vmul.f32 %v1772, %v2902
        %v3080 = vmul.f32 %v1773, %v2906
        %v3081 = vmul.f32 %v1774, %v2910
        %v3082 = vmul.f32 %v1775, %v2917
        %v3083 = vmul.f32 %v1776, %v2921
        %v3084 = vmul.f32 %v1777, %v2925
        %v3085 = vmul.f32 %v1778, %v2932
        %v3086 = vmul.f32 %v1779, %v2936
        %v3087 = vmul.f32 %v1780, %v2940
        %v3088 = vmul.f32 %v1781, %v2947
        %v3089 = vmul.f32 %v1782, %v2951
        %v3090 = vmul.f32 %v1783, %v2955
        %v3091 = vmul.f32 %v1784, %v2962
        %v3092 = vmul.f32 %v1785, %v2966
        %v3093 = vmul.f32 %v1786, %v2970
        %v3094 = vmul.f32 %v1787, %v2977
        %v3095 = vmul.f32 %v1788, %v2981
        %v3096 = vmul.f32 %v1789, %v2985
        %v3097 = vmul.f32 %v1790, %v2992
        %v3098 = vmul.f32 %v1791, %v2996
        %v3099 = vmul.f32 %v1792, %v3000
        %v3100 = vmul.f32 %v1793, %v3007
        %v3101 = vmul.f32 %v1794, %v3011
        %v3102 = vmul.f32 %v1795, %v3015
        %v3103 = vmul.f32 %v1796, %v3022
        %v3104 = vmul.f32 %v1797, %v3026
        %v3105 = vmul.f32 %v1798, %v3030
        %v3106 = vmul.f32 %v1799, %v3037
        %v3107 = vmul.f32 %v1800, %v3041
        %v3108 = vmul.f32 %v1801, %v3045
        %v3109 = vmul.f32 %v1802, %v3052
        %v3110 = vmul.f32 %v1803, %v3056
        %v3111 = vmul.f32 %v1804, %v3060
        %v3112 = vsel %vm920, %v3061, 0.0
        %v3113 = vsel %vm920, %v3062, 0.0
        %v3114 = vadd.f32 %v3112, %v3113
        %v3115 = vsel %vm927, %v3063, 0.0
        %v3116 = vadd.f32 %v3114, %v3115
        %v3117 = vrot.slane %v3116, 4
        %v3118 = vadd.f32 %v3116, %v3117
        %v3119 = vrot.slane %v3118, 2
        %v3120 = vadd.f32 %v3118, %v3119
        %v3121 = vrot.slane %v3120, 1
        %v3122 = vadd.f32 %v3120, %v3121
        %v3123 = vsel %vm920, %v3064, 0.0
        %v3124 = vsel %vm920, %v3065, 0.0
        %v3125 = vadd.f32 %v3123, %v3124
        %v3126 = vsel %vm927, %v3066, 0.0
        %v3127 = vadd.f32 %v3125, %v3126
        %v3128 = vrot.slane %v3127, 4
        %v3129 = vadd.f32 %v3127, %v3128
        %v3130 = vrot.slane %v3129, 2
        %v3131 = vadd.f32 %v3129, %v3130
        %v3132 = vrot.slane %v3131, 1
        %v3133 = vadd.f32 %v3131, %v3132
        %v3134 = vsel %vm920, %v3067, 0.0
        %v3135 = vsel %vm920, %v3068, 0.0
        %v3136 = vadd.f32 %v3134, %v3135
        %v3137 = vsel %vm927, %v3069, 0.0
        %v3138 = vadd.f32 %v3136, %v3137
        %v3139 = vrot.slane %v3138, 4
        %v3140 = vadd.f32 %v3138, %v3139
        %v3141 = vrot.slane %v3140, 2
        %v3142 = vadd.f32 %v3140, %v3141
        %v3143 = vrot.slane %v3142, 1
        %v3144 = vadd.f32 %v3142, %v3143
        %v3145 = vsel %vm920, %v3070, 0.0
        %v3146 = vsel %vm920, %v3071, 0.0
        %v3147 = vadd.f32 %v3145, %v3146
        %v3148 = vsel %vm927, %v3072, 0.0
        %v3149 = vadd.f32 %v3147, %v3148
        %v3150 = vrot.slane %v3149, 4
        %v3151 = vadd.f32 %v3149, %v3150
        %v3152 = vrot.slane %v3151, 2
        %v3153 = vadd.f32 %v3151, %v3152
        %v3154 = vrot.slane %v3153, 1
        %v3155 = vadd.f32 %v3153, %v3154
        %v3156 = vsel %vm920, %v3073, 0.0
        %v3157 = vsel %vm920, %v3074, 0.0
        %v3158 = vadd.f32 %v3156, %v3157
        %v3159 = vsel %vm927, %v3075, 0.0
        %v3160 = vadd.f32 %v3158, %v3159
        %v3161 = vrot.slane %v3160, 4
        %v3162 = vadd.f32 %v3160, %v3161
        %v3163 = vrot.slane %v3162, 2
        %v3164 = vadd.f32 %v3162, %v3163
        %v3165 = vrot.slane %v3164, 1
        %v3166 = vadd.f32 %v3164, %v3165
        %v3167 = vsel %vm920, %v3076, 0.0
        %v3168 = vsel %vm920, %v3077, 0.0
        %v3169 = vadd.f32 %v3167, %v3168
        %v3170 = vsel %vm927, %v3078, 0.0
        %v3171 = vadd.f32 %v3169, %v3170
        %v3172 = vrot.slane %v3171, 4
        %v3173 = vadd.f32 %v3171, %v3172
        %v3174 = vrot.slane %v3173, 2
        %v3175 = vadd.f32 %v3173, %v3174
        %v3176 = vrot.slane %v3175, 1
        %v3177 = vadd.f32 %v3175, %v3176
        %v3178 = vsel %vm920, %v3079, 0.0
        %v3179 = vsel %vm920, %v3080, 0.0
        %v3180 = vadd.f32 %v3178, %v3179
        %v3181 = vsel %vm927, %v3081, 0.0
        %v3182 = vadd.f32 %v3180, %v3181
        %v3183 = vrot.slane %v3182, 4
        %v3184 = vadd.f32 %v3182, %v3183
        %v3185 = vrot.slane %v3184, 2
        %v3186 = vadd.f32 %v3184, %v3185
        %v3187 = vrot.slane %v3186, 1
        %v3188 = vadd.f32 %v3186, %v3187
        %v3189 = vsel %vm920, %v3082, 0.0
        %v3190 = vsel %vm920, %v3083, 0.0
        %v3191 = vadd.f32 %v3189, %v3190
        %v3192 = vsel %vm927, %v3084, 0.0
        %v3193 = vadd.f32 %v3191, %v3192
        %v3194 = vrot.slane %v3193, 4
        %v3195 = vadd.f32 %v3193, %v3194
        %v3196 = vrot.slane %v3195, 2
        %v3197 = vadd.f32 %v3195, %v3196
        %v3198 = vrot.slane %v3197, 1
        %v3199 = vadd.f32 %v3197, %v3198
        %v3200 = vsel %vm920, %v3085, 0.0
        %v3201 = vsel %vm920, %v3086, 0.0
        %v3202 = vadd.f32 %v3200, %v3201
        %v3203 = vsel %vm927, %v3087, 0.0
        %v3204 = vadd.f32 %v3202, %v3203
        %v3205 = vrot.slane %v3204, 4
        %v3206 = vadd.f32 %v3204, %v3205
        %v3207 = vrot.slane %v3206, 2
        %v3208 = vadd.f32 %v3206, %v3207
        %v3209 = vrot.slane %v3208, 1
        %v3210 = vadd.f32 %v3208, %v3209
        %v3211 = vsel %vm920, %v3088, 0.0
        %v3212 = vsel %vm920, %v3089, 0.0
        %v3213 = vadd.f32 %v3211, %v3212
        %v3214 = vsel %vm927, %v3090, 0.0
        %v3215 = vadd.f32 %v3213, %v3214
        %v3216 = vrot.slane %v3215, 4
        %v3217 = vadd.f32 %v3215, %v3216
        %v3218 = vrot.slane %v3217, 2
        %v3219 = vadd.f32 %v3217, %v3218
        %v3220 = vrot.slane %v3219, 1
        %v3221 = vadd.f32 %v3219, %v3220
        %v3222 = vsel %vm920, %v3091, 0.0
        %v3223 = vsel %vm920, %v3092, 0.0
        %v3224 = vadd.f32 %v3222, %v3223
        %v3225 = vsel %vm927, %v3093, 0.0
        %v3226 = vadd.f32 %v3224, %v3225
        %v3227 = vrot.slane %v3226, 4
        %v3228 = vadd.f32 %v3226, %v3227
        %v3229 = vrot.slane %v3228, 2
        %v3230 = vadd.f32 %v3228, %v3229
        %v3231 = vrot.slane %v3230, 1
        %v3232 = vadd.f32 %v3230, %v3231
        %v3233 = vsel %vm920, %v3094, 0.0
        %v3234 = vsel %vm920, %v3095, 0.0
        %v3235 = vadd.f32 %v3233, %v3234
        %v3236 = vsel %vm927, %v3096, 0.0
        %v3237 = vadd.f32 %v3235, %v3236
        %v3238 = vrot.slane %v3237, 4
        %v3239 = vadd.f32 %v3237, %v3238
        %v3240 = vrot.slane %v3239, 2
        %v3241 = vadd.f32 %v3239, %v3240
        %v3242 = vrot.slane %v3241, 1
        %v3243 = vadd.f32 %v3241, %v3242
        %v3244 = vsel %vm920, %v3097, 0.0
        %v3245 = vsel %vm920, %v3098, 0.0
        %v3246 = vadd.f32 %v3244, %v3245
        %v3247 = vsel %vm927, %v3099, 0.0
        %v3248 = vadd.f32 %v3246, %v3247
        %v3249 = vrot.slane %v3248, 4
        %v3250 = vadd.f32 %v3248, %v3249
        %v3251 = vrot.slane %v3250, 2
        %v3252 = vadd.f32 %v3250, %v3251
        %v3253 = vrot.slane %v3252, 1
        %v3254 = vadd.f32 %v3252, %v3253
        %v3255 = vsel %vm920, %v3100, 0.0
        %v3256 = vsel %vm920, %v3101, 0.0
        %v3257 = vadd.f32 %v3255, %v3256
        %v3258 = vsel %vm927, %v3102, 0.0
        %v3259 = vadd.f32 %v3257, %v3258
        %v3260 = vrot.slane %v3259, 4
        %v3261 = vadd.f32 %v3259, %v3260
        %v3262 = vrot.slane %v3261, 2
        %v3263 = vadd.f32 %v3261, %v3262
        %v3264 = vrot.slane %v3263, 1
        %v3265 = vadd.f32 %v3263, %v3264
        %v3266 = vsel %vm920, %v3103, 0.0
        %v3267 = vsel %vm920, %v3104, 0.0
        %v3268 = vadd.f32 %v3266, %v3267
        %v3269 = vsel %vm927, %v3105, 0.0
        %v3270 = vadd.f32 %v3268, %v3269
        %v3271 = vrot.slane %v3270, 4
        %v3272 = vadd.f32 %v3270, %v3271
        %v3273 = vrot.slane %v3272, 2
        %v3274 = vadd.f32 %v3272, %v3273
        %v3275 = vrot.slane %v3274, 1
        %v3276 = vadd.f32 %v3274, %v3275
        %v3277 = vsel %vm920, %v3106, 0.0
        %v3278 = vsel %vm920, %v3107, 0.0
        %v3279 = vadd.f32 %v3277, %v3278
        %v3280 = vsel %vm927, %v3108, 0.0
        %v3281 = vadd.f32 %v3279, %v3280
        %v3282 = vrot.slane %v3281, 4
        %v3283 = vadd.f32 %v3281, %v3282
        %v3284 = vrot.slane %v3283, 2
        %v3285 = vadd.f32 %v3283, %v3284
        %v3286 = vrot.slane %v3285, 1
        %v3287 = vadd.f32 %v3285, %v3286
        %v3288 = vsel %vm920, %v3109, 0.0
        %v3289 = vsel %vm920, %v3110, 0.0
        %v3290 = vadd.f32 %v3288, %v3289
        %v3291 = vsel %vm927, %v3111, 0.0
        %v3292 = vadd.f32 %v3290, %v3291
        %v3293 = vrot.slane %v3292, 4
        %v3294 = vadd.f32 %v3292, %v3293
        %v3295 = vrot.slane %v3294, 2
        %v3296 = vadd.f32 %v3294, %v3295
        %v3297 = vrot.slane %v3296, 1
        %v3298 = vadd.f32 %v3296, %v3297
        %3301 = vrot.lane.b32.xlu0 %v1497, 96
        %v3302 = vpop.permute.xlu0 %3301
        %3303 = vrot.lane.b32.xlu0 %v1498, 96
        %v3304 = vpop.permute.xlu0 %3303
        %v3323 = vsel %vm1376, %v3133, %v3122
        %v3324 = vsel %vm1378, %v3144, %v3323
        %v3325 = vsel %vm1380, %v3155, %v3324
        %v3326 = vsel %vm1382, %v3166, %v3325
        %v3327 = vsel %vm1384, %v3177, %v3326
        %v3328 = vsel %vm1386, %v3188, %v3327
        %v3329 = vsel %vm1388, %v3199, %v3328
        %v3330 = vsel %vm1376, %v3221, %v3210
        %v3331 = vsel %vm1378, %v3232, %v3330
        %v3332 = vsel %vm1380, %v3243, %v3331
        %v3333 = vsel %vm1382, %v3254, %v3332
        %v3334 = vsel %vm1384, %v3265, %v3333
        %v3335 = vsel %vm1386, %v3276, %v3334
        %v3336 = vsel %vm1388, %v3287, %v3335
        %v3341 = vsel %vm1460, %v2804, 0
        %v3344 = vsel %vm1460, %v2805, 0
        %v3347 = vand.u32 %v3304, %v2085
        %3349 = vmatprep.subr.bf16.mxu0 0
        %3350 = vmatpush1.bf16.msra.mxu0 0
        %3351 = vmatprep.subr.bf16.mxu0 0
        %3352 = vmatpush1.bf16.msra.mxu0 0
        %3353 = vmatprep.subr.bf16.mxu0 0
        %3354 = vmatpush1.bf16.msra.mxu0 0
        %3355 = vmatprep.subr.bf16.mxu0 0
        %3356 = vmatpush1.bf16.msra.mxu0 0
        %3357 = vmatprep.subr.bf16.mxu0 0
        %3358 = vmatpush1.bf16.msra.mxu0 0
        %3359 = vmatprep.subr.bf16.mxu0 0
        %3360 = vmatpush1.bf16.msra.mxu0 0
        %3361 = vmatprep.subr.bf16.mxu0 0
        %3362 = vmatpush1.bf16.msra.mxu0 %v3347
        %3363 = vmatprep.subr.bf16.mxu0 0
        %3364 = vmatpush1.bf16.msra.mxu0 %v3302
        %3365 = vmatprep.subr.bf16.mxu0 0
        %3366 = vmatpush2.bf16.msra.mxu0 0
        %3367 = vmatprep.subr.bf16.mxu0 0
        %3368 = vmatpush2.bf16.msra.mxu0 0
        %3369 = vmatprep.subr.bf16.mxu0 0
        %3370 = vmatpush2.bf16.msra.mxu0 0
        %3371 = vmatprep.subr.bf16.mxu0 0
        %3372 = vmatpush2.bf16.msra.mxu0 0
        %3373 = vmatprep.subr.bf16.mxu0 0
        %3374 = vmatpush2.bf16.msra.mxu0 0
        %3375 = vmatprep.subr.bf16.mxu0 0
        %3376 = vmatpush2.bf16.msra.mxu0 0
        %3377 = vmatprep.subr.bf16.mxu0 0
        %3378 = vmatpush2.bf16.msra.mxu0 0
        %3379 = vmatprep.subr.bf16.mxu0 0
        %3380 = vmatpush2.bf16.msra.mxu0 0
        %3381 = vmatprep.mubr.bf16.mxu0 0
        %3382 = vmatmul.mubr.bf16.gmra.mxu0 %v3341
        %v3383 = vpop.f32.mrf.mxu0
        %v3384 = vadd.f32 %v3329, %v3383
        %v3385 = vpop.f32.mrf.mxu0
        %v3386 = vpop.f32.mrf.mxu0
        %v3387 = vadd.f32 %v3336, %v3386
        %v3388 = vpop.f32.mrf.mxu0
        %3389 = vmatprep.mubr.bf16.mxu0 0
        %3390 = vmatmul.mubr.bf16.gmra.mxu0 %v3344
        %v3391 = vpop.f32.mrf.mxu0
        %v3392 = vadd.f32 %v3298, %v3391
        %v3393 = vpop.f32.mrf.mxu0
        %v3394 = vpop.f32.mrf.mxu0
        %v3395 = vpop.f32.mrf.mxu0
        %3396 = vdwg.mxu0
        %3400 = vrot.lane.b32.xlu0 %v3384, 32
        %v3401 = vpop.permute.xlu0 %3400
        %3402 = vrot.lane.b32.xlu0 %v3387, 32
        %v3403 = vpop.permute.xlu0 %3402
        %3404 = vrot.lane.b32.xlu0 %v3392, 32
        %v3405 = vpop.permute.xlu0 %3404
        %vm3409 = vcmask 523520
        %3410 = vst.msk [vmem:[#allocation2] sm:$0xff] %vm3409, %v3401
        %3411 = vst.msk [vmem:[#allocation2 + $0x8] sm:$0xff] %vm3409, %v3403
        %vm3412 = vcmask 516352
        %3413 = vst.msk [vmem:[#allocation2 + $0x10] sm:$0x1] %vm3412, %v3405
        %v3414 = vld [vmem:[#allocation2] sm:$0xff]
        %v3415 = vld [vmem:[#allocation2 + $0x8] sm:$0xff]
        %v3416 = vld [vmem:[#allocation2 + $0x10] sm:$0x1]
        %v3417 = vpack.c.bf16 %v3415, %v3414
        %v3418 = vpack.c.bf16 %v3416, %v3416
        %v3419 = vld [vmem:[%s6] sm:$0xf]
        %v3420 = vld [vmem:[%s6 + $0x4] sm:$0xf]
        %v3421 = vld [vmem:[%s6 + $0x8] sm:$0xf]
        %v3422 = vld [vmem:[%s6 + $0xc] sm:$0xf]
        %v3423 = vld [vmem:[%s6 + $0x10] sm:$0xf]
        %v3424 = vld [vmem:[%s6 + $0x14] sm:$0xf]
        %v3425 = vld [vmem:[%s6 + $0x18] sm:$0xf]
        %v3426 = vld [vmem:[%s6 + $0x1c] sm:$0xf]
        %v3427 = vld [vmem:[%s7] sm:$0x1]
        %v3429 = vlaneseq
        %v3430 = vshrl.u32 %v3429, 7
        %v3431 = vsub.s32 0, %v3430
        %v3432 = vrot.slane %v3427, %v3431
        %v3442 = vunpack.c.l.b16 %v3419
        %v3443 = vunpack.c.l.b16 %v3420
        %v3444 = vunpack.c.l.b16 %v3421
        %v3445 = vunpack.c.l.b16 %v3422
        %v3446 = vunpack.c.l.b16 %v3423
        %v3447 = vunpack.c.l.b16 %v3424
        %v3448 = vunpack.c.l.b16 %v3425
        %v3449 = vunpack.c.l.b16 %v3426
        %v3450 = vpack.c.b16 %v3443, %v3442
        %v3451 = vpack.c.b16 %v3445, %v3444
        %v3452 = vpack.c.b16 %v3447, %v3446
        %v3453 = vpack.c.b16 %v3449, %v3448
        %v3459 = vsel %vm342, %v3417, 0
        %v3462 = vsel %vm342, %v3418, 0
        %3464 = vmatprep.subr.bf16.mxu0 0
        %3465 = vmatpush1.bf16.msra.mxu0 0
        %3466 = vmatprep.subr.bf16.mxu0 0
        %3467 = vmatpush1.bf16.msra.mxu0 0
        %3468 = vmatprep.subr.bf16.mxu0 0
        %3469 = vmatpush1.bf16.msra.mxu0 0
        %3470 = vmatprep.subr.bf16.mxu0 0
        %3471 = vmatpush1.bf16.msra.mxu0 0
        %3472 = vmatprep.subr.bf16.mxu0 0
        %3473 = vmatpush1.bf16.msra.mxu0 %v3453
        %3474 = vmatprep.subr.bf16.mxu0 0
        %3475 = vmatpush1.bf16.msra.mxu0 %v3452
        %3476 = vmatprep.subr.bf16.mxu0 0
        %3477 = vmatpush1.bf16.msra.mxu0 %v3451
        %3478 = vmatprep.subr.bf16.mxu0 0
        %3479 = vmatpush1.bf16.msra.mxu0 %v3450
        %3480 = vmatprep.subr.bf16.mxu0 0
        %3481 = vmatpush2.bf16.msra.mxu0 0
        %3482 = vmatprep.subr.bf16.mxu0 0
        %3483 = vmatpush2.bf16.msra.mxu0 0
        %3484 = vmatprep.subr.bf16.mxu0 0
        %3485 = vmatpush2.bf16.msra.mxu0 0
        %3486 = vmatprep.subr.bf16.mxu0 0
        %3487 = vmatpush2.bf16.msra.mxu0 0
        %3488 = vmatprep.subr.bf16.mxu0 0
        %3489 = vmatpush2.bf16.msra.mxu0 0
        %3490 = vmatprep.subr.bf16.mxu0 0
        %3491 = vmatpush2.bf16.msra.mxu0 0
        %3492 = vmatprep.subr.bf16.mxu0 0
        %3493 = vmatpush2.bf16.msra.mxu0 0
        %3494 = vmatprep.subr.bf16.mxu0 0
        %3495 = vmatpush2.bf16.msra.mxu0 0
        %3496 = vmatprep.mubr.bf16.mxu0 0
        %3497 = vmatmul.mubr.bf16.gmra.mxu0 %v3459
        %v3498 = vpop.f32.mrf.mxu0
        %v3499 = vadd.f32 %v3432, %v3498
        %v3500 = vpop.f32.mrf.mxu0
        %v3501 = vpop.f32.mrf.mxu0
        %v3502 = vadd.f32 %v3432, %v3501
        %v3503 = vpop.f32.mrf.mxu0
        %3504 = vmatprep.mubr.bf16.mxu0 0
        %3505 = vmatmul.mubr.bf16.gmra.mxu0 %v3462
        %v3506 = vpop.f32.mrf.mxu0
        %v3507 = vadd.f32 %v3432, %v3506
        %v3508 = vpop.f32.mrf.mxu0
        %v3509 = vpop.f32.mrf.mxu0
        %v3510 = vpop.f32.mrf.mxu0
        %3511 = vdwg.mxu0
        %v3512 = vadd.f32 %v3499, %v337
        %v3513 = vadd.f32 %v3502, %v338
        %v3514 = vadd.f32 %v3507, %v339
        %3515 = vst.msk [vmem:[%s335] sm:$0xff] %vm342, %v3512
        %3516 = vst.msk [vmem:[%s335 + $0x8] sm:$0xff] %vm342, %v3513
        %3517 = vst.msk [vmem:[%s335 + $0x10] sm:$0x1] %vm349, %v3514
        %p3518 = scmp.lt.s32.totalorder %s21, 1
        %s3519 = scalar_select %p3518, %s21, 1
        %s3520 = smul.addr %s3519, 3
        %s3521 = smul.addr %s3520, 8
        %s3522 = scalar_lea.vmem %s8, %s3521
        // Predicated region
        $region61: #{encoder_layer.2} parent=51 // pred_check
          %p3523 = pneg %p212
        $region62: #{encoder_layer.2} parent=51 // pred_check_branch
          %3525 = sbr.rel (%p3523) target = $region64
        $region63: #{encoder_layer.2} parent=51 // pred_region
          _
        $region64: #{encoder_layer.2} parent=51 // pred_fallthru
          _
      $region52: #{encoder_layer.2} parent=5 // pred_fallthru
        _
      %p3526 = scmp.le.s32.totalorder 2, %s16
      // Predicated region
      $region65: #{encoder_layer.2} parent=5 // pred_check
        %p3527 = pneg %p3526
      $region66: #{encoder_layer.2} parent=5 // pred_check_branch
        %3529 = sbr.rel (%p3527) target = $region68
      $region67: #{encoder_layer.2} parent=5 // pred_region
        %s3530 = ssub.s32 %s16, 2
        // Predicated region
        $region69: #{encoder_layer.2} parent=67 // pred_check
          %p3531 = pneg %p218
        $region70: #{encoder_layer.2} parent=67 // pred_check_branch
          %3533 = sbr.rel (%p3531) target = $region72
        $region71: #{encoder_layer.2} parent=67 // pred_region
          %p3534 = scmp.lt.s32.totalorder %s22, 1
          %s3535 = scalar_select %p3534, %s22, 1
          %s3536 = smul.addr %s3535, 3
          %s3537 = smul.addr %s3536, 8
          %s3538 = scalar_lea.vmem %s8, %s3537
        $region72: #{encoder_layer.2} parent=67 // pred_fallthru
          _
      $region68: #{encoder_layer.2} parent=5 // pred_fallthru
        _
    $region6: #{encoder_layer.2} parent=1 // loop_footer
      %s20 = sadd.s32 1, %s16
    $region7: #{encoder_layer.2} parent=1 // loop_footer_branch
      %15 = sbr.rel target = $region3
    $region8: #{encoder_layer.2} parent=1 // loop_exit
      _
    %3539 = vsyncpa [#allocation4], 1
    %s3540 = scalar_lea.sflag [#allocation4], 1
    %3541 = vsyncpa %s3540, 1
    %3542 = vsyncpa [#allocation6], 1

</llo_original>
